<compile_context>
chip_gen: v7x
topology: tpu7x:2x2x1
jax: 0.10.0
libtpu: 0.0.40
codegen_flags: <defaults>
</compile_context>

<pallas_src>
import functools
import math

import jax
import jax.numpy as jnp
from jax.experimental import pallas as pl
from jax.experimental.pallas import tpu as pltpu

# ----- small BERT-shaped config (synthetic; real model uses H=768, vocab=30522) -----
BATCH = 2
SEQ = 8
HIDDEN = 128
NUM_HEADS = 4
HEAD_DIM = HIDDEN // NUM_HEADS
INTERMEDIATE = 4 * HIDDEN
VOCAB = 512
NUM_LAYERS = 2
MAX_POS = 16
LN_EPS = 1e-12

# Tile caps. v6e: 256-granular matches the 2x256^2 MXU. v5e: 128-granular is enough
# (4x128^2 MXU). Values are caps; _pick_tile never exceeds the actual dim.
MAX_TM = 256
MAX_TN = 512
MAX_TK = 256
# <= v7x 64 MiB physical VMEM; raise to ~96 MiB on v5e/v6e (128 MiB VMEM).
VMEM_LIMIT = 48 * 1024 * 1024


def _gelu_erf(x):
    # Exact erf-based GELU (matches HF BERT); erf is a single EUP op.
    return 0.5 * x * (1.0 + jax.lax.erf(x * (1.0 / math.sqrt(2.0))))


def _pick_tile(dim, cap, granularity=128):
    """Largest tile <= cap that divides dim, preferring 128-granular tiles."""
    if dim <= cap:
        return dim
    t = (cap // granularity) * granularity
    while t >= granularity:
        if dim % t == 0:
            return t
        t -= granularity
    for t in range(cap, 0, -1):  # fallback for non-128-multiple dims
        if dim % t == 0:
            return t
    return dim


# ------------------------- tiled dense (bias [+ GELU]) -------------------------

def _dense_kernel(x_ref, w_ref, b_ref, o_ref, acc_ref, *, activation):
    k = pl.program_id(2)

    @pl.when(k == 0)
    def _():
        acc_ref[...] = jnp.zeros_like(acc_ref)

    acc_ref[...] += jnp.dot(x_ref[...].astype(jnp.bfloat16), w_ref[...],
                            preferred_element_type=jnp.float32)

    @pl.when(k == pl.num_programs(2) - 1)
    def _():
        y = acc_ref[...] + b_ref[...]
        if activation == "gelu":
            y = _gelu_erf(y)
        o_ref[...] = y.astype(o_ref.dtype)


def dense(x, w, b, activation=None, out_dtype=jnp.bfloat16, weight_buffers=None):
    m, kdim = x.shape
    _, n = w.shape
    tm = _pick_tile(m, MAX_TM)
    tn = _pick_tile(n, MAX_TN)
    tk = _pick_tile(kdim, MAX_TK)
    grid = (m // tm, n // tn, kdim // tk)
    kernel = functools.partial(_dense_kernel, activation=activation)

    w_spec_kwargs = {}
    if weight_buffers is not None and (kdim // tk) >= weight_buffers:
        # deeper buffering on the weight stream (decoder is weight-BW bound at small M)
        w_spec_kwargs["pipeline_mode"] = pl.Buffered(weight_buffers)

    cost = pl.CostEstimate(
        flops=2 * m * n * kdim,
        transcendentals=(m * n if activation == "gelu" else 0),
        bytes_accessed=int(m * kdim * x.dtype.itemsize + kdim * n * w.dtype.itemsize
                           + m * n * jnp.dtype(out_dtype).itemsize))
    return pl.pallas_call(
        kernel,
        out_shape=jax.ShapeDtypeStruct((m, n), out_dtype),
        grid=grid,
        in_specs=[pl.BlockSpec((tm, tk), lambda i, j, k: (i, k)),
                  pl.BlockSpec((tk, tn), lambda i, j, k: (k, j), **w_spec_kwargs),
                  pl.BlockSpec((1, tn), lambda i, j, k: (0, j))],
        out_specs=pl.BlockSpec((tm, tn), lambda i, j, k: (i, j)),
        scratch_shapes=[pltpu.VMEM((tm, tn), jnp.float32)],
        compiler_params=pltpu.CompilerParams(
            dimension_semantics=("parallel", "parallel", "arbitrary"),
            vmem_limit_bytes=VMEM_LIMIT),
        cost_estimate=cost,
    )(x, w, b)


# -------- tiled dense with fused bias [+ GELU] [+ residual] + LayerNorm epilogue --------

def _dense_ln_kernel(*refs, activation, has_residual):
    if has_residual:
        x_ref, w_ref, b_ref, res_ref, g_ref, beta_ref, o_ref, acc_ref = refs
    else:
        x_ref, w_ref, b_ref, g_ref, beta_ref, o_ref, acc_ref = refs
        res_ref = None
    k = pl.program_id(2)

    @pl.when(k == 0)
    def _():
        acc_ref[...] = jnp.zeros_like(acc_ref)

    acc_ref[...] += jnp.dot(x_ref[...].astype(jnp.bfloat16), w_ref[...],
                            preferred_element_type=jnp.float32)

    @pl.when(k == pl.num_programs(2) - 1)
    def _():
        y = acc_ref[...] + b_ref[...]
        if activation == "gelu":
            y = _gelu_erf(y)
        if res_ref is not None:
            y = y + res_ref[...].astype(jnp.float32)
        mu = jnp.mean(y, axis=-1, keepdims=True)
        var = jnp.mean((y - mu) ** 2, axis=-1, keepdims=True)
        o_ref[...] = ((y - mu) * jax.lax.rsqrt(var + LN_EPS) * g_ref[...]
                      + beta_ref[...]).astype(o_ref.dtype)


def dense_ln(x, w, b, gamma, beta, residual=None, activation=None,
             out_dtype=jnp.bfloat16):
    m, kdim = x.shape
    _, n = w.shape
    tm = _pick_tile(m, MAX_TM)
    tk = _pick_tile(kdim, MAX_TK)
    tn = n  # LayerNorm reduces over the full output row -> keep N untiled (N = H fits VMEM)
    grid = (m // tm, 1, kdim // tk)
    has_res = residual is not None
    kernel = functools.partial(_dense_ln_kernel, activation=activation,
                               has_residual=has_res)
    in_specs = [pl.BlockSpec((tm, tk), lambda i, j, k: (i, k)),
                pl.BlockSpec((tk, tn), lambda i, j, k: (k, j)),
                pl.BlockSpec((1, tn), lambda i, j, k: (0, j))]
    args = [x, w, b]
    if has_res:
        in_specs.append(pl.BlockSpec((tm, n), lambda i, j, k: (i, 0)))
        args.append(residual)
    in_specs += [pl.BlockSpec((1, n), lambda i, j, k: (0, 0)),
                 pl.BlockSpec((1, n), lambda i, j, k: (0, 0))]
    args += [gamma, beta]
    cost = pl.CostEstimate(
        flops=2 * m * n * kdim,
        transcendentals=(m * n if activation == "gelu" else 0),
        bytes_accessed=int(m * kdim * x.dtype.itemsize + kdim * n * w.dtype.itemsize
                           + 2 * m * n * jnp.dtype(out_dtype).itemsize))
    return pl.pallas_call(
        kernel,
        out_shape=jax.ShapeDtypeStruct((m, n), out_dtype),
        grid=grid,
        in_specs=in_specs,
        out_specs=pl.BlockSpec((tm, tn), lambda i, j, k: (i, j)),
        scratch_shapes=[pltpu.VMEM((tm, tn), jnp.float32)],
        compiler_params=pltpu.CompilerParams(
            dimension_semantics=("parallel", "parallel", "arbitrary"),
            vmem_limit_bytes=VMEM_LIMIT),
        cost_estimate=cost,
    )(*args)


# ------------ fully fused FFN: x @ Wi + bi -> GELU -> @ Wf + bf -> +x -> LayerNorm ------------

def _ffn_kernel(x_ref, wi_ref, bi_ref, wf_ref, bf_ref, g_ref, beta_ref, o_ref):
    x = x_ref[...]                                            # (tm, H) bf16
    inter = jnp.dot(x, wi_ref[...], preferred_element_type=jnp.float32) + bi_ref[...]
    inter = _gelu_erf(inter)                                  # (tm, 4H) fp32, VMEM-only
    y = jnp.dot(inter.astype(jnp.bfloat16), wf_ref[...],
                preferred_element_type=jnp.float32) + bf_ref[...]
    y = y + x.astype(jnp.float32)                             # residual = FFN input
    mu = jnp.mean(y, axis=-1, keepdims=True)
    var = jnp.mean((y - mu) ** 2, axis=-1, keepdims=True)
    o_ref[...] = ((y - mu) * jax.lax.rsqrt(var + LN_EPS) * g_ref[...]
                  + beta_ref[...]).astype(o_ref.dtype)


def ffn(x, wi, bi, wf, bf, gamma, beta, out_dtype=jnp.bfloat16):
    # The (M, 4H) intermediate never leaves VMEM -> saves its HBM write+read entirely.
    # TODO(synk): at real H=768 / tight v7x VMEM, tile the 4H contraction with an
    # inner loop / pltpu.emit_pipeline instead of holding Wi/Wf fully resident.
    m, h = x.shape
    _, inter_dim = wi.shape
    tm = _pick_tile(m, MAX_TM)
    cost = pl.CostEstimate(
        flops=2 * m * inter_dim * h * 2,
        transcendentals=m * inter_dim,
        bytes_accessed=int(2 * m * h * jnp.dtype(out_dtype).itemsize
                           + 2 * h * inter_dim * wi.dtype.itemsize))
    return pl.pallas_call(
        _ffn_kernel,
        out_shape=jax.ShapeDtypeStruct((m, h), out_dtype),
        grid=(m // tm,),
        in_specs=[pl.BlockSpec((tm, h), lambda i: (i, 0)),
                  pl.BlockSpec((h, inter_dim), lambda i: (0, 0)),
                  pl.BlockSpec((1, inter_dim), lambda i: (0, 0)),
                  pl.BlockSpec((inter_dim, h), lambda i: (0, 0)),
                  pl.BlockSpec((1, h), lambda i: (0, 0)),
                  pl.BlockSpec((1, h), lambda i: (0, 0)),
                  pl.BlockSpec((1, h), lambda i: (0, 0))],
        out_specs=pl.BlockSpec((tm, h), lambda i: (i, 0)),
        compiler_params=pltpu.CompilerParams(
            dimension_semantics=("parallel",),
            vmem_limit_bytes=VMEM_LIMIT),
        cost_estimate=cost,
    )(x, wi, bi, wf, bf, gamma, beta)


# ------------------------- embeddings: add pos/type + LayerNorm -------------------------

def _embed_ln_kernel(x_ref, e_ref, g_ref, b_ref, o_ref):
    h = x_ref[...] + e_ref[...]
    mu = jnp.mean(h, axis=-1, keepdims=True)
    var = jnp.mean((h - mu) ** 2, axis=-1, keepdims=True)
    o_ref[...] = ((h - mu) * jax.lax.rsqrt(var + LN_EPS) * g_ref[...]
                  + b_ref[...]).astype(o_ref.dtype)


def embed_layernorm(x, emb, gamma, beta, batch, seq, out_dtype=jnp.bfloat16):
    m, hdim = x.shape  # m = batch * seq
    return pl.pallas_call(
        _embed_ln_kernel,
        out_shape=jax.ShapeDtypeStruct((m, hdim), out_dtype),
        grid=(batch,),
        in_specs=[pl.BlockSpec((seq, hdim), lambda b: (b, 0)),
                  pl.BlockSpec((seq, hdim), lambda b: (0, 0)),  # shared (S,H) table, no B-tiling
                  pl.BlockSpec((1, hdim), lambda b: (0, 0)),
                  pl.BlockSpec((1, hdim), lambda b: (0, 0))],
        out_specs=pl.BlockSpec((seq, hdim), lambda b: (b, 0)),
        compiler_params=pltpu.CompilerParams(
            dimension_semantics=("parallel",),
            vmem_limit_bytes=VMEM_LIMIT),
    )(x, emb, gamma, beta)


# ------------------------- self-attention (per-batch, per-head-group, lane-dense) -------------------------

def _attn_kernel(q_ref, k_ref, v_ref, m_ref, o_ref, *, heads_per_group, head_dim):
    # q/k/v refs: (S, group_width) lane-dense column slabs of the fused (S, 3H) qkv.
    # m_ref: (1, 1, S); o_ref: (S, group_width).
    neg = (m_ref[0].astype(jnp.float32) - 1.0) * 1e9   # (1, S) additive key mask
    q = q_ref[...]
    k = k_ref[...]
    v = v_ref[...]
    parts = []
    for h in range(heads_per_group):                   # in-register head split (128-wide ref slabs)
        lo = h * head_dim
        qh = q[:, lo:lo + head_dim]
        kh = k[:, lo:lo + head_dim]
        vh = v[:, lo:lo + head_dim]
        # contract last dims directly (no explicit k.T / XLU transpose); 1/sqrt(d)
        # is pre-folded into Wq so no per-head scale multiply here.
        s = jax.lax.dot_general(qh, kh, (((1,), (1,)), ((), ())),
                                preferred_element_type=jnp.float32)
        s = s + neg
        s = s - jnp.max(s, axis=-1, keepdims=True)
        p = jnp.exp(s)
        p = p * pl.reciprocal(jnp.sum(p, axis=-1, keepdims=True), approx=True)
        parts.append(jnp.dot(p.astype(jnp.bfloat16), vh,
                             preferred_element_type=jnp.float32))
    # single lane-dense (S, group_width) store
    o_ref[...] = jnp.concatenate(parts, axis=-1).astype(o_ref.dtype)
    # TODO(synk): for real S=512 use flash-style tq/tk tiling with online softmax
    # instead of materializing full (S, S) scores per head.


def attention(qkv, mask3, batch, seq, hidden=HIDDEN, num_heads=NUM_HEADS,
              head_dim=HEAD_DIM):
    # qkv: (B*S, 3H) fused projections (bf16), mask3: (B, 1, S) -> out (B*S, H) bf16
    group_width = min(hidden, 128)
    assert hidden % group_width == 0 and group_width % head_dim == 0
    num_groups = hidden // group_width
    heads_per_group = group_width // head_dim
    kernel = functools.partial(_attn_kernel, heads_per_group=heads_per_group,
                               head_dim=head_dim)
    return pl.pallas_call(
        kernel,
        out_shape=jax.ShapeDtypeStruct((batch * seq, hidden), jnp.bfloat16),
        grid=(batch, num_groups),   # two parallel axes (keeps both v7x TCs busy)
        in_specs=[
            pl.BlockSpec((seq, group_width), lambda b, g: (b, g)),                    # Q slab
            pl.BlockSpec((seq, group_width), lambda b, g: (b, num_groups + g)),       # K slab
            pl.BlockSpec((seq, group_width), lambda b, g: (b, 2 * num_groups + g)),   # V slab
            pl.BlockSpec((1, 1, seq), lambda b, g: (b, 0, 0)),
        ],
        out_specs=pl.BlockSpec((seq, group_width), lambda b, g: (b, g)),
        compiler_params=pltpu.CompilerParams(
            dimension_semantics=("parallel", "parallel"),
            vmem_limit_bytes=VMEM_LIMIT),
    )(qkv, qkv, qkv, mask3)


# ------------------------- parameters -------------------------

def init_params(key):
    def nrm(k, shape, dtype=jnp.bfloat16):
        return (0.02 * jax.random.normal(k, shape, dtype=jnp.float32)).astype(dtype)

    keys = iter(jax.random.split(key, 64))
    ones = lambda n: jnp.ones((1, n), jnp.float32)
    zeros = lambda n: jnp.zeros((1, n), jnp.float32)
    scale = 1.0 / math.sqrt(HEAD_DIM)

    p = {
        "pos_emb": nrm(next(keys), (MAX_POS, HIDDEN), jnp.float32),
        "type_emb": nrm(next(keys), (2, HIDDEN), jnp.float32),
        "emb_ln_g": ones(HIDDEN), "emb_ln_b": zeros(HIDDEN),
        "layers": [],
        "head_W": nrm(next(keys), (HIDDEN, HIDDEN)), "head_b": zeros(HIDDEN),
        "head_ln_g": ones(HIDDEN), "head_ln_b": zeros(HIDDEN),
        "dec_W": nrm(next(keys), (HIDDEN, VOCAB)), "dec_b": zeros(VOCAB),
    }
    for _ in range(NUM_LAYERS):
        # fused [Wq | Wk | Wv] -> (H, 3H); fold 1/sqrt(head_dim) into the Wq/bq third
        wqkv = nrm(next(keys), (HIDDEN, 3 * HIDDEN))
        wqkv = wqkv.at[:, :HIDDEN].multiply(scale).astype(jnp.bfloat16)
        bqkv = zeros(3 * HIDDEN).at[:, :HIDDEN].multiply(scale)
        p["layers"].append({
            "Wqkv": wqkv, "bqkv": bqkv,
            "Wo": nrm(next(keys), (HIDDEN, HIDDEN)), "bo": zeros(HIDDEN),
            "ln1_g": ones(HIDDEN), "ln1_b": zeros(HIDDEN),
            "Wi": nrm(next(keys), (HIDDEN, INTERMEDIATE)), "bi": zeros(INTERMEDIATE),
            "Wf": nrm(next(keys), (INTERMEDIATE, HIDDEN)), "bf": zeros(HIDDEN),
            "ln2_g": ones(HIDDEN), "ln2_b": zeros(HIDDEN),
        })
    return p


# ------------------------- forward pass -------------------------

def bert_mlm_forward(params, inputs_embeds, attention_mask):
    B, S, H = inputs_embeds.shape
    x = inputs_embeds.reshape(B * S, H)  # contiguity-preserving, free

    # embeddings: inputs_embeds + position_embeddings + token_type_embeddings(0), then LN
    emb_add = params["pos_emb"][:S] + params["type_emb"][0:1]   # (S, H), shared across B
    h = embed_layernorm(x, emb_add, params["emb_ln_g"], params["emb_ln_b"], B, S)  # bf16
    # TODO(synk): reference keeps the frozen model in .train() so dropout is active;
    # stochastic dropout is not reproduced (deterministic forward here).
    # Note: the spec sets config.is_decoder=True on a config that is never passed to
    # from_pretrained, so the loaded model stays bidirectional (no causal mask here).

    mask3 = attention_mask.astype(jnp.float32).reshape(B, 1, S)

    for lp in params["layers"]:
        qkv = dense(h, lp["Wqkv"], lp["bqkv"])                  # (B*S, 3H) bf16, one fused matmul
        ctx = attention(qkv, mask3, B, S)                       # (B*S, H) bf16, lane-dense
        # output projection + residual(h) + LayerNorm, fused in epilogue
        h = dense_ln(ctx, lp["Wo"], lp["bo"], lp["ln1_g"], lp["ln1_b"], residual=h)
        # fully fused FFN: up-proj + GELU + down-proj + residual + LayerNorm
        h = ffn(h, lp["Wi"], lp["bi"], lp["Wf"], lp["bf"], lp["ln2_g"], lp["ln2_b"])

    # MLM head: transform dense + erf-GELU + LayerNorm (fused), then vocab decoder
    t = dense_ln(h, params["head_W"], params["head_b"],
                 params["head_ln_g"], params["head_ln_b"], activation="gelu")
    logits = dense(t, params["dec_W"], params["dec_b"], out_dtype=jnp.float32,
                   weight_buffers=3)
    return logits.reshape(B, S, VOCAB)


if __name__ == "__main__":
    key = jax.random.PRNGKey(0)
    pkey, xkey = jax.random.split(key)
    params = init_params(pkey)

    input_embedding = jax.random.normal(xkey, (BATCH, SEQ, HIDDEN), dtype=jnp.float32)
    attn_mask = jnp.ones((BATCH, SEQ), dtype=jnp.float32)

    logits = jax.jit(bert_mlm_forward)(params, input_embedding, attn_mask)
    jax.block_until_ready(logits)
    assert logits.shape == (BATCH, SEQ, VOCAB)
    assert logits.dtype == jnp.float32
    assert bool(jnp.all(jnp.isfinite(logits)))
    print("KERNEL_OK")
</pallas_src>

<mosaic_0001>
module attributes {stable_mosaic.version = 11 : i64} {
  func.func @_embed_ln_kernel(%arg0: i32, %arg1: memref<8x128xf32, #tpu.memory_space<vmem>>, %arg2: memref<8x128xf32, #tpu.memory_space<vmem>>, %arg3: memref<1x128xf32, #tpu.memory_space<vmem>>, %arg4: memref<1x128xf32, #tpu.memory_space<vmem>>, %arg5: memref<8x128xbf16, #tpu.memory_space<vmem>>) attributes {dimension_semantics = [#tpu.dimension_semantics<parallel>], iteration_bounds = array<i64: 2>, scalar_prefetch = 0 : i64, scratch_operands = 0 : i64, tpu.core_type = #tpu.core_type<tc>, window_params = [{transform_indices = @transform_0, window_bounds = array<i64: 8, 128>}, {pipeline_mode = #tpu.pipeline_mode<synchronous>, transform_indices = @transform_1, window_bounds = array<i64: 8, 128>}, {pipeline_mode = #tpu.pipeline_mode<synchronous>, transform_indices = @transform_2, window_bounds = array<i64: 1, 128>}, {pipeline_mode = #tpu.pipeline_mode<synchronous>, transform_indices = @transform_3, window_bounds = array<i64: 1, 128>}, {transform_indices = @transform_4, window_bounds = array<i64: 8, 128>}]} {
    %c0 = arith.constant 0 : index
    %c0_0 = arith.constant 0 : index
    %0 = vector.load %arg1[%c0, %c0_0] : memref<8x128xf32, #tpu.memory_space<vmem>>, vector<8x128xf32>
    %c0_1 = arith.constant 0 : index
    %c0_2 = arith.constant 0 : index
    %1 = vector.load %arg2[%c0_1, %c0_2] : memref<8x128xf32, #tpu.memory_space<vmem>>, vector<8x128xf32>
    %2 = arith.addf %0, %1 : vector<8x128xf32>
    %cst = arith.constant dense<0.000000e+00> : vector<8xf32>
    %3 = vector.multi_reduction <add>, %2, %cst [1] : vector<8x128xf32> to vector<8xf32>
    %4 = vector.shape_cast %3 : vector<8xf32> to vector<8x1xf32>
    %cst_3 = arith.constant 1.280000e+02 : f32
    %5 = vector.broadcast %cst_3 : f32 to vector<8x1xf32>
    %6 = arith.divf %4, %5 : vector<8x1xf32>
    %7 = vector.broadcast %6 : vector<8x1xf32> to vector<8x128xf32>
    %8 = arith.subf %2, %7 : vector<8x128xf32>
    %9 = arith.mulf %8, %8 : vector<8x128xf32>
    %cst_4 = arith.constant dense<0.000000e+00> : vector<8xf32>
    %10 = vector.multi_reduction <add>, %9, %cst_4 [1] : vector<8x128xf32> to vector<8xf32>
    %11 = vector.shape_cast %10 : vector<8xf32> to vector<8x1xf32>
    %cst_5 = arith.constant 1.280000e+02 : f32
    %12 = vector.broadcast %cst_5 : f32 to vector<8x1xf32>
    %13 = arith.divf %11, %12 : vector<8x1xf32>
    %14 = vector.broadcast %6 : vector<8x1xf32> to vector<8x128xf32>
    %15 = arith.subf %2, %14 : vector<8x128xf32>
    %cst_6 = arith.constant 9.99999996E-13 : f32
    %16 = vector.broadcast %cst_6 : f32 to vector<8x1xf32>
    %17 = arith.addf %13, %16 : vector<8x1xf32>
    %18 = math.rsqrt %17 : vector<8x1xf32>
    %19 = vector.broadcast %18 : vector<8x1xf32> to vector<8x128xf32>
    %20 = arith.mulf %15, %19 : vector<8x128xf32>
    %c0_7 = arith.constant 0 : index
    %c0_8 = arith.constant 0 : index
    %21 = vector.load %arg3[%c0_7, %c0_8] : memref<1x128xf32, #tpu.memory_space<vmem>>, vector<1x128xf32>
    %22 = vector.broadcast %21 : vector<1x128xf32> to vector<8x128xf32>
    %23 = arith.mulf %20, %22 : vector<8x128xf32>
    %c0_9 = arith.constant 0 : index
    %c0_10 = arith.constant 0 : index
    %24 = vector.load %arg4[%c0_9, %c0_10] : memref<1x128xf32, #tpu.memory_space<vmem>>, vector<1x128xf32>
    %25 = vector.broadcast %24 : vector<1x128xf32> to vector<8x128xf32>
    %26 = arith.addf %23, %25 : vector<8x128xf32>
    %27 = arith.truncf %26 : vector<8x128xf32> to vector<8x128xbf16>
    %c0_11 = arith.constant 0 : index
    %c0_12 = arith.constant 0 : index
    %28 = vector.load %arg5[%c0_11, %c0_12] : memref<8x128xbf16, #tpu.memory_space<vmem>>, vector<8x128xbf16>
    tpu.vector_store %arg5[%c0_11, %c0_12], %27 {strides = array<i32>} : memref<8x128xbf16, #tpu.memory_space<vmem>>, vector<8x128xbf16>,
    return
  }
  func.func @transform_0(%arg0: i32) -> (i32, i32) {
    %c0_i32 = arith.constant 0 : i32
    %c0_i32_0 = arith.constant 0 : i32
    return %arg0, %c0_i32 : i32, i32
  }
  func.func @transform_1(%arg0: i32) -> (i32, i32) {
    %c0_i32 = arith.constant 0 : i32
    %c0_i32_0 = arith.constant 0 : i32
    %c0_i32_1 = arith.constant 0 : i32
    return %c0_i32, %c0_i32_0 : i32, i32
  }
  func.func @transform_2(%arg0: i32) -> (i32, i32) {
    %c0_i32 = arith.constant 0 : i32
    %c0_i32_0 = arith.constant 0 : i32
    %c0_i32_1 = arith.constant 0 : i32
    return %c0_i32, %c0_i32_0 : i32, i32
  }
  func.func @transform_3(%arg0: i32) -> (i32, i32) {
    %c0_i32 = arith.constant 0 : i32
    %c0_i32_0 = arith.constant 0 : i32
    %c0_i32_1 = arith.constant 0 : i32
    return %c0_i32, %c0_i32_0 : i32, i32
  }
  func.func @transform_4(%arg0: i32) -> (i32, i32) {
    %c0_i32 = arith.constant 0 : i32
    %c0_i32_0 = arith.constant 0 : i32
    return %arg0, %c0_i32 : i32, i32
  }
}

module attributes {stable_mosaic.version = 11 : i64} {
  func.func @_dense_kernel(%arg0: i32, %arg1: i32, %arg2: i32, %arg3: memref<16x128xbf16, #tpu.memory_space<vmem>>, %arg4: memref<128x384xbf16, #tpu.memory_space<vmem>>, %arg5: memref<1x384xf32, #tpu.memory_space<vmem>>, %arg6: memref<16x384xbf16, #tpu.memory_space<vmem>>, %arg7: memref<16x384xf32, #tpu.memory_space<vmem>>) attributes {dimension_semantics = [#tpu.dimension_semantics<parallel>, #tpu.dimension_semantics<parallel>, #tpu.dimension_semantics<arbitrary>], iteration_bounds = array<i64: 1, 1, 1>, scalar_prefetch = 0 : i64, scratch_operands = 1 : i64, tpu.core_type = #tpu.core_type<tc>, window_params = [{transform_indices = @transform_0, window_bounds = array<i64: 16, 128>}, {transform_indices = @transform_1, window_bounds = array<i64: 128, 384>}, {transform_indices = @transform_2, window_bounds = array<i64: 1, 384>}, {transform_indices = @transform_3, window_bounds = array<i64: 16, 384>}]} {
    %c0_i32 = arith.constant 0 : i32
    %0 = arith.cmpi eq, %arg2, %c0_i32 : i32
    %1 = arith.extui %0 : i1 to i32
    %c0_i32_0 = arith.constant 0 : i32
    %2 = arith.cmpi ne, %1, %c0_i32_0 : i32
    scf.if %2 {
      %cst_10 = arith.constant 0.000000e+00 : f32
      %12 = vector.broadcast %cst_10 : f32 to vector<16x384xf32>
      %c0_11 = arith.constant 0 : index
      %c0_12 = arith.constant 0 : index
      %13 = vector.load %arg7[%c0_11, %c0_12] : memref<16x384xf32, #tpu.memory_space<vmem>>, vector<16x384xf32>
      tpu.vector_store %arg7[%c0_11, %c0_12], %12 {strides = array<i32>} : memref<16x384xf32, #tpu.memory_space<vmem>>, vector<16x384xf32>,
    } else {
    }
    %c0 = arith.constant 0 : index
    %c0_1 = arith.constant 0 : index
    %3 = vector.load %arg7[%c0, %c0_1] : memref<16x384xf32, #tpu.memory_space<vmem>>, vector<16x384xf32>
    %c0_2 = arith.constant 0 : index
    %c0_3 = arith.constant 0 : index
    %4 = vector.load %arg3[%c0_2, %c0_3] : memref<16x128xbf16, #tpu.memory_space<vmem>>, vector<16x128xbf16>
    %c0_4 = arith.constant 0 : index
    %c0_5 = arith.constant 0 : index
    %5 = vector.load %arg4[%c0_4, %c0_5] : memref<128x384xbf16, #tpu.memory_space<vmem>>, vector<128x384xbf16>
    %cst = arith.constant dense<0.000000e+00> : vector<16x384xf32>
    %6 = tpu.matmul %4, %5, %cst {dimension_numbers = #tpu.dot_dimension_numbers<[1], [0], [0], [1], [0, 0, 1, 1], [], []>} : vector<16x128xbf16>, vector<128x384xbf16>, vector<16x384xf32> -> vector<16x384xf32>
    %7 = arith.addf %3, %6 : vector<16x384xf32>
    %c0_6 = arith.constant 0 : index
    %c0_7 = arith.constant 0 : index
    %8 = vector.load %arg7[%c0_6, %c0_7] : memref<16x384xf32, #tpu.memory_space<vmem>>, vector<16x384xf32>
    tpu.vector_store %arg7[%c0_6, %c0_7], %7 {strides = array<i32>} : memref<16x384xf32, #tpu.memory_space<vmem>>, vector<16x384xf32>,
    %c0_i32_8 = arith.constant 0 : i32
    %9 = arith.cmpi eq, %arg2, %c0_i32_8 : i32
    %10 = arith.extui %9 : i1 to i32
    %c0_i32_9 = arith.constant 0 : i32
    %11 = arith.cmpi ne, %10, %c0_i32_9 : i32
    scf.if %11 {
      %c0_10 = arith.constant 0 : index
      %c0_11 = arith.constant 0 : index
      %12 = vector.load %arg7[%c0_10, %c0_11] : memref<16x384xf32, #tpu.memory_space<vmem>>, vector<16x384xf32>
      %c0_12 = arith.constant 0 : index
      %c0_13 = arith.constant 0 : index
      %13 = vector.load %arg5[%c0_12, %c0_13] : memref<1x384xf32, #tpu.memory_space<vmem>>, vector<1x384xf32>
      %14 = vector.broadcast %13 : vector<1x384xf32> to vector<16x384xf32>
      %15 = arith.addf %12, %14 : vector<16x384xf32>
      %16 = arith.truncf %15 : vector<16x384xf32> to vector<16x384xbf16>
      %c0_14 = arith.constant 0 : index
      %c0_15 = arith.constant 0 : index
      %17 = vector.load %arg6[%c0_14, %c0_15] : memref<16x384xbf16, #tpu.memory_space<vmem>>, vector<16x384xbf16>
      tpu.vector_store %arg6[%c0_14, %c0_15], %16 {strides = array<i32>} : memref<16x384xbf16, #tpu.memory_space<vmem>>, vector<16x384xbf16>,
    } else {
    }
    return
  }
  func.func @transform_0(%arg0: i32, %arg1: i32, %arg2: i32) -> (i32, i32) {
    %c0_i32 = arith.constant 0 : i32
    return %arg0, %arg2 : i32, i32
  }
  func.func @transform_1(%arg0: i32, %arg1: i32, %arg2: i32) -> (i32, i32) {
    %c0_i32 = arith.constant 0 : i32
    return %arg2, %arg1 : i32, i32
  }
  func.func @transform_2(%arg0: i32, %arg1: i32, %arg2: i32) -> (i32, i32) {
    %c0_i32 = arith.constant 0 : i32
    %c0_i32_0 = arith.constant 0 : i32
    return %c0_i32, %arg1 : i32, i32
  }
  func.func @transform_3(%arg0: i32, %arg1: i32, %arg2: i32) -> (i32, i32) {
    %c0_i32 = arith.constant 0 : i32
    return %arg0, %arg1 : i32, i32
  }
}

module attributes {stable_mosaic.version = 11 : i64} {
  func.func @_attn_kernel(%arg0: i32, %arg1: i32, %arg2: memref<8x128xbf16, #tpu.memory_space<vmem>>, %arg3: memref<8x128xbf16, #tpu.memory_space<vmem>>, %arg4: memref<8x128xbf16, #tpu.memory_space<vmem>>, %arg5: memref<1x1x8xf32, #tpu.memory_space<vmem>>, %arg6: memref<8x128xbf16, #tpu.memory_space<vmem>>) attributes {dimension_semantics = [#tpu.dimension_semantics<parallel>, #tpu.dimension_semantics<parallel>], iteration_bounds = array<i64: 2, 1>, scalar_prefetch = 0 : i64, scratch_operands = 0 : i64, tpu.core_type = #tpu.core_type<tc>, window_params = [{transform_indices = @transform_0, window_bounds = array<i64: 8, 128>}, {transform_indices = @transform_1, window_bounds = array<i64: 8, 128>}, {transform_indices = @transform_2, window_bounds = array<i64: 8, 128>}, {transform_indices = @transform_3, window_bounds = array<i64: 1, 1, 8>}, {transform_indices = @transform_4, window_bounds = array<i64: 8, 128>}]} {
    %c0 = arith.constant 0 : index
    %c0_0 = arith.constant 0 : index
    %c0_1 = arith.constant 0 : index
    %0 = vector.load %arg5[%c0, %c0_0, %c0_1] : memref<1x1x8xf32, #tpu.memory_space<vmem>>, vector<1x1x8xf32>
    %1 = vector.shape_cast %0 : vector<1x1x8xf32> to vector<1x8xf32>
    %cst = arith.constant 1.000000e+00 : f32
    %2 = vector.broadcast %cst : f32 to vector<1x8xf32>
    %3 = arith.subf %1, %2 : vector<1x8xf32>
    %cst_2 = arith.constant 1.000000e+09 : f32
    %4 = vector.broadcast %cst_2 : f32 to vector<1x8xf32>
    %5 = arith.mulf %3, %4 : vector<1x8xf32>
    %c0_3 = arith.constant 0 : index
    %c0_4 = arith.constant 0 : index
    %6 = vector.load %arg2[%c0_3, %c0_4] : memref<8x128xbf16, #tpu.memory_space<vmem>>, vector<8x128xbf16>
    %c0_5 = arith.constant 0 : index
    %c0_6 = arith.constant 0 : index
    %7 = vector.load %arg3[%c0_5, %c0_6] : memref<8x128xbf16, #tpu.memory_space<vmem>>, vector<8x128xbf16>
    %c0_7 = arith.constant 0 : index
    %c0_8 = arith.constant 0 : index
    %8 = vector.load %arg4[%c0_7, %c0_8] : memref<8x128xbf16, #tpu.memory_space<vmem>>, vector<8x128xbf16>
    %9 = vector.extract_strided_slice %6 {offsets = [0, 0], sizes = [8, 32], strides = [1, 1]} : vector<8x128xbf16> to vector<8x32xbf16>
    %10 = vector.extract_strided_slice %7 {offsets = [0, 0], sizes = [8, 32], strides = [1, 1]} : vector<8x128xbf16> to vector<8x32xbf16>
    %11 = vector.extract_strided_slice %8 {offsets = [0, 0], sizes = [8, 32], strides = [1, 1]} : vector<8x128xbf16> to vector<8x32xbf16>
    %cst_9 = arith.constant dense<0.000000e+00> : vector<8x8xf32>
    %12 = tpu.matmul %9, %10, %cst_9 {dimension_numbers = #tpu.dot_dimension_numbers<[1], [1], [0], [0], [0, 0, 1, 0], [], []>} : vector<8x32xbf16>, vector<8x32xbf16>, vector<8x8xf32> -> vector<8x8xf32>
    %13 = vector.broadcast %5 : vector<1x8xf32> to vector<8x8xf32>
    %14 = arith.addf %12, %13 : vector<8x8xf32>
    %cst_10 = arith.constant dense<0xFF800000> : vector<8xf32>
    %15 = vector.multi_reduction <maximumf>, %14, %cst_10 [1] : vector<8x8xf32> to vector<8xf32>
    %16 = vector.shape_cast %15 : vector<8xf32> to vector<8x1xf32>
    %17 = vector.broadcast %16 : vector<8x1xf32> to vector<8x8xf32>
    %18 = arith.subf %14, %17 : vector<8x8xf32>
    %19 = math.exp %18 : vector<8x8xf32>
    %cst_11 = arith.constant dense<0.000000e+00> : vector<8xf32>
    %20 = vector.multi_reduction <add>, %19, %cst_11 [1] : vector<8x8xf32> to vector<8xf32>
    %21 = vector.shape_cast %20 : vector<8xf32> to vector<8x1xf32>
    %22 = tpu.reciprocal %21 {approx = true} : vector<8x1xf32> -> vector<8x1xf32>
    %23 = vector.broadcast %22 : vector<8x1xf32> to vector<8x8xf32>
    %24 = arith.mulf %19, %23 : vector<8x8xf32>
    %25 = arith.truncf %24 : vector<8x8xf32> to vector<8x8xbf16>
    %cst_12 = arith.constant dense<0.000000e+00> : vector<8x32xf32>
    %26 = tpu.matmul %25, %11, %cst_12 {dimension_numbers = #tpu.dot_dimension_numbers<[1], [0], [0], [1], [0, 0, 1, 1], [], []>} : vector<8x8xbf16>, vector<8x32xbf16>, vector<8x32xf32> -> vector<8x32xf32>
    %27 = vector.extract_strided_slice %6 {offsets = [0, 32], sizes = [8, 32], strides = [1, 1]} : vector<8x128xbf16> to vector<8x32xbf16>
    %28 = vector.extract_strided_slice %7 {offsets = [0, 32], sizes = [8, 32], strides = [1, 1]} : vector<8x128xbf16> to vector<8x32xbf16>
    %29 = vector.extract_strided_slice %8 {offsets = [0, 32], sizes = [8, 32], strides = [1, 1]} : vector<8x128xbf16> to vector<8x32xbf16>
    %cst_13 = arith.constant dense<0.000000e+00> : vector<8x8xf32>
    %30 = tpu.matmul %27, %28, %cst_13 {dimension_numbers = #tpu.dot_dimension_numbers<[1], [1], [0], [0], [0, 0, 1, 0], [], []>} : vector<8x32xbf16>, vector<8x32xbf16>, vector<8x8xf32> -> vector<8x8xf32>
    %31 = vector.broadcast %5 : vector<1x8xf32> to vector<8x8xf32>
    %32 = arith.addf %30, %31 : vector<8x8xf32>
    %cst_14 = arith.constant dense<0xFF800000> : vector<8xf32>
    %33 = vector.multi_reduction <maximumf>, %32, %cst_14 [1] : vector<8x8xf32> to vector<8xf32>
    %34 = vector.shape_cast %33 : vector<8xf32> to vector<8x1xf32>
    %35 = vector.broadcast %34 : vector<8x1xf32> to vector<8x8xf32>
    %36 = arith.subf %32, %35 : vector<8x8xf32>
    %37 = math.exp %36 : vector<8x8xf32>
    %cst_15 = arith.constant dense<0.000000e+00> : vector<8xf32>
    %38 = vector.multi_reduction <add>, %37, %cst_15 [1] : vector<8x8xf32> to vector<8xf32>
    %39 = vector.shape_cast %38 : vector<8xf32> to vector<8x1xf32>
    %40 = tpu.reciprocal %39 {approx = true} : vector<8x1xf32> -> vector<8x1xf32>
    %41 = vector.broadcast %40 : vector<8x1xf32> to vector<8x8xf32>
    %42 = arith.mulf %37, %41 : vector<8x8xf32>
    %43 = arith.truncf %42 : vector<8x8xf32> to vector<8x8xbf16>
    %cst_16 = arith.constant dense<0.000000e+00> : vector<8x32xf32>
    %44 = tpu.matmul %43, %29, %cst_16 {dimension_numbers = #tpu.dot_dimension_numbers<[1], [0], [0], [1], [0, 0, 1, 1], [], []>} : vector<8x8xbf16>, vector<8x32xbf16>, vector<8x32xf32> -> vector<8x32xf32>
    %45 = vector.extract_strided_slice %6 {offsets = [0, 64], sizes = [8, 32], strides = [1, 1]} : vector<8x128xbf16> to vector<8x32xbf16>
    %46 = vector.extract_strided_slice %7 {offsets = [0, 64], sizes = [8, 32], strides = [1, 1]} : vector<8x128xbf16> to vector<8x32xbf16>
    %47 = vector.extract_strided_slice %8 {offsets = [0, 64], sizes = [8, 32], strides = [1, 1]} : vector<8x128xbf16> to vector<8x32xbf16>
    %cst_17 = arith.constant dense<0.000000e+00> : vector<8x8xf32>
    %48 = tpu.matmul %45, %46, %cst_17 {dimension_numbers = #tpu.dot_dimension_numbers<[1], [1], [0], [0], [0, 0, 1, 0], [], []>} : vector<8x32xbf16>, vector<8x32xbf16>, vector<8x8xf32> -> vector<8x8xf32>
    %49 = vector.broadcast %5 : vector<1x8xf32> to vector<8x8xf32>
    %50 = arith.addf %48, %49 : vector<8x8xf32>
    %cst_18 = arith.constant dense<0xFF800000> : vector<8xf32>
    %51 = vector.multi_reduction <maximumf>, %50, %cst_18 [1] : vector<8x8xf32> to vector<8xf32>
    %52 = vector.shape_cast %51 : vector<8xf32> to vector<8x1xf32>
    %53 = vector.broadcast %52 : vector<8x1xf32> to vector<8x8xf32>
    %54 = arith.subf %50, %53 : vector<8x8xf32>
    %55 = math.exp %54 : vector<8x8xf32>
    %cst_19 = arith.constant dense<0.000000e+00> : vector<8xf32>
    %56 = vector.multi_reduction <add>, %55, %cst_19 [1] : vector<8x8xf32> to vector<8xf32>
    %57 = vector.shape_cast %56 : vector<8xf32> to vector<8x1xf32>
    %58 = tpu.reciprocal %57 {approx = true} : vector<8x1xf32> -> vector<8x1xf32>
    %59 = vector.broadcast %58 : vector<8x1xf32> to vector<8x8xf32>
    %60 = arith.mulf %55, %59 : vector<8x8xf32>
    %61 = arith.truncf %60 : vector<8x8xf32> to vector<8x8xbf16>
    %cst_20 = arith.constant dense<0.000000e+00> : vector<8x32xf32>
    %62 = tpu.matmul %61, %47, %cst_20 {dimension_numbers = #tpu.dot_dimension_numbers<[1], [0], [0], [1], [0, 0, 1, 1], [], []>} : vector<8x8xbf16>, vector<8x32xbf16>, vector<8x32xf32> -> vector<8x32xf32>
    %63 = vector.extract_strided_slice %6 {offsets = [0, 96], sizes = [8, 32], strides = [1, 1]} : vector<8x128xbf16> to vector<8x32xbf16>
    %64 = vector.extract_strided_slice %7 {offsets = [0, 96], sizes = [8, 32], strides = [1, 1]} : vector<8x128xbf16> to vector<8x32xbf16>
    %65 = vector.extract_strided_slice %8 {offsets = [0, 96], sizes = [8, 32], strides = [1, 1]} : vector<8x128xbf16> to vector<8x32xbf16>
    %cst_21 = arith.constant dense<0.000000e+00> : vector<8x8xf32>
    %66 = tpu.matmul %63, %64, %cst_21 {dimension_numbers = #tpu.dot_dimension_numbers<[1], [1], [0], [0], [0, 0, 1, 0], [], []>} : vector<8x32xbf16>, vector<8x32xbf16>, vector<8x8xf32> -> vector<8x8xf32>
    %67 = vector.broadcast %5 : vector<1x8xf32> to vector<8x8xf32>
    %68 = arith.addf %66, %67 : vector<8x8xf32>
    %cst_22 = arith.constant dense<0xFF800000> : vector<8xf32>
    %69 = vector.multi_reduction <maximumf>, %68, %cst_22 [1] : vector<8x8xf32> to vector<8xf32>
    %70 = vector.shape_cast %69 : vector<8xf32> to vector<8x1xf32>
    %71 = vector.broadcast %70 : vector<8x1xf32> to vector<8x8xf32>
    %72 = arith.subf %68, %71 : vector<8x8xf32>
    %73 = math.exp %72 : vector<8x8xf32>
    %cst_23 = arith.constant dense<0.000000e+00> : vector<8xf32>
    %74 = vector.multi_reduction <add>, %73, %cst_23 [1] : vector<8x8xf32> to vector<8xf32>
    %75 = vector.shape_cast %74 : vector<8xf32> to vector<8x1xf32>
    %76 = tpu.reciprocal %75 {approx = true} : vector<8x1xf32> -> vector<8x1xf32>
    %77 = vector.broadcast %76 : vector<8x1xf32> to vector<8x8xf32>
    %78 = arith.mulf %73, %77 : vector<8x8xf32>
    %79 = arith.truncf %78 : vector<8x8xf32> to vector<8x8xbf16>
    %cst_24 = arith.constant dense<0.000000e+00> : vector<8x32xf32>
    %80 = tpu.matmul %79, %65, %cst_24 {dimension_numbers = #tpu.dot_dimension_numbers<[1], [0], [0], [1], [0, 0, 1, 1], [], []>} : vector<8x8xbf16>, vector<8x32xbf16>, vector<8x32xf32> -> vector<8x32xf32>
    %81 = tpu.concatenate %26, %44, %62, %80 in 1 : vector<8x32xf32>, vector<8x32xf32>, vector<8x32xf32>, vector<8x32xf32> -> vector<8x128xf32>
    %82 = arith.truncf %81 : vector<8x128xf32> to vector<8x128xbf16>
    %c0_25 = arith.constant 0 : index
    %c0_26 = arith.constant 0 : index
    %83 = vector.load %arg6[%c0_25, %c0_26] : memref<8x128xbf16, #tpu.memory_space<vmem>>, vector<8x128xbf16>
    tpu.vector_store %arg6[%c0_25, %c0_26], %82 {strides = array<i32>} : memref<8x128xbf16, #tpu.memory_space<vmem>>, vector<8x128xbf16>,
    return
  }
  func.func @transform_0(%arg0: i32, %arg1: i32) -> (i32, i32) {
    %c0_i32 = arith.constant 0 : i32
    return %arg0, %arg1 : i32, i32
  }
  func.func @transform_1(%arg0: i32, %arg1: i32) -> (i32, i32) {
    %c1_i32 = arith.constant 1 : i32
    %0 = arith.addi %c1_i32, %arg1 : i32
    %c0_i32 = arith.constant 0 : i32
    return %arg0, %0 : i32, i32
  }
  func.func @transform_2(%arg0: i32, %arg1: i32) -> (i32, i32) {
    %c2_i32 = arith.constant 2 : i32
    %0 = arith.addi %c2_i32, %arg1 : i32
    %c0_i32 = arith.constant 0 : i32
    return %arg0, %0 : i32, i32
  }
  func.func @transform_3(%arg0: i32, %arg1: i32) -> (i32, i32, i32) {
    %c0_i32 = arith.constant 0 : i32
    %c0_i32_0 = arith.constant 0 : i32
    %c0_i32_1 = arith.constant 0 : i32
    return %arg0, %c0_i32, %c0_i32_0 : i32, i32, i32
  }
  func.func @transform_4(%arg0: i32, %arg1: i32) -> (i32, i32) {
    %c0_i32 = arith.constant 0 : i32
    return %arg0, %arg1 : i32, i32
  }
}

module attributes {stable_mosaic.version = 11 : i64} {
  func.func @_dense_ln_kernel(%arg0: i32, %arg1: i32, %arg2: i32, %arg3: memref<16x128xbf16, #tpu.memory_space<vmem>>, %arg4: memref<128x128xbf16, #tpu.memory_space<vmem>>, %arg5: memref<1x128xf32, #tpu.memory_space<vmem>>, %arg6: memref<16x128xbf16, #tpu.memory_space<vmem>>, %arg7: memref<1x128xf32, #tpu.memory_space<vmem>>, %arg8: memref<1x128xf32, #tpu.memory_space<vmem>>, %arg9: memref<16x128xbf16, #tpu.memory_space<vmem>>, %arg10: memref<16x128xf32, #tpu.memory_space<vmem>>) attributes {dimension_semantics = [#tpu.dimension_semantics<parallel>, #tpu.dimension_semantics<parallel>, #tpu.dimension_semantics<arbitrary>], iteration_bounds = array<i64: 1, 1, 1>, scalar_prefetch = 0 : i64, scratch_operands = 1 : i64, tpu.core_type = #tpu.core_type<tc>, window_params = [{transform_indices = @transform_0, window_bounds = array<i64: 16, 128>}, {transform_indices = @transform_1, window_bounds = array<i64: 128, 128>}, {transform_indices = @transform_2, window_bounds = array<i64: 1, 128>}, {transform_indices = @transform_3, window_bounds = array<i64: 16, 128>}, {pipeline_mode = #tpu.pipeline_mode<synchronous>, transform_indices = @transform_4, window_bounds = array<i64: 1, 128>}, {pipeline_mode = #tpu.pipeline_mode<synchronous>, transform_indices = @transform_5, window_bounds = array<i64: 1, 128>}, {transform_indices = @transform_6, window_bounds = array<i64: 16, 128>}]} {
    %c0_i32 = arith.constant 0 : i32
    %0 = arith.cmpi eq, %arg2, %c0_i32 : i32
    %1 = arith.extui %0 : i1 to i32
    %c0_i32_0 = arith.constant 0 : i32
    %2 = arith.cmpi ne, %1, %c0_i32_0 : i32
    scf.if %2 {
      %cst_10 = arith.constant 0.000000e+00 : f32
      %12 = vector.broadcast %cst_10 : f32 to vector<16x128xf32>
      %c0_11 = arith.constant 0 : index
      %c0_12 = arith.constant 0 : index
      %13 = vector.load %arg10[%c0_11, %c0_12] : memref<16x128xf32, #tpu.memory_space<vmem>>, vector<16x128xf32>
      tpu.vector_store %arg10[%c0_11, %c0_12], %12 {strides = array<i32>} : memref<16x128xf32, #tpu.memory_space<vmem>>, vector<16x128xf32>,
    } else {
    }
    %c0 = arith.constant 0 : index
    %c0_1 = arith.constant 0 : index
    %3 = vector.load %arg10[%c0, %c0_1] : memref<16x128xf32, #tpu.memory_space<vmem>>, vector<16x128xf32>
    %c0_2 = arith.constant 0 : index
    %c0_3 = arith.constant 0 : index
    %4 = vector.load %arg3[%c0_2, %c0_3] : memref<16x128xbf16, #tpu.memory_space<vmem>>, vector<16x128xbf16>
    %c0_4 = arith.constant 0 : index
    %c0_5 = arith.constant 0 : index
    %5 = vector.load %arg4[%c0_4, %c0_5] : memref<128x128xbf16, #tpu.memory_space<vmem>>, vector<128x128xbf16>
    %cst = arith.constant dense<0.000000e+00> : vector<16x128xf32>
    %6 = tpu.matmul %4, %5, %cst {dimension_numbers = #tpu.dot_dimension_numbers<[1], [0], [0], [1], [0, 0, 1, 1], [], []>} : vector<16x128xbf16>, vector<128x128xbf16>, vector<16x128xf32> -> vector<16x128xf32>
    %7 = arith.addf %3, %6 : vector<16x128xf32>
    %c0_6 = arith.constant 0 : index
    %c0_7 = arith.constant 0 : index
    %8 = vector.load %arg10[%c0_6, %c0_7] : memref<16x128xf32, #tpu.memory_space<vmem>>, vector<16x128xf32>
    tpu.vector_store %arg10[%c0_6, %c0_7], %7 {strides = array<i32>} : memref<16x128xf32, #tpu.memory_space<vmem>>, vector<16x128xf32>,
    %c0_i32_8 = arith.constant 0 : i32
    %9 = arith.cmpi eq, %arg2, %c0_i32_8 : i32
    %10 = arith.extui %9 : i1 to i32
    %c0_i32_9 = arith.constant 0 : i32
    %11 = arith.cmpi ne, %10, %c0_i32_9 : i32
    scf.if %11 {
      %c0_10 = arith.constant 0 : index
      %c0_11 = arith.constant 0 : index
      %12 = vector.load %arg10[%c0_10, %c0_11] : memref<16x128xf32, #tpu.memory_space<vmem>>, vector<16x128xf32>
      %c0_12 = arith.constant 0 : index
      %c0_13 = arith.constant 0 : index
      %13 = vector.load %arg5[%c0_12, %c0_13] : memref<1x128xf32, #tpu.memory_space<vmem>>, vector<1x128xf32>
      %14 = vector.broadcast %13 : vector<1x128xf32> to vector<16x128xf32>
      %15 = arith.addf %12, %14 : vector<16x128xf32>
      %c0_14 = arith.constant 0 : index
      %c0_15 = arith.constant 0 : index
      %16 = vector.load %arg6[%c0_14, %c0_15] : memref<16x128xbf16, #tpu.memory_space<vmem>>, vector<16x128xbf16>
      %17 = arith.extf %16 : vector<16x128xbf16> to vector<16x128xf32>
      %18 = arith.addf %15, %17 : vector<16x128xf32>
      %cst_16 = arith.constant dense<0.000000e+00> : vector<16xf32>
      %19 = vector.multi_reduction <add>, %18, %cst_16 [1] : vector<16x128xf32> to vector<16xf32>
      %20 = vector.shape_cast %19 : vector<16xf32> to vector<16x1xf32>
      %cst_17 = arith.constant 1.280000e+02 : f32
      %21 = vector.broadcast %cst_17 : f32 to vector<16x1xf32>
      %22 = arith.divf %20, %21 : vector<16x1xf32>
      %23 = vector.broadcast %22 : vector<16x1xf32> to vector<16x128xf32>
      %24 = arith.subf %18, %23 : vector<16x128xf32>
      %25 = arith.mulf %24, %24 : vector<16x128xf32>
      %cst_18 = arith.constant dense<0.000000e+00> : vector<16xf32>
      %26 = vector.multi_reduction <add>, %25, %cst_18 [1] : vector<16x128xf32> to vector<16xf32>
      %27 = vector.shape_cast %26 : vector<16xf32> to vector<16x1xf32>
      %cst_19 = arith.constant 1.280000e+02 : f32
      %28 = vector.broadcast %cst_19 : f32 to vector<16x1xf32>
      %29 = arith.divf %27, %28 : vector<16x1xf32>
      %30 = vector.broadcast %22 : vector<16x1xf32> to vector<16x128xf32>
      %31 = arith.subf %18, %30 : vector<16x128xf32>
      %cst_20 = arith.constant 9.99999996E-13 : f32
      %32 = vector.broadcast %cst_20 : f32 to vector<16x1xf32>
      %33 = arith.addf %29, %32 : vector<16x1xf32>
      %34 = math.rsqrt %33 : vector<16x1xf32>
      %35 = vector.broadcast %34 : vector<16x1xf32> to vector<16x128xf32>
      %36 = arith.mulf %31, %35 : vector<16x128xf32>
      %c0_21 = arith.constant 0 : index
      %c0_22 = arith.constant 0 : index
      %37 = vector.load %arg7[%c0_21, %c0_22] : memref<1x128xf32, #tpu.memory_space<vmem>>, vector<1x128xf32>
      %38 = vector.broadcast %37 : vector<1x128xf32> to vector<16x128xf32>
      %39 = arith.mulf %36, %38 : vector<16x128xf32>
      %c0_23 = arith.constant 0 : index
      %c0_24 = arith.constant 0 : index
      %40 = vector.load %arg8[%c0_23, %c0_24] : memref<1x128xf32, #tpu.memory_space<vmem>>, vector<1x128xf32>
      %41 = vector.broadcast %40 : vector<1x128xf32> to vector<16x128xf32>
      %42 = arith.addf %39, %41 : vector<16x128xf32>
      %43 = arith.truncf %42 : vector<16x128xf32> to vector<16x128xbf16>
      %c0_25 = arith.constant 0 : index
      %c0_26 = arith.constant 0 : index
      %44 = vector.load %arg9[%c0_25, %c0_26] : memref<16x128xbf16, #tpu.memory_space<vmem>>, vector<16x128xbf16>
      tpu.vector_store %arg9[%c0_25, %c0_26], %43 {strides = array<i32>} : memref<16x128xbf16, #tpu.memory_space<vmem>>, vector<16x128xbf16>,
    } else {
    }
    return
  }
  func.func @transform_0(%arg0: i32, %arg1: i32, %arg2: i32) -> (i32, i32) {
    %c0_i32 = arith.constant 0 : i32
    return %arg0, %arg2 : i32, i32
  }
  func.func @transform_1(%arg0: i32, %arg1: i32, %arg2: i32) -> (i32, i32) {
    %c0_i32 = arith.constant 0 : i32
    return %arg2, %arg1 : i32, i32
  }
  func.func @transform_2(%arg0: i32, %arg1: i32, %arg2: i32) -> (i32, i32) {
    %c0_i32 = arith.constant 0 : i32
    %c0_i32_0 = arith.constant 0 : i32
    return %c0_i32, %arg1 : i32, i32
  }
  func.func @transform_3(%arg0: i32, %arg1: i32, %arg2: i32) -> (i32, i32) {
    %c0_i32 = arith.constant 0 : i32
    %c0_i32_0 = arith.constant 0 : i32
    return %arg0, %c0_i32 : i32, i32
  }
  func.func @transform_4(%arg0: i32, %arg1: i32, %arg2: i32) -> (i32, i32) {
    %c0_i32 = arith.constant 0 : i32
    %c0_i32_0 = arith.constant 0 : i32
    %c0_i32_1 = arith.constant 0 : i32
    return %c0_i32, %c0_i32_0 : i32, i32
  }
  func.func @transform_5(%arg0: i32, %arg1: i32, %arg2: i32) -> (i32, i32) {
    %c0_i32 = arith.constant 0 : i32
    %c0_i32_0 = arith.constant 0 : i32
    %c0_i32_1 = arith.constant 0 : i32
    return %c0_i32, %c0_i32_0 : i32, i32
  }
  func.func @transform_6(%arg0: i32, %arg1: i32, %arg2: i32) -> (i32, i32) {
    %c0_i32 = arith.constant 0 : i32
    return %arg0, %arg1 : i32, i32
  }
}

module attributes {stable_mosaic.version = 11 : i64} {
  func.func @_dense_kernel(%arg0: i32, %arg1: i32, %arg2: i32, %arg3: memref<16x128xbf16, #tpu.memory_space<vmem>>, %arg4: memref<128x384xbf16, #tpu.memory_space<vmem>>, %arg5: memref<1x384xf32, #tpu.memory_space<vmem>>, %arg6: memref<16x384xbf16, #tpu.memory_space<vmem>>, %arg7: memref<16x384xf32, #tpu.memory_space<vmem>>) attributes {dimension_semantics = [#tpu.dimension_semantics<parallel>, #tpu.dimension_semantics<parallel>, #tpu.dimension_semantics<arbitrary>], iteration_bounds = array<i64: 1, 1, 1>, scalar_prefetch = 0 : i64, scratch_operands = 1 : i64, tpu.core_type = #tpu.core_type<tc>, window_params = [{transform_indices = @transform_0, window_bounds = array<i64: 16, 128>}, {transform_indices = @transform_1, window_bounds = array<i64: 128, 384>}, {transform_indices = @transform_2, window_bounds = array<i64: 1, 384>}, {transform_indices = @transform_3, window_bounds = array<i64: 16, 384>}]} {
    %c0_i32 = arith.constant 0 : i32
    %0 = arith.cmpi eq, %arg2, %c0_i32 : i32
    %1 = arith.extui %0 : i1 to i32
    %c0_i32_0 = arith.constant 0 : i32
    %2 = arith.cmpi ne, %1, %c0_i32_0 : i32
    scf.if %2 {
      %cst_10 = arith.constant 0.000000e+00 : f32
      %12 = vector.broadcast %cst_10 : f32 to vector<16x384xf32>
      %c0_11 = arith.constant 0 : index
      %c0_12 = arith.constant 0 : index
      %13 = vector.load %arg7[%c0_11, %c0_12] : memref<16x384xf32, #tpu.memory_space<vmem>>, vector<16x384xf32>
      tpu.vector_store %arg7[%c0_11, %c0_12], %12 {strides = array<i32>} : memref<16x384xf32, #tpu.memory_space<vmem>>, vector<16x384xf32>,
    } else {
    }
    %c0 = arith.constant 0 : index
    %c0_1 = arith.constant 0 : index
    %3 = vector.load %arg7[%c0, %c0_1] : memref<16x384xf32, #tpu.memory_space<vmem>>, vector<16x384xf32>
    %c0_2 = arith.constant 0 : index
    %c0_3 = arith.constant 0 : index
    %4 = vector.load %arg3[%c0_2, %c0_3] : memref<16x128xbf16, #tpu.memory_space<vmem>>, vector<16x128xbf16>
    %c0_4 = arith.constant 0 : index
    %c0_5 = arith.constant 0 : index
    %5 = vector.load %arg4[%c0_4, %c0_5] : memref<128x384xbf16, #tpu.memory_space<vmem>>, vector<128x384xbf16>
    %cst = arith.constant dense<0.000000e+00> : vector<16x384xf32>
    %6 = tpu.matmul %4, %5, %cst {dimension_numbers = #tpu.dot_dimension_numbers<[1], [0], [0], [1], [0, 0, 1, 1], [], []>} : vector<16x128xbf16>, vector<128x384xbf16>, vector<16x384xf32> -> vector<16x384xf32>
    %7 = arith.addf %3, %6 : vector<16x384xf32>
    %c0_6 = arith.constant 0 : index
    %c0_7 = arith.constant 0 : index
    %8 = vector.load %arg7[%c0_6, %c0_7] : memref<16x384xf32, #tpu.memory_space<vmem>>, vector<16x384xf32>
    tpu.vector_store %arg7[%c0_6, %c0_7], %7 {strides = array<i32>} : memref<16x384xf32, #tpu.memory_space<vmem>>, vector<16x384xf32>,
    %c0_i32_8 = arith.constant 0 : i32
    %9 = arith.cmpi eq, %arg2, %c0_i32_8 : i32
    %10 = arith.extui %9 : i1 to i32
    %c0_i32_9 = arith.constant 0 : i32
    %11 = arith.cmpi ne, %10, %c0_i32_9 : i32
    scf.if %11 {
      %c0_10 = arith.constant 0 : index
      %c0_11 = arith.constant 0 : index
      %12 = vector.load %arg7[%c0_10, %c0_11] : memref<16x384xf32, #tpu.memory_space<vmem>>, vector<16x384xf32>
      %c0_12 = arith.constant 0 : index
      %c0_13 = arith.constant 0 : index
      %13 = vector.load %arg5[%c0_12, %c0_13] : memref<1x384xf32, #tpu.memory_space<vmem>>, vector<1x384xf32>
      %14 = vector.broadcast %13 : vector<1x384xf32> to vector<16x384xf32>
      %15 = arith.addf %12, %14 : vector<16x384xf32>
      %16 = arith.truncf %15 : vector<16x384xf32> to vector<16x384xbf16>
      %c0_14 = arith.constant 0 : index
      %c0_15 = arith.constant 0 : index
      %17 = vector.load %arg6[%c0_14, %c0_15] : memref<16x384xbf16, #tpu.memory_space<vmem>>, vector<16x384xbf16>
      tpu.vector_store %arg6[%c0_14, %c0_15], %16 {strides = array<i32>} : memref<16x384xbf16, #tpu.memory_space<vmem>>, vector<16x384xbf16>,
    } else {
    }
    return
  }
  func.func @transform_0(%arg0: i32, %arg1: i32, %arg2: i32) -> (i32, i32) {
    %c0_i32 = arith.constant 0 : i32
    return %arg0, %arg2 : i32, i32
  }
  func.func @transform_1(%arg0: i32, %arg1: i32, %arg2: i32) -> (i32, i32) {
    %c0_i32 = arith.constant 0 : i32
    return %arg2, %arg1 : i32, i32
  }
  func.func @transform_2(%arg0: i32, %arg1: i32, %arg2: i32) -> (i32, i32) {
    %c0_i32 = arith.constant 0 : i32
    %c0_i32_0 = arith.constant 0 : i32
    return %c0_i32, %arg1 : i32, i32
  }
  func.func @transform_3(%arg0: i32, %arg1: i32, %arg2: i32) -> (i32, i32) {
    %c0_i32 = arith.constant 0 : i32
    return %arg0, %arg1 : i32, i32
  }
}

module attributes {stable_mosaic.version = 11 : i64} {
  func.func @_ffn_kernel(%arg0: i32, %arg1: memref<16x128xbf16, #tpu.memory_space<vmem>>, %arg2: memref<128x512xbf16, #tpu.memory_space<vmem>>, %arg3: memref<1x512xf32, #tpu.memory_space<vmem>>, %arg4: memref<512x128xbf16, #tpu.memory_space<vmem>>, %arg5: memref<1x128xf32, #tpu.memory_space<vmem>>, %arg6: memref<1x128xf32, #tpu.memory_space<vmem>>, %arg7: memref<1x128xf32, #tpu.memory_space<vmem>>, %arg8: memref<16x128xbf16, #tpu.memory_space<vmem>>) attributes {dimension_semantics = [#tpu.dimension_semantics<parallel>], iteration_bounds = array<i64: 1>, scalar_prefetch = 0 : i64, scratch_operands = 0 : i64, tpu.core_type = #tpu.core_type<tc>, window_params = [{transform_indices = @transform_0, window_bounds = array<i64: 16, 128>}, {pipeline_mode = #tpu.pipeline_mode<synchronous>, transform_indices = @transform_1, window_bounds = array<i64: 128, 512>}, {pipeline_mode = #tpu.pipeline_mode<synchronous>, transform_indices = @transform_2, window_bounds = array<i64: 1, 512>}, {pipeline_mode = #tpu.pipeline_mode<synchronous>, transform_indices = @transform_3, window_bounds = array<i64: 512, 128>}, {pipeline_mode = #tpu.pipeline_mode<synchronous>, transform_indices = @transform_4, window_bounds = array<i64: 1, 128>}, {pipeline_mode = #tpu.pipeline_mode<synchronous>, transform_indices = @transform_5, window_bounds = array<i64: 1, 128>}, {pipeline_mode = #tpu.pipeline_mode<synchronous>, transform_indices = @transform_6, window_bounds = array<i64: 1, 128>}, {transform_indices = @transform_7, window_bounds = array<i64: 16, 128>}]} {
    %c0 = arith.constant 0 : index
    %c0_0 = arith.constant 0 : index
    %0 = vector.load %arg1[%c0, %c0_0] : memref<16x128xbf16, #tpu.memory_space<vmem>>, vector<16x128xbf16>
    %c0_1 = arith.constant 0 : index
    %c0_2 = arith.constant 0 : index
    %1 = vector.load %arg2[%c0_1, %c0_2] : memref<128x512xbf16, #tpu.memory_space<vmem>>, vector<128x512xbf16>
    %cst = arith.constant dense<0.000000e+00> : vector<16x512xf32>
    %2 = tpu.matmul %0, %1, %cst {dimension_numbers = #tpu.dot_dimension_numbers<[1], [0], [0], [1], [0, 0, 1, 1], [], []>} : vector<16x128xbf16>, vector<128x512xbf16>, vector<16x512xf32> -> vector<16x512xf32>
    %c0_3 = arith.constant 0 : index
    %c0_4 = arith.constant 0 : index
    %3 = vector.load %arg3[%c0_3, %c0_4] : memref<1x512xf32, #tpu.memory_space<vmem>>, vector<1x512xf32>
    %4 = vector.broadcast %3 : vector<1x512xf32> to vector<16x512xf32>
    %5 = arith.addf %2, %4 : vector<16x512xf32>
    %cst_5 = arith.constant 5.000000e-01 : f32
    %6 = vector.broadcast %cst_5 : f32 to vector<16x512xf32>
    %7 = arith.mulf %6, %5 : vector<16x512xf32>
    %cst_6 = arith.constant 0.707106769 : f32
    %8 = vector.broadcast %cst_6 : f32 to vector<16x512xf32>
    %9 = arith.mulf %5, %8 : vector<16x512xf32>
    %10 = math.erf %9 : vector<16x512xf32>
    %cst_7 = arith.constant 1.000000e+00 : f32
    %11 = vector.broadcast %cst_7 : f32 to vector<16x512xf32>
    %12 = arith.addf %11, %10 : vector<16x512xf32>
    %13 = arith.mulf %7, %12 : vector<16x512xf32>
    %14 = arith.truncf %13 : vector<16x512xf32> to vector<16x512xbf16>
    %c0_8 = arith.constant 0 : index
    %c0_9 = arith.constant 0 : index
    %15 = vector.load %arg4[%c0_8, %c0_9] : memref<512x128xbf16, #tpu.memory_space<vmem>>, vector<512x128xbf16>
    %cst_10 = arith.constant dense<0.000000e+00> : vector<16x128xf32>
    %16 = tpu.matmul %14, %15, %cst_10 {dimension_numbers = #tpu.dot_dimension_numbers<[1], [0], [0], [1], [0, 0, 1, 1], [], []>} : vector<16x512xbf16>, vector<512x128xbf16>, vector<16x128xf32> -> vector<16x128xf32>
    %c0_11 = arith.constant 0 : index
    %c0_12 = arith.constant 0 : index
    %17 = vector.load %arg5[%c0_11, %c0_12] : memref<1x128xf32, #tpu.memory_space<vmem>>, vector<1x128xf32>
    %18 = vector.broadcast %17 : vector<1x128xf32> to vector<16x128xf32>
    %19 = arith.addf %16, %18 : vector<16x128xf32>
    %20 = arith.extf %0 : vector<16x128xbf16> to vector<16x128xf32>
    %21 = arith.addf %19, %20 : vector<16x128xf32>
    %cst_13 = arith.constant dense<0.000000e+00> : vector<16xf32>
    %22 = vector.multi_reduction <add>, %21, %cst_13 [1] : vector<16x128xf32> to vector<16xf32>
    %23 = vector.shape_cast %22 : vector<16xf32> to vector<16x1xf32>
    %cst_14 = arith.constant 1.280000e+02 : f32
    %24 = vector.broadcast %cst_14 : f32 to vector<16x1xf32>
    %25 = arith.divf %23, %24 : vector<16x1xf32>
    %26 = vector.broadcast %25 : vector<16x1xf32> to vector<16x128xf32>
    %27 = arith.subf %21, %26 : vector<16x128xf32>
    %28 = arith.mulf %27, %27 : vector<16x128xf32>
    %cst_15 = arith.constant dense<0.000000e+00> : vector<16xf32>
    %29 = vector.multi_reduction <add>, %28, %cst_15 [1] : vector<16x128xf32> to vector<16xf32>
    %30 = vector.shape_cast %29 : vector<16xf32> to vector<16x1xf32>
    %cst_16 = arith.constant 1.280000e+02 : f32
    %31 = vector.broadcast %cst_16 : f32 to vector<16x1xf32>
    %32 = arith.divf %30, %31 : vector<16x1xf32>
    %33 = vector.broadcast %25 : vector<16x1xf32> to vector<16x128xf32>
    %34 = arith.subf %21, %33 : vector<16x128xf32>
    %cst_17 = arith.constant 9.99999996E-13 : f32
    %35 = vector.broadcast %cst_17 : f32 to vector<16x1xf32>
    %36 = arith.addf %32, %35 : vector<16x1xf32>
    %37 = math.rsqrt %36 : vector<16x1xf32>
    %38 = vector.broadcast %37 : vector<16x1xf32> to vector<16x128xf32>
    %39 = arith.mulf %34, %38 : vector<16x128xf32>
    %c0_18 = arith.constant 0 : index
    %c0_19 = arith.constant 0 : index
    %40 = vector.load %arg6[%c0_18, %c0_19] : memref<1x128xf32, #tpu.memory_space<vmem>>, vector<1x128xf32>
    %41 = vector.broadcast %40 : vector<1x128xf32> to vector<16x128xf32>
    %42 = arith.mulf %39, %41 : vector<16x128xf32>
    %c0_20 = arith.constant 0 : index
    %c0_21 = arith.constant 0 : index
    %43 = vector.load %arg7[%c0_20, %c0_21] : memref<1x128xf32, #tpu.memory_space<vmem>>, vector<1x128xf32>
    %44 = vector.broadcast %43 : vector<1x128xf32> to vector<16x128xf32>
    %45 = arith.addf %42, %44 : vector<16x128xf32>
    %46 = arith.truncf %45 : vector<16x128xf32> to vector<16x128xbf16>
    %c0_22 = arith.constant 0 : index
    %c0_23 = arith.constant 0 : index
    %47 = vector.load %arg8[%c0_22, %c0_23] : memref<16x128xbf16, #tpu.memory_space<vmem>>, vector<16x128xbf16>
    tpu.vector_store %arg8[%c0_22, %c0_23], %46 {strides = array<i32>} : memref<16x128xbf16, #tpu.memory_space<vmem>>, vector<16x128xbf16>,
    return
  }
  func.func @transform_0(%arg0: i32) -> (i32, i32) {
    %c0_i32 = arith.constant 0 : i32
    %c0_i32_0 = arith.constant 0 : i32
    return %arg0, %c0_i32 : i32, i32
  }
  func.func @transform_1(%arg0: i32) -> (i32, i32) {
    %c0_i32 = arith.constant 0 : i32
    %c0_i32_0 = arith.constant 0 : i32
    %c0_i32_1 = arith.constant 0 : i32
    return %c0_i32, %c0_i32_0 : i32, i32
  }
  func.func @transform_2(%arg0: i32) -> (i32, i32) {
    %c0_i32 = arith.constant 0 : i32
    %c0_i32_0 = arith.constant 0 : i32
    %c0_i32_1 = arith.constant 0 : i32
    return %c0_i32, %c0_i32_0 : i32, i32
  }
  func.func @transform_3(%arg0: i32) -> (i32, i32) {
    %c0_i32 = arith.constant 0 : i32
    %c0_i32_0 = arith.constant 0 : i32
    %c0_i32_1 = arith.constant 0 : i32
    return %c0_i32, %c0_i32_0 : i32, i32
  }
  func.func @transform_4(%arg0: i32) -> (i32, i32) {
    %c0_i32 = arith.constant 0 : i32
    %c0_i32_0 = arith.constant 0 : i32
    %c0_i32_1 = arith.constant 0 : i32
    return %c0_i32, %c0_i32_0 : i32, i32
  }
  func.func @transform_5(%arg0: i32) -> (i32, i32) {
    %c0_i32 = arith.constant 0 : i32
    %c0_i32_0 = arith.constant 0 : i32
    %c0_i32_1 = arith.constant 0 : i32
    return %c0_i32, %c0_i32_0 : i32, i32
  }
  func.func @transform_6(%arg0: i32) -> (i32, i32) {
    %c0_i32 = arith.constant 0 : i32
    %c0_i32_0 = arith.constant 0 : i32
    %c0_i32_1 = arith.constant 0 : i32
    return %c0_i32, %c0_i32_0 : i32, i32
  }
  func.func @transform_7(%arg0: i32) -> (i32, i32) {
    %c0_i32 = arith.constant 0 : i32
    %c0_i32_0 = arith.constant 0 : i32
    return %arg0, %c0_i32 : i32, i32
  }
}

module attributes {stable_mosaic.version = 11 : i64} {
  func.func @_ffn_kernel(%arg0: i32, %arg1: memref<16x128xbf16, #tpu.memory_space<vmem>>, %arg2: memref<128x512xbf16, #tpu.memory_space<vmem>>, %arg3: memref<1x512xf32, #tpu.memory_space<vmem>>, %arg4: memref<512x128xbf16, #tpu.memory_space<vmem>>, %arg5: memref<1x128xf32, #tpu.memory_space<vmem>>, %arg6: memref<1x128xf32, #tpu.memory_space<vmem>>, %arg7: memref<1x128xf32, #tpu.memory_space<vmem>>, %arg8: memref<16x128xbf16, #tpu.memory_space<vmem>>) attributes {dimension_semantics = [#tpu.dimension_semantics<parallel>], iteration_bounds = array<i64: 1>, scalar_prefetch = 0 : i64, scratch_operands = 0 : i64, tpu.core_type = #tpu.core_type<tc>, window_params = [{transform_indices = @transform_0, window_bounds = array<i64: 16, 128>}, {pipeline_mode = #tpu.pipeline_mode<synchronous>, transform_indices = @transform_1, window_bounds = array<i64: 128, 512>}, {pipeline_mode = #tpu.pipeline_mode<synchronous>, transform_indices = @transform_2, window_bounds = array<i64: 1, 512>}, {pipeline_mode = #tpu.pipeline_mode<synchronous>, transform_indices = @transform_3, window_bounds = array<i64: 512, 128>}, {pipeline_mode = #tpu.pipeline_mode<synchronous>, transform_indices = @transform_4, window_bounds = array<i64: 1, 128>}, {pipeline_mode = #tpu.pipeline_mode<synchronous>, transform_indices = @transform_5, window_bounds = array<i64: 1, 128>}, {pipeline_mode = #tpu.pipeline_mode<synchronous>, transform_indices = @transform_6, window_bounds = array<i64: 1, 128>}, {transform_indices = @transform_7, window_bounds = array<i64: 16, 128>}]} {
    %c0 = arith.constant 0 : index
    %c0_0 = arith.constant 0 : index
    %0 = vector.load %arg1[%c0, %c0_0] : memref<16x128xbf16, #tpu.memory_space<vmem>>, vector<16x128xbf16>
    %c0_1 = arith.constant 0 : index
    %c0_2 = arith.constant 0 : index
    %1 = vector.load %arg2[%c0_1, %c0_2] : memref<128x512xbf16, #tpu.memory_space<vmem>>, vector<128x512xbf16>
    %cst = arith.constant dense<0.000000e+00> : vector<16x512xf32>
    %2 = tpu.matmul %0, %1, %cst {dimension_numbers = #tpu.dot_dimension_numbers<[1], [0], [0], [1], [0, 0, 1, 1], [], []>} : vector<16x128xbf16>, vector<128x512xbf16>, vector<16x512xf32> -> vector<16x512xf32>
    %c0_3 = arith.constant 0 : index
    %c0_4 = arith.constant 0 : index
    %3 = vector.load %arg3[%c0_3, %c0_4] : memref<1x512xf32, #tpu.memory_space<vmem>>, vector<1x512xf32>
    %4 = vector.broadcast %3 : vector<1x512xf32> to vector<16x512xf32>
    %5 = arith.addf %2, %4 : vector<16x512xf32>
    %cst_5 = arith.constant 5.000000e-01 : f32
    %6 = vector.broadcast %cst_5 : f32 to vector<16x512xf32>
    %7 = arith.mulf %6, %5 : vector<16x512xf32>
    %cst_6 = arith.constant 0.707106769 : f32
    %8 = vector.broadcast %cst_6 : f32 to vector<16x512xf32>
    %9 = arith.mulf %5, %8 : vector<16x512xf32>
    %10 = math.erf %9 : vector<16x512xf32>
    %cst_7 = arith.constant 1.000000e+00 : f32
    %11 = vector.broadcast %cst_7 : f32 to vector<16x512xf32>
    %12 = arith.addf %11, %10 : vector<16x512xf32>
    %13 = arith.mulf %7, %12 : vector<16x512xf32>
    %14 = arith.truncf %13 : vector<16x512xf32> to vector<16x512xbf16>
    %c0_8 = arith.constant 0 : index
    %c0_9 = arith.constant 0 : index
    %15 = vector.load %arg4[%c0_8, %c0_9] : memref<512x128xbf16, #tpu.memory_space<vmem>>, vector<512x128xbf16>
    %cst_10 = arith.constant dense<0.000000e+00> : vector<16x128xf32>
    %16 = tpu.matmul %14, %15, %cst_10 {dimension_numbers = #tpu.dot_dimension_numbers<[1], [0], [0], [1], [0, 0, 1, 1], [], []>} : vector<16x512xbf16>, vector<512x128xbf16>, vector<16x128xf32> -> vector<16x128xf32>
    %c0_11 = arith.constant 0 : index
    %c0_12 = arith.constant 0 : index
    %17 = vector.load %arg5[%c0_11, %c0_12] : memref<1x128xf32, #tpu.memory_space<vmem>>, vector<1x128xf32>
    %18 = vector.broadcast %17 : vector<1x128xf32> to vector<16x128xf32>
    %19 = arith.addf %16, %18 : vector<16x128xf32>
    %20 = arith.extf %0 : vector<16x128xbf16> to vector<16x128xf32>
    %21 = arith.addf %19, %20 : vector<16x128xf32>
    %cst_13 = arith.constant dense<0.000000e+00> : vector<16xf32>
    %22 = vector.multi_reduction <add>, %21, %cst_13 [1] : vector<16x128xf32> to vector<16xf32>
    %23 = vector.shape_cast %22 : vector<16xf32> to vector<16x1xf32>
    %cst_14 = arith.constant 1.280000e+02 : f32
    %24 = vector.broadcast %cst_14 : f32 to vector<16x1xf32>
    %25 = arith.divf %23, %24 : vector<16x1xf32>
    %26 = vector.broadcast %25 : vector<16x1xf32> to vector<16x128xf32>
    %27 = arith.subf %21, %26 : vector<16x128xf32>
    %28 = arith.mulf %27, %27 : vector<16x128xf32>
    %cst_15 = arith.constant dense<0.000000e+00> : vector<16xf32>
    %29 = vector.multi_reduction <add>, %28, %cst_15 [1] : vector<16x128xf32> to vector<16xf32>
    %30 = vector.shape_cast %29 : vector<16xf32> to vector<16x1xf32>
    %cst_16 = arith.constant 1.280000e+02 : f32
    %31 = vector.broadcast %cst_16 : f32 to vector<16x1xf32>
    %32 = arith.divf %30, %31 : vector<16x1xf32>
    %33 = vector.broadcast %25 : vector<16x1xf32> to vector<16x128xf32>
    %34 = arith.subf %21, %33 : vector<16x128xf32>
    %cst_17 = arith.constant 9.99999996E-13 : f32
    %35 = vector.broadcast %cst_17 : f32 to vector<16x1xf32>
    %36 = arith.addf %32, %35 : vector<16x1xf32>
    %37 = math.rsqrt %36 : vector<16x1xf32>
    %38 = vector.broadcast %37 : vector<16x1xf32> to vector<16x128xf32>
    %39 = arith.mulf %34, %38 : vector<16x128xf32>
    %c0_18 = arith.constant 0 : index
    %c0_19 = arith.constant 0 : index
    %40 = vector.load %arg6[%c0_18, %c0_19] : memref<1x128xf32, #tpu.memory_space<vmem>>, vector<1x128xf32>
    %41 = vector.broadcast %40 : vector<1x128xf32> to vector<16x128xf32>
    %42 = arith.mulf %39, %41 : vector<16x128xf32>
    %c0_20 = arith.constant 0 : index
    %c0_21 = arith.constant 0 : index
    %43 = vector.load %arg7[%c0_20, %c0_21] : memref<1x128xf32, #tpu.memory_space<vmem>>, vector<1x128xf32>
    %44 = vector.broadcast %43 : vector<1x128xf32> to vector<16x128xf32>
    %45 = arith.addf %42, %44 : vector<16x128xf32>
    %46 = arith.truncf %45 : vector<16x128xf32> to vector<16x128xbf16>
    %c0_22 = arith.constant 0 : index
    %c0_23 = arith.constant 0 : index
    %47 = vector.load %arg8[%c0_22, %c0_23] : memref<16x128xbf16, #tpu.memory_space<vmem>>, vector<16x128xbf16>
    tpu.vector_store %arg8[%c0_22, %c0_23], %46 {strides = array<i32>} : memref<16x128xbf16, #tpu.memory_space<vmem>>, vector<16x128xbf16>,
    return
  }
  func.func @transform_0(%arg0: i32) -> (i32, i32) {
    %c0_i32 = arith.constant 0 : i32
    %c0_i32_0 = arith.constant 0 : i32
    return %arg0, %c0_i32 : i32, i32
  }
  func.func @transform_1(%arg0: i32) -> (i32, i32) {
    %c0_i32 = arith.constant 0 : i32
    %c0_i32_0 = arith.constant 0 : i32
    %c0_i32_1 = arith.constant 0 : i32
    return %c0_i32, %c0_i32_0 : i32, i32
  }
  func.func @transform_2(%arg0: i32) -> (i32, i32) {
    %c0_i32 = arith.constant 0 : i32
    %c0_i32_0 = arith.constant 0 : i32
    %c0_i32_1 = arith.constant 0 : i32
    return %c0_i32, %c0_i32_0 : i32, i32
  }
  func.func @transform_3(%arg0: i32) -> (i32, i32) {
    %c0_i32 = arith.constant 0 : i32
    %c0_i32_0 = arith.constant 0 : i32
    %c0_i32_1 = arith.constant 0 : i32
    return %c0_i32, %c0_i32_0 : i32, i32
  }
  func.func @transform_4(%arg0: i32) -> (i32, i32) {
    %c0_i32 = arith.constant 0 : i32
    %c0_i32_0 = arith.constant 0 : i32
    %c0_i32_1 = arith.constant 0 : i32
    return %c0_i32, %c0_i32_0 : i32, i32
  }
  func.func @transform_5(%arg0: i32) -> (i32, i32) {
    %c0_i32 = arith.constant 0 : i32
    %c0_i32_0 = arith.constant 0 : i32
    %c0_i32_1 = arith.constant 0 : i32
    return %c0_i32, %c0_i32_0 : i32, i32
  }
  func.func @transform_6(%arg0: i32) -> (i32, i32) {
    %c0_i32 = arith.constant 0 : i32
    %c0_i32_0 = arith.constant 0 : i32
    %c0_i32_1 = arith.constant 0 : i32
    return %c0_i32, %c0_i32_0 : i32, i32
  }
  func.func @transform_7(%arg0: i32) -> (i32, i32) {
    %c0_i32 = arith.constant 0 : i32
    %c0_i32_0 = arith.constant 0 : i32
    return %arg0, %c0_i32 : i32, i32
  }
}

module attributes {stable_mosaic.version = 11 : i64} {
  func.func @_dense_ln_kernel(%arg0: i32, %arg1: i32, %arg2: i32, %arg3: memref<16x128xbf16, #tpu.memory_space<vmem>>, %arg4: memref<128x128xbf16, #tpu.memory_space<vmem>>, %arg5: memref<1x128xf32, #tpu.memory_space<vmem>>, %arg6: memref<1x128xf32, #tpu.memory_space<vmem>>, %arg7: memref<1x128xf32, #tpu.memory_space<vmem>>, %arg8: memref<16x128xbf16, #tpu.memory_space<vmem>>, %arg9: memref<16x128xf32, #tpu.memory_space<vmem>>) attributes {dimension_semantics = [#tpu.dimension_semantics<parallel>, #tpu.dimension_semantics<parallel>, #tpu.dimension_semantics<arbitrary>], iteration_bounds = array<i64: 1, 1, 1>, scalar_prefetch = 0 : i64, scratch_operands = 1 : i64, tpu.core_type = #tpu.core_type<tc>, window_params = [{transform_indices = @transform_0, window_bounds = array<i64: 16, 128>}, {transform_indices = @transform_1, window_bounds = array<i64: 128, 128>}, {transform_indices = @transform_2, window_bounds = array<i64: 1, 128>}, {pipeline_mode = #tpu.pipeline_mode<synchronous>, transform_indices = @transform_3, window_bounds = array<i64: 1, 128>}, {pipeline_mode = #tpu.pipeline_mode<synchronous>, transform_indices = @transform_4, window_bounds = array<i64: 1, 128>}, {transform_indices = @transform_5, window_bounds = array<i64: 16, 128>}]} {
    %c0_i32 = arith.constant 0 : i32
    %0 = arith.cmpi eq, %arg2, %c0_i32 : i32
    %1 = arith.extui %0 : i1 to i32
    %c0_i32_0 = arith.constant 0 : i32
    %2 = arith.cmpi ne, %1, %c0_i32_0 : i32
    scf.if %2 {
      %cst_10 = arith.constant 0.000000e+00 : f32
      %12 = vector.broadcast %cst_10 : f32 to vector<16x128xf32>
      %c0_11 = arith.constant 0 : index
      %c0_12 = arith.constant 0 : index
      %13 = vector.load %arg9[%c0_11, %c0_12] : memref<16x128xf32, #tpu.memory_space<vmem>>, vector<16x128xf32>
      tpu.vector_store %arg9[%c0_11, %c0_12], %12 {strides = array<i32>} : memref<16x128xf32, #tpu.memory_space<vmem>>, vector<16x128xf32>,
    } else {
    }
    %c0 = arith.constant 0 : index
    %c0_1 = arith.constant 0 : index
    %3 = vector.load %arg9[%c0, %c0_1] : memref<16x128xf32, #tpu.memory_space<vmem>>, vector<16x128xf32>
    %c0_2 = arith.constant 0 : index
    %c0_3 = arith.constant 0 : index
    %4 = vector.load %arg3[%c0_2, %c0_3] : memref<16x128xbf16, #tpu.memory_space<vmem>>, vector<16x128xbf16>
    %c0_4 = arith.constant 0 : index
    %c0_5 = arith.constant 0 : index
    %5 = vector.load %arg4[%c0_4, %c0_5] : memref<128x128xbf16, #tpu.memory_space<vmem>>, vector<128x128xbf16>
    %cst = arith.constant dense<0.000000e+00> : vector<16x128xf32>
    %6 = tpu.matmul %4, %5, %cst {dimension_numbers = #tpu.dot_dimension_numbers<[1], [0], [0], [1], [0, 0, 1, 1], [], []>} : vector<16x128xbf16>, vector<128x128xbf16>, vector<16x128xf32> -> vector<16x128xf32>
    %7 = arith.addf %3, %6 : vector<16x128xf32>
    %c0_6 = arith.constant 0 : index
    %c0_7 = arith.constant 0 : index
    %8 = vector.load %arg9[%c0_6, %c0_7] : memref<16x128xf32, #tpu.memory_space<vmem>>, vector<16x128xf32>
    tpu.vector_store %arg9[%c0_6, %c0_7], %7 {strides = array<i32>} : memref<16x128xf32, #tpu.memory_space<vmem>>, vector<16x128xf32>,
    %c0_i32_8 = arith.constant 0 : i32
    %9 = arith.cmpi eq, %arg2, %c0_i32_8 : i32
    %10 = arith.extui %9 : i1 to i32
    %c0_i32_9 = arith.constant 0 : i32
    %11 = arith.cmpi ne, %10, %c0_i32_9 : i32
    scf.if %11 {
      %c0_10 = arith.constant 0 : index
      %c0_11 = arith.constant 0 : index
      %12 = vector.load %arg9[%c0_10, %c0_11] : memref<16x128xf32, #tpu.memory_space<vmem>>, vector<16x128xf32>
      %c0_12 = arith.constant 0 : index
      %c0_13 = arith.constant 0 : index
      %13 = vector.load %arg5[%c0_12, %c0_13] : memref<1x128xf32, #tpu.memory_space<vmem>>, vector<1x128xf32>
      %14 = vector.broadcast %13 : vector<1x128xf32> to vector<16x128xf32>
      %15 = arith.addf %12, %14 : vector<16x128xf32>
      %cst_14 = arith.constant 5.000000e-01 : f32
      %16 = vector.broadcast %cst_14 : f32 to vector<16x128xf32>
      %17 = arith.mulf %16, %15 : vector<16x128xf32>
      %cst_15 = arith.constant 0.707106769 : f32
      %18 = vector.broadcast %cst_15 : f32 to vector<16x128xf32>
      %19 = arith.mulf %15, %18 : vector<16x128xf32>
      %20 = math.erf %19 : vector<16x128xf32>
      %cst_16 = arith.constant 1.000000e+00 : f32
      %21 = vector.broadcast %cst_16 : f32 to vector<16x128xf32>
      %22 = arith.addf %21, %20 : vector<16x128xf32>
      %23 = arith.mulf %17, %22 : vector<16x128xf32>
      %cst_17 = arith.constant dense<0.000000e+00> : vector<16xf32>
      %24 = vector.multi_reduction <add>, %23, %cst_17 [1] : vector<16x128xf32> to vector<16xf32>
      %25 = vector.shape_cast %24 : vector<16xf32> to vector<16x1xf32>
      %cst_18 = arith.constant 1.280000e+02 : f32
      %26 = vector.broadcast %cst_18 : f32 to vector<16x1xf32>
      %27 = arith.divf %25, %26 : vector<16x1xf32>
      %28 = vector.broadcast %27 : vector<16x1xf32> to vector<16x128xf32>
      %29 = arith.subf %23, %28 : vector<16x128xf32>
      %30 = arith.mulf %29, %29 : vector<16x128xf32>
      %cst_19 = arith.constant dense<0.000000e+00> : vector<16xf32>
      %31 = vector.multi_reduction <add>, %30, %cst_19 [1] : vector<16x128xf32> to vector<16xf32>
      %32 = vector.shape_cast %31 : vector<16xf32> to vector<16x1xf32>
      %cst_20 = arith.constant 1.280000e+02 : f32
      %33 = vector.broadcast %cst_20 : f32 to vector<16x1xf32>
      %34 = arith.divf %32, %33 : vector<16x1xf32>
      %35 = vector.broadcast %27 : vector<16x1xf32> to vector<16x128xf32>
      %36 = arith.subf %23, %35 : vector<16x128xf32>
      %cst_21 = arith.constant 9.99999996E-13 : f32
      %37 = vector.broadcast %cst_21 : f32 to vector<16x1xf32>
      %38 = arith.addf %34, %37 : vector<16x1xf32>
      %39 = math.rsqrt %38 : vector<16x1xf32>
      %40 = vector.broadcast %39 : vector<16x1xf32> to vector<16x128xf32>
      %41 = arith.mulf %36, %40 : vector<16x128xf32>
      %c0_22 = arith.constant 0 : index
      %c0_23 = arith.constant 0 : index
      %42 = vector.load %arg6[%c0_22, %c0_23] : memref<1x128xf32, #tpu.memory_space<vmem>>, vector<1x128xf32>
      %43 = vector.broadcast %42 : vector<1x128xf32> to vector<16x128xf32>
      %44 = arith.mulf %41, %43 : vector<16x128xf32>
      %c0_24 = arith.constant 0 : index
      %c0_25 = arith.constant 0 : index
      %45 = vector.load %arg7[%c0_24, %c0_25] : memref<1x128xf32, #tpu.memory_space<vmem>>, vector<1x128xf32>
      %46 = vector.broadcast %45 : vector<1x128xf32> to vector<16x128xf32>
      %47 = arith.addf %44, %46 : vector<16x128xf32>
      %48 = arith.truncf %47 : vector<16x128xf32> to vector<16x128xbf16>
      %c0_26 = arith.constant 0 : index
      %c0_27 = arith.constant 0 : index
      %49 = vector.load %arg8[%c0_26, %c0_27] : memref<16x128xbf16, #tpu.memory_space<vmem>>, vector<16x128xbf16>
      tpu.vector_store %arg8[%c0_26, %c0_27], %48 {strides = array<i32>} : memref<16x128xbf16, #tpu.memory_space<vmem>>, vector<16x128xbf16>,
    } else {
    }
    return
  }
  func.func @transform_0(%arg0: i32, %arg1: i32, %arg2: i32) -> (i32, i32) {
    %c0_i32 = arith.constant 0 : i32
    return %arg0, %arg2 : i32, i32
  }
  func.func @transform_1(%arg0: i32, %arg1: i32, %arg2: i32) -> (i32, i32) {
    %c0_i32 = arith.constant 0 : i32
    return %arg2, %arg1 : i32, i32
  }
  func.func @transform_2(%arg0: i32, %arg1: i32, %arg2: i32) -> (i32, i32) {
    %c0_i32 = arith.constant 0 : i32
    %c0_i32_0 = arith.constant 0 : i32
    return %c0_i32, %arg1 : i32, i32
  }
  func.func @transform_3(%arg0: i32, %arg1: i32, %arg2: i32) -> (i32, i32) {
    %c0_i32 = arith.constant 0 : i32
    %c0_i32_0 = arith.constant 0 : i32
    %c0_i32_1 = arith.constant 0 : i32
    return %c0_i32, %c0_i32_0 : i32, i32
  }
  func.func @transform_4(%arg0: i32, %arg1: i32, %arg2: i32) -> (i32, i32) {
    %c0_i32 = arith.constant 0 : i32
    %c0_i32_0 = arith.constant 0 : i32
    %c0_i32_1 = arith.constant 0 : i32
    return %c0_i32, %c0_i32_0 : i32, i32
  }
  func.func @transform_5(%arg0: i32, %arg1: i32, %arg2: i32) -> (i32, i32) {
    %c0_i32 = arith.constant 0 : i32
    return %arg0, %arg1 : i32, i32
  }
}

module attributes {stable_mosaic.version = 11 : i64} {
  func.func @_dense_kernel(%arg0: i32, %arg1: i32, %arg2: i32, %arg3: memref<16x128xbf16, #tpu.memory_space<vmem>>, %arg4: memref<128x512xbf16, #tpu.memory_space<vmem>>, %arg5: memref<1x512xf32, #tpu.memory_space<vmem>>, %arg6: memref<16x512xf32, #tpu.memory_space<vmem>>, %arg7: memref<16x512xf32, #tpu.memory_space<vmem>>) attributes {dimension_semantics = [#tpu.dimension_semantics<parallel>, #tpu.dimension_semantics<parallel>, #tpu.dimension_semantics<arbitrary>], iteration_bounds = array<i64: 1, 1, 1>, scalar_prefetch = 0 : i64, scratch_operands = 1 : i64, tpu.core_type = #tpu.core_type<tc>, window_params = [{transform_indices = @transform_0, window_bounds = array<i64: 16, 128>}, {transform_indices = @transform_1, window_bounds = array<i64: 128, 512>}, {transform_indices = @transform_2, window_bounds = array<i64: 1, 512>}, {transform_indices = @transform_3, window_bounds = array<i64: 16, 512>}]} {
    %c0_i32 = arith.constant 0 : i32
    %0 = arith.cmpi eq, %arg2, %c0_i32 : i32
    %1 = arith.extui %0 : i1 to i32
    %c0_i32_0 = arith.constant 0 : i32
    %2 = arith.cmpi ne, %1, %c0_i32_0 : i32
    scf.if %2 {
      %cst_10 = arith.constant 0.000000e+00 : f32
      %12 = vector.broadcast %cst_10 : f32 to vector<16x512xf32>
      %c0_11 = arith.constant 0 : index
      %c0_12 = arith.constant 0 : index
      %13 = vector.load %arg7[%c0_11, %c0_12] : memref<16x512xf32, #tpu.memory_space<vmem>>, vector<16x512xf32>
      tpu.vector_store %arg7[%c0_11, %c0_12], %12 {strides = array<i32>} : memref<16x512xf32, #tpu.memory_space<vmem>>, vector<16x512xf32>,
    } else {
    }
    %c0 = arith.constant 0 : index
    %c0_1 = arith.constant 0 : index
    %3 = vector.load %arg7[%c0, %c0_1] : memref<16x512xf32, #tpu.memory_space<vmem>>, vector<16x512xf32>
    %c0_2 = arith.constant 0 : index
    %c0_3 = arith.constant 0 : index
    %4 = vector.load %arg3[%c0_2, %c0_3] : memref<16x128xbf16, #tpu.memory_space<vmem>>, vector<16x128xbf16>
    %c0_4 = arith.constant 0 : index
    %c0_5 = arith.constant 0 : index
    %5 = vector.load %arg4[%c0_4, %c0_5] : memref<128x512xbf16, #tpu.memory_space<vmem>>, vector<128x512xbf16>
    %cst = arith.constant dense<0.000000e+00> : vector<16x512xf32>
    %6 = tpu.matmul %4, %5, %cst {dimension_numbers = #tpu.dot_dimension_numbers<[1], [0], [0], [1], [0, 0, 1, 1], [], []>} : vector<16x128xbf16>, vector<128x512xbf16>, vector<16x512xf32> -> vector<16x512xf32>
    %7 = arith.addf %3, %6 : vector<16x512xf32>
    %c0_6 = arith.constant 0 : index
    %c0_7 = arith.constant 0 : index
    %8 = vector.load %arg7[%c0_6, %c0_7] : memref<16x512xf32, #tpu.memory_space<vmem>>, vector<16x512xf32>
    tpu.vector_store %arg7[%c0_6, %c0_7], %7 {strides = array<i32>} : memref<16x512xf32, #tpu.memory_space<vmem>>, vector<16x512xf32>,
    %c0_i32_8 = arith.constant 0 : i32
    %9 = arith.cmpi eq, %arg2, %c0_i32_8 : i32
    %10 = arith.extui %9 : i1 to i32
    %c0_i32_9 = arith.constant 0 : i32
    %11 = arith.cmpi ne, %10, %c0_i32_9 : i32
    scf.if %11 {
      %c0_10 = arith.constant 0 : index
      %c0_11 = arith.constant 0 : index
      %12 = vector.load %arg7[%c0_10, %c0_11] : memref<16x512xf32, #tpu.memory_space<vmem>>, vector<16x512xf32>
      %c0_12 = arith.constant 0 : index
      %c0_13 = arith.constant 0 : index
      %13 = vector.load %arg5[%c0_12, %c0_13] : memref<1x512xf32, #tpu.memory_space<vmem>>, vector<1x512xf32>
      %14 = vector.broadcast %13 : vector<1x512xf32> to vector<16x512xf32>
      %15 = arith.addf %12, %14 : vector<16x512xf32>
      %c0_14 = arith.constant 0 : index
      %c0_15 = arith.constant 0 : index
      %16 = vector.load %arg6[%c0_14, %c0_15] : memref<16x512xf32, #tpu.memory_space<vmem>>, vector<16x512xf32>
      tpu.vector_store %arg6[%c0_14, %c0_15], %15 {strides = array<i32>} : memref<16x512xf32, #tpu.memory_space<vmem>>, vector<16x512xf32>,
    } else {
    }
    return
  }
  func.func @transform_0(%arg0: i32, %arg1: i32, %arg2: i32) -> (i32, i32) {
    %c0_i32 = arith.constant 0 : i32
    return %arg0, %arg2 : i32, i32
  }
  func.func @transform_1(%arg0: i32, %arg1: i32, %arg2: i32) -> (i32, i32) {
    %c0_i32 = arith.constant 0 : i32
    return %arg2, %arg1 : i32, i32
  }
  func.func @transform_2(%arg0: i32, %arg1: i32, %arg2: i32) -> (i32, i32) {
    %c0_i32 = arith.constant 0 : i32
    %c0_i32_0 = arith.constant 0 : i32
    return %c0_i32, %arg1 : i32, i32
  }
  func.func @transform_3(%arg0: i32, %arg1: i32, %arg2: i32) -> (i32, i32) {
    %c0_i32 = arith.constant 0 : i32
    return %arg0, %arg1 : i32, i32
  }
}

</mosaic_0001>

<llo_original>
// kernel: bert_mlm_forward.11
$region0: #{bert_mlm_forward.11}
  #allocation0 [shape = 'u32[]', space=smem, size = 0x4, offset = 0x4, fixed_abs, tag = 'smem constant byte address 0x4 - core index']
  #allocation1 [shape = 'u32[144,128]{1,0:T(1,128)}', space=vmem, size = 0x12000, scoped, tag = 'internal scratch']
  %s0 = inlined_call_operand.vmem [shape: f32[16,128], index: 0, kind: input, shape index: {}]
  %s1 = inlined_call_operand.vmem [shape: f32[8,128], index: 1, kind: input, shape index: {}]
  %s2 = inlined_call_operand.hbm [shape: f32[1,128], index: 2, kind: input, shape index: {}]
  %s3 = inlined_call_operand.hbm [shape: f32[1,128], index: 3, kind: input, shape index: {}]
  %s4 = inlined_call_operand.vmem [shape: bf16[16,128], index: 4, kind: output, shape index: {}]
  %s5 = sld [smem:[#allocation0]]
  $region57: #{bert_mlm_forward.11} parent=0
    _
  %s7 = ssub.s32 1, %s5
  %s8 = scalar_select 0, %s7, %s5
  $region1: #{bert_mlm_forward.11} parent=0
    #allocation2 [shape = 'u8[512]{0}', space=vmem, size = 0x400, scoped, tag = 'input window, operand 2, single buffered']
    #allocation3 [shape = 's32[2]{0}', space=sflag, size = 0x8, scoped, tag = 'scoped memory for bert_mlm_forward.11']
    #allocation4 [shape = 'u8[512]{0}', space=vmem, size = 0x400, scoped, tag = 'input window, operand 3, single buffered']
    #allocation5 [shape = 's32[1]{0}', space=sflag, size = 0x4, scoped, tag = 'scoped memory for bert_mlm_forward.11']
    %9 = vsyncpa [#allocation3], 0
    %10 = vsyncpa [#allocation5], 0
    loop: start=0, step=1, limit=4
    $region2: #{bert_mlm_forward.11} parent=1 // loop_pre_header
      _
    $region3: #{bert_mlm_forward.11} parent=1 // loop_header
      %s12 = sphi 0, %s16
      %p13 = scmp.ge.s32.totalorder %s12, 4
      %s22 = sphi 0, %s24
      %s25 = sphi 0, %s22
      %s26 = sphi 0, %s25
      %s42 = sphi 0, %s26
      %s46 = sphi 0, %s46
      %s48 = sphi 0, %s46
      %s49 = sphi 0, %s48
      %s63 = sphi 0, %s49
      %s67 = sphi 0, %s67
      %s69 = sphi 0, %s67
      %s70 = sphi 0, %s69
      %s84 = sphi 0, %s70
      %s88 = sphi 0, %s88
      %s90 = sphi 0, %s88
      %s91 = sphi 0, %s90
      %s105 = sphi 0, %s91
      %s111 = sphi 0, %s113
      %s114 = sphi 0, %s111
      %s115 = sphi 0, %s114
      %s131 = sphi 0, %s115
    $region4: #{bert_mlm_forward.11} parent=1 // loop_header_branch
      %15 = sbr.rel (%p13) target = $region8
    $region5: #{bert_mlm_forward.11} parent=1 // loop_body
      %s17 = ssub.s32 %s12, 1
      %s18 = ssub.s32 %s12, 2
      %s19 = sadd.s32 %s12, 1
      %s20 = ssub.s32 %s12, %s19
      %p21 = scmp.eq.s32.totalorder %s20, 0
      %s23 = sadd.s32 %s22, 1
      %s24 = scalar_select %p21, %s22, %s23
      %p27 = pneg %p21
      %p28 = scmp.eq.s32.totalorder %s12, 1
      %p29 = por %p27, %p28
      %p30 = scmp.ne.s32.totalorder %s22, %s25
      %p31 = scmp.eq.s32.totalorder %s12, 0
      %p32 = por %p30, %p31
      %p33 = scmp.ne.s32.totalorder %s22, %s25
      %p34 = scmp.eq.s32.totalorder %s17, 1
      %p35 = por %p33, %p34
      %p36 = scmp.ne.s32.totalorder %s25, %s26
      %p37 = scmp.eq.s32.totalorder %s17, 0
      %p38 = por %p36, %p37
      %p39 = scmp.ne.s32.totalorder %s25, %s26
      %p40 = scmp.eq.s32.totalorder %s18, 1
      %p41 = por %p39, %p40
      %p43 = scmp.ne.s32.totalorder %s26, %s42
      %p44 = scmp.eq.s32.totalorder %s18, 0
      %p45 = por %p43, %p44
      %s47 = sadd.s32 %s46, 1
      %p50 = scmp.eq.s32.totalorder %s12, 1
      %p51 = scmp.ne.s32.totalorder %s46, %s48
      %p52 = scmp.eq.s32.totalorder %s12, 0
      %p53 = por %p51, %p52
      %p54 = scmp.ne.s32.totalorder %s46, %s48
      %p55 = scmp.eq.s32.totalorder %s17, 1
      %p56 = por %p54, %p55
      %p57 = scmp.ne.s32.totalorder %s48, %s49
      %p58 = scmp.eq.s32.totalorder %s17, 0
      %p59 = por %p57, %p58
      %p60 = scmp.ne.s32.totalorder %s48, %s49
      %p61 = scmp.eq.s32.totalorder %s18, 1
      %p62 = por %p60, %p61
      %p64 = scmp.ne.s32.totalorder %s49, %s63
      %p65 = scmp.eq.s32.totalorder %s18, 0
      %p66 = por %p64, %p65
      %s68 = sadd.s32 %s67, 1
      %p71 = scmp.eq.s32.totalorder %s12, 1
      %p72 = scmp.ne.s32.totalorder %s67, %s69
      %p73 = scmp.eq.s32.totalorder %s12, 0
      %p74 = por %p72, %p73
      %p75 = scmp.ne.s32.totalorder %s67, %s69
      %p76 = scmp.eq.s32.totalorder %s17, 1
      %p77 = por %p75, %p76
      %p78 = scmp.ne.s32.totalorder %s69, %s70
      %p79 = scmp.eq.s32.totalorder %s17, 0
      %p80 = por %p78, %p79
      %p81 = scmp.ne.s32.totalorder %s69, %s70
      %p82 = scmp.eq.s32.totalorder %s18, 1
      %p83 = por %p81, %p82
      %p85 = scmp.ne.s32.totalorder %s70, %s84
      %p86 = scmp.eq.s32.totalorder %s18, 0
      %p87 = por %p85, %p86
      %s89 = sadd.s32 %s88, 1
      %p92 = scmp.eq.s32.totalorder %s12, 1
      %p93 = scmp.ne.s32.totalorder %s88, %s90
      %p94 = scmp.eq.s32.totalorder %s12, 0
      %p95 = por %p93, %p94
      %p96 = scmp.ne.s32.totalorder %s88, %s90
      %p97 = scmp.eq.s32.totalorder %s17, 1
      %p98 = por %p96, %p97
      %p99 = scmp.ne.s32.totalorder %s90, %s91
      %p100 = scmp.eq.s32.totalorder %s17, 0
      %p101 = por %p99, %p100
      %p102 = scmp.ne.s32.totalorder %s90, %s91
      %p103 = scmp.eq.s32.totalorder %s18, 1
      %p104 = por %p102, %p103
      %p106 = scmp.ne.s32.totalorder %s91, %s105
      %p107 = scmp.eq.s32.totalorder %s18, 0
      %p108 = por %p106, %p107
      %s109 = ssub.s32 %s12, %s19
      %p110 = scmp.eq.s32.totalorder %s109, 0
      %s112 = sadd.s32 %s111, 1
      %s113 = scalar_select %p110, %s111, %s112
      %p116 = pneg %p110
      %p117 = scmp.eq.s32.totalorder %s12, 1
      %p118 = por %p116, %p117
      %p119 = scmp.ne.s32.totalorder %s111, %s114
      %p120 = scmp.eq.s32.totalorder %s12, 0
      %p121 = por %p119, %p120
      %p122 = scmp.ne.s32.totalorder %s111, %s114
      %p123 = scmp.eq.s32.totalorder %s17, 1
      %p124 = por %p122, %p123
      %p125 = scmp.ne.s32.totalorder %s114, %s115
      %p126 = scmp.eq.s32.totalorder %s17, 0
      %p127 = por %p125, %p126
      %p128 = scmp.ne.s32.totalorder %s114, %s115
      %p129 = scmp.eq.s32.totalorder %s18, 1
      %p130 = por %p128, %p129
      %p132 = scmp.ne.s32.totalorder %s115, %s131
      %p133 = scmp.eq.s32.totalorder %s18, 0
      %p134 = por %p132, %p133
      %p135 = scmp.le.s32.totalorder 1, %s12
      %p136 = scmp.lt.s32.totalorder %s12, 3
      %p137 = pnand %p135, %p136
      %p138 = pneg %p137
      // Predicated region
      $region9: #{bert_mlm_forward.11} parent=5 // pred_check
        _
      $region10: #{bert_mlm_forward.11} parent=5 // pred_check_branch
        %140 = sbr.rel (%p137) target = $region12
      $region11: #{bert_mlm_forward.11} parent=5 // pred_region
        %s141 = ssub.s32 %s12, 1
        // Predicated region
        $region13: #{bert_mlm_forward.11} parent=11 // pred_check
          %p142 = pneg %p59
        $region14: #{bert_mlm_forward.11} parent=11 // pred_check_branch
          %144 = sbr.rel (%p142) target = $region16
        $region15: #{bert_mlm_forward.11} parent=11 // pred_region
          _
        $region16: #{bert_mlm_forward.11} parent=11 // pred_fallthru
          _
        // Predicated region
        $region17: #{bert_mlm_forward.11} parent=11 // pred_check
          %p145 = pneg %p80
        $region18: #{bert_mlm_forward.11} parent=11 // pred_check_branch
          %147 = sbr.rel (%p145) target = $region20
        $region19: #{bert_mlm_forward.11} parent=11 // pred_region
          %s149 = ssub.s32 16, 16
          %150 = vsyncadd [#allocation3], %s149
          %s152 = sshll.u32 [#allocation2], 4
          %s153 = int_to_ptr.vmem [resolvable:$true] %s152
          %155 = dma.hbm_to_vmem [thread:$0]  %s2, 16, %s153, [#allocation3]
        $region20: #{bert_mlm_forward.11} parent=11 // pred_fallthru
          _
        // Predicated region
        $region21: #{bert_mlm_forward.11} parent=11 // pred_check
          %p156 = pneg %p101
        $region22: #{bert_mlm_forward.11} parent=11 // pred_check_branch
          %158 = sbr.rel (%p156) target = $region24
        $region23: #{bert_mlm_forward.11} parent=11 // pred_region
          %s160 = ssub.s32 16, 16
          %161 = vsyncadd [#allocation5], %s160
          %s163 = sshll.u32 [#allocation4], 4
          %s164 = int_to_ptr.vmem [resolvable:$true] %s163
          %166 = dma.hbm_to_vmem [thread:$0]  %s3, 16, %s164, [#allocation5]
        $region24: #{bert_mlm_forward.11} parent=11 // pred_fallthru
          _
      $region12: #{bert_mlm_forward.11} parent=5 // pred_fallthru
        _
      %p167 = scmp.lt.s32.totalorder %s12, 2
      // Predicated region
      $region25: #{bert_mlm_forward.11} parent=5 // pred_check
        %p168 = pneg %p167
      $region26: #{bert_mlm_forward.11} parent=5 // pred_check_branch
        %170 = sbr.rel (%p168) target = $region28
      $region27: #{bert_mlm_forward.11} parent=5 // pred_region
        // Predicated region
        $region29: #{bert_mlm_forward.11} parent=27 // pred_check
          %p171 = pneg %p32
        $region30: #{bert_mlm_forward.11} parent=27 // pred_check_branch
          %173 = sbr.rel (%p171) target = $region32
        $region31: #{bert_mlm_forward.11} parent=27 // pred_region
          %p174 = scmp.lt.s32.totalorder %s12, 1
          %s175 = scalar_select %p174, %s12, 1
          %s176 = smul.addr %s175, 8
          %s177 = scalar_lea.vmem %s0, %s176
        $region32: #{bert_mlm_forward.11} parent=27 // pred_fallthru
          _
      $region28: #{bert_mlm_forward.11} parent=5 // pred_fallthru
        _
      %p178 = scmp.le.s32.totalorder 1, %s12
      %p179 = scmp.lt.s32.totalorder %s12, 3
      %p180 = pnand %p178, %p179
      %p181 = pneg %p180
      // Predicated region
      $region33: #{bert_mlm_forward.11} parent=5 // pred_check
        _
      $region34: #{bert_mlm_forward.11} parent=5 // pred_check_branch
        %183 = sbr.rel (%p180) target = $region36
      $region35: #{bert_mlm_forward.11} parent=5 // pred_region
        %s184 = ssub.s32 %s12, 1
        // Predicated region
        $region37: #{bert_mlm_forward.11} parent=35 // pred_check
          %p185 = pneg %p80
        $region38: #{bert_mlm_forward.11} parent=35 // pred_check_branch
          %187 = sbr.rel (%p185) target = $region40
        $region39: #{bert_mlm_forward.11} parent=35 // pred_region
          %188 = dma.done [#allocation3], 16
        $region40: #{bert_mlm_forward.11} parent=35 // pred_fallthru
          _
        // Predicated region
        $region41: #{bert_mlm_forward.11} parent=35 // pred_check
          %p189 = pneg %p101
        $region42: #{bert_mlm_forward.11} parent=35 // pred_check_branch
          %191 = sbr.rel (%p189) target = $region44
        $region43: #{bert_mlm_forward.11} parent=35 // pred_region
          %192 = dma.done [#allocation5], 16
        $region44: #{bert_mlm_forward.11} parent=35 // pred_fallthru
          _
        %p193 = scmp.lt.s32.totalorder %s17, 1
        %s194 = scalar_select %p193, %s17, 1
        %s195 = smul.addr %s194, 8
        %s196 = scalar_lea.vmem %s0, %s195
        %p197 = pneg %p38
        %p198 = pneg %p35
        %p199 = pneg %p59
        %p200 = pneg %p56
        %p201 = pneg %p80
        %p202 = pneg %p77
        %p203 = pneg %p101
        %p204 = pneg %p98
        %p205 = pneg %p127
        %p206 = pneg %p124
        %p207 = scmp.lt.s32.totalorder %s17, 1
        %s208 = scalar_select %p207, %s17, 1
        %s209 = smul.addr %s208, 4
        %s210 = scalar_lea.vmem %s4, %s209
        %p211 = scmp.lt.s32.totalorder %s17, 1
        %s212 = scalar_select %p211, %s17, 1
        %s213 = smul.addr %s212, 8
        %s214 = scalar_lea.vmem %s0, %s213
        %p215 = scmp.lt.s32.totalorder %s17, 1
        %s216 = scalar_select %p215, %s17, 1
        %s217 = smul.addr %s216, 4
        %s218 = scalar_lea.vmem %s4, %s217
        %v219 = vld [vmem:[%s214] sm:$0xff]
        %v220 = vld [vmem:[%s1] sm:$0xff]
        %v221 = vadd.f32 %v219, %v220
        %222 = vadd.xlane.f32.xlu0 %v221
        %v223 = vpop.xlane.xlu0 %222
        %v224 = vrcp.pop 128.0
        %v225 = vmul.f32 %v223, %v224
        %v226 = vsub.f32 %v221, %v225
        %v227 = vmul.f32 %v226, %v226
        %228 = vadd.xlane.f32.xlu0 %v227
        %v229 = vpop.xlane.xlu0 %228
        %v230 = vmul.f32 %v229, %v224
        %v231 = vadd.f32 %v230, 1e-12
        %v232 = vrsqrt.pop %v231
        %v233 = vmul.f32 %v226, %v232
        %v234 = vld [vmem:[#allocation2] sm:$0x1]
        %v236 = vlaneseq
        %v237 = vshrl.u32 %v236, 7
        %v238 = vsub.s32 0, %v237
        %v239 = vrot.slane %v234, %v238
        %v241 = vmul.f32 %v233, %v239
        %v242 = vld [vmem:[#allocation4] sm:$0x1]
        %v244 = vlaneseq
        %v245 = vshrl.u32 %v244, 7
        %v246 = vsub.s32 0, %v245
        %v247 = vrot.slane %v242, %v246
        %v249 = vadd.f32 %v241, %v247
        %v250 = vpack.c.bf16 %v249, %v249
        %251 = vst [vmem:[%s218] sm:$0xf] %v250
        %p252 = scmp.lt.s32.totalorder %s17, 1
        %s253 = scalar_select %p252, %s17, 1
        %s254 = smul.addr %s253, 4
        %s255 = scalar_lea.vmem %s4, %s254
        // Predicated region
        $region45: #{bert_mlm_forward.11} parent=35 // pred_check
          %p256 = pneg %p124
        $region46: #{bert_mlm_forward.11} parent=35 // pred_check_branch
          %258 = sbr.rel (%p256) target = $region48
        $region47: #{bert_mlm_forward.11} parent=35 // pred_region
          _
        $region48: #{bert_mlm_forward.11} parent=35 // pred_fallthru
          _
      $region36: #{bert_mlm_forward.11} parent=5 // pred_fallthru
        _
      %p259 = scmp.le.s32.totalorder 2, %s12
      // Predicated region
      $region49: #{bert_mlm_forward.11} parent=5 // pred_check
        %p260 = pneg %p259
      $region50: #{bert_mlm_forward.11} parent=5 // pred_check_branch
        %262 = sbr.rel (%p260) target = $region52
      $region51: #{bert_mlm_forward.11} parent=5 // pred_region
        %s263 = ssub.s32 %s12, 2
        // Predicated region
        $region53: #{bert_mlm_forward.11} parent=51 // pred_check
          %p264 = pneg %p130
        $region54: #{bert_mlm_forward.11} parent=51 // pred_check_branch
          %266 = sbr.rel (%p264) target = $region56
        $region55: #{bert_mlm_forward.11} parent=51 // pred_region
          %p267 = scmp.lt.s32.totalorder %s18, 1
          %s268 = scalar_select %p267, %s18, 1
          %s269 = smul.addr %s268, 4
          %s270 = scalar_lea.vmem %s4, %s269
        $region56: #{bert_mlm_forward.11} parent=51 // pred_fallthru
          _
      $region52: #{bert_mlm_forward.11} parent=5 // pred_fallthru
        _
    $region6: #{bert_mlm_forward.11} parent=1 // loop_footer
      %s16 = sadd.s32 1, %s12
    $region7: #{bert_mlm_forward.11} parent=1 // loop_footer_branch
      %11 = sbr.rel target = $region3
    $region8: #{bert_mlm_forward.11} parent=1 // loop_exit
      _
    %271 = vsyncpa [#allocation3], 1
    %s272 = scalar_lea.sflag [#allocation3], 1
    %273 = vsyncpa %s272, 1
    %274 = vsyncpa [#allocation5], 1

// kernel: bert_mlm_forward.12
$region0: #{bert_mlm_forward.12}
  #allocation0 [shape = 'u32[]', space=smem, size = 0x4, offset = 0x4, fixed_abs, tag = 'smem constant byte address 0x4 - core index']
  #allocation1 [shape = 'u32[144,128]{1,0:T(1,128)}', space=vmem, size = 0x12000, scoped, tag = 'internal scratch']
  #allocation2 [shape = 'f32[16,384]{1,0:T(8,128)}', space=vmem, size = 0x6000, scoped, tag = 'scratch operand']
  %s0 = inlined_call_operand.vmem [shape: bf16[16,128], index: 0, kind: input, shape index: {}]
  %s1 = inlined_call_operand.hbm [shape: bf16[128,384], index: 1, kind: input, shape index: {}]
  %s2 = inlined_call_operand.vmem [shape: f32[1,384], index: 2, kind: input, shape index: {}]
  %s3 = inlined_call_operand.vmem [shape: bf16[16,384], index: 3, kind: output, shape index: {}]
  %s4 = sld [smem:[#allocation0]]
  $region34: #{bert_mlm_forward.12} parent=0
    _
  %s6 = ssub.s32 1, %s4
  %s7 = scalar_select 0, %s6, %s4
  $region1: #{bert_mlm_forward.12} parent=0
    #allocation3 [shape = 'u8[98304]{0}', space=vmem, size = 0x18000, scoped, tag = 'input window, operand 1, single buffered']
    #allocation4 [shape = 's32[1]{0}', space=sflag, size = 0x4, scoped, tag = 'scoped memory for bert_mlm_forward.12']
    %8 = vsyncpa [#allocation4], 0
    // Predicated region
    $region2: #{bert_mlm_forward.12} parent=1 // pred_check
      _
    $region3: #{bert_mlm_forward.12} parent=1 // pred_check_branch
      %10 = sbr.rel (0) target = $region5
    $region4: #{bert_mlm_forward.12} parent=1 // pred_region
      _
    $region5: #{bert_mlm_forward.12} parent=1 // pred_fallthru
      _
    // Predicated region
    $region6: #{bert_mlm_forward.12} parent=1 // pred_check
      _
    $region7: #{bert_mlm_forward.12} parent=1 // pred_check_branch
      %12 = sbr.rel (0) target = $region9
    $region8: #{bert_mlm_forward.12} parent=1 // pred_region
      %s14 = ssub.s32 3072, 3072
      %15 = vsyncadd [#allocation4], %s14
      %s16 = sshll.u32 [#allocation3], 4
      %s17 = int_to_ptr.vmem [resolvable:$true] %s16
      %22 = dma.hbm_to_vmem [thread:$0]  %s1, 3072, %s17, [#allocation4], 192, 192, 12
    $region9: #{bert_mlm_forward.12} parent=1 // pred_fallthru
      _
    // Predicated region
    $region10: #{bert_mlm_forward.12} parent=1 // pred_check
      _
    $region11: #{bert_mlm_forward.12} parent=1 // pred_check_branch
      %24 = sbr.rel (0) target = $region13
    $region12: #{bert_mlm_forward.12} parent=1 // pred_region
      _
    $region13: #{bert_mlm_forward.12} parent=1 // pred_fallthru
      _
    // Predicated region
    $region14: #{bert_mlm_forward.12} parent=1 // pred_check
      _
    $region15: #{bert_mlm_forward.12} parent=1 // pred_check_branch
      %26 = sbr.rel (0) target = $region17
    $region16: #{bert_mlm_forward.12} parent=1 // pred_region
      %27 = dma.done [#allocation4], 3072
    $region17: #{bert_mlm_forward.12} parent=1 // pred_fallthru
      _
    %p29 = scmp.eq.s32.totalorder 0, 0
    // Predicated region
    $region18: #{bert_mlm_forward.12} parent=1 // pred_check
      %p30 = pneg %p29
    $region19: #{bert_mlm_forward.12} parent=1 // pred_check_branch
      %32 = sbr.rel (%p30) target = $region21
    $region20: #{bert_mlm_forward.12} parent=1 // pred_region
      %33 = vst [vmem:[#allocation2] sm:$0xff] 0.0
      %34 = vst [vmem:[#allocation2 + $0x8] sm:$0xff] 0.0
      %35 = vst [vmem:[#allocation2 + $0x10] sm:$0xff] 0.0
      %36 = vst [vmem:[#allocation2 + $0x18] sm:$0xff] 0.0
      %37 = vst [vmem:[#allocation2 + $0x20] sm:$0xff] 0.0
      %38 = vst [vmem:[#allocation2 + $0x28] sm:$0xff] 0.0
    $region21: #{bert_mlm_forward.12} parent=1 // pred_fallthru
      _
    %v39 = vld [vmem:[#allocation2] sm:$0xff]
    %v40 = vld [vmem:[#allocation2 + $0x8] sm:$0xff]
    %v41 = vld [vmem:[#allocation2 + $0x10] sm:$0xff]
    %v42 = vld [vmem:[#allocation2 + $0x18] sm:$0xff]
    %v43 = vld [vmem:[#allocation2 + $0x20] sm:$0xff]
    %v44 = vld [vmem:[#allocation2 + $0x28] sm:$0xff]
    %v45 = vld [vmem:[%s0] sm:$0xf]
    %v46 = vld [vmem:[%s0 + $0x4] sm:$0xf]
    %v47 = vld [vmem:[#allocation3] sm:$0xff]
    %v48 = vld [vmem:[#allocation3 + $0x8] sm:$0xf]
    %v49 = vld [vmem:[#allocation3 + $0xc] sm:$0xff]
    %v50 = vld [vmem:[#allocation3 + $0x14] sm:$0xf]
    %v51 = vld [vmem:[#allocation3 + $0x18] sm:$0xff]
    %v52 = vld [vmem:[#allocation3 + $0x20] sm:$0xf]
    %v53 = vld [vmem:[#allocation3 + $0x24] sm:$0xff]
    %v54 = vld [vmem:[#allocation3 + $0x2c] sm:$0xf]
    %v55 = vld [vmem:[#allocation3 + $0x30] sm:$0xff]
    %v56 = vld [vmem:[#allocation3 + $0x38] sm:$0xf]
    %v57 = vld [vmem:[#allocation3 + $0x3c] sm:$0xff]
    %v58 = vld [vmem:[#allocation3 + $0x44] sm:$0xf]
    %v59 = vld [vmem:[#allocation3 + $0x48] sm:$0xff]
    %v60 = vld [vmem:[#allocation3 + $0x50] sm:$0xf]
    %v61 = vld [vmem:[#allocation3 + $0x54] sm:$0xff]
    %v62 = vld [vmem:[#allocation3 + $0x5c] sm:$0xf]
    %v63 = vld [vmem:[#allocation3 + $0x60] sm:$0xff]
    %v64 = vld [vmem:[#allocation3 + $0x68] sm:$0xf]
    %v65 = vld [vmem:[#allocation3 + $0x6c] sm:$0xff]
    %v66 = vld [vmem:[#allocation3 + $0x74] sm:$0xf]
    %v67 = vld [vmem:[#allocation3 + $0x78] sm:$0xff]
    %v68 = vld [vmem:[#allocation3 + $0x80] sm:$0xf]
    %v69 = vld [vmem:[#allocation3 + $0x84] sm:$0xff]
    %v70 = vld [vmem:[#allocation3 + $0x8c] sm:$0xf]
    %v71 = vld [vmem:[#allocation3 + $0x90] sm:$0xff]
    %v72 = vld [vmem:[#allocation3 + $0x98] sm:$0xf]
    %v73 = vld [vmem:[#allocation3 + $0x9c] sm:$0xff]
    %v74 = vld [vmem:[#allocation3 + $0xa4] sm:$0xf]
    %v75 = vld [vmem:[#allocation3 + $0xa8] sm:$0xff]
    %v76 = vld [vmem:[#allocation3 + $0xb0] sm:$0xf]
    %v77 = vld [vmem:[#allocation3 + $0xb4] sm:$0xff]
    %v78 = vld [vmem:[#allocation3 + $0xbc] sm:$0xf]
    %v81 = vunpack.c.l.b16 %v45
    %v82 = vunpack.c.l.b16 %v46
    %v83 = vpack.c.b16 %v82, %v81
    %v117 = vunpack.c.l.b16 %v47
    %v118 = vunpack.c.h.b16 %v47
    %v119 = vunpack.c.l.b16 %v48
    %v120 = vunpack.c.l.b16 %v49
    %v121 = vunpack.c.h.b16 %v49
    %v122 = vunpack.c.l.b16 %v50
    %v123 = vunpack.c.l.b16 %v51
    %v124 = vunpack.c.h.b16 %v51
    %v125 = vunpack.c.l.b16 %v52
    %v126 = vunpack.c.l.b16 %v53
    %v127 = vunpack.c.h.b16 %v53
    %v128 = vunpack.c.l.b16 %v54
    %v129 = vunpack.c.l.b16 %v55
    %v130 = vunpack.c.h.b16 %v55
    %v131 = vunpack.c.l.b16 %v56
    %v132 = vunpack.c.l.b16 %v57
    %v133 = vunpack.c.h.b16 %v57
    %v134 = vunpack.c.l.b16 %v58
    %v135 = vunpack.c.l.b16 %v59
    %v136 = vunpack.c.h.b16 %v59
    %v137 = vunpack.c.l.b16 %v60
    %v138 = vunpack.c.l.b16 %v61
    %v139 = vunpack.c.h.b16 %v61
    %v140 = vunpack.c.l.b16 %v62
    %v141 = vunpack.c.l.b16 %v63
    %v142 = vunpack.c.h.b16 %v63
    %v143 = vunpack.c.l.b16 %v64
    %v144 = vunpack.c.l.b16 %v65
    %v145 = vunpack.c.h.b16 %v65
    %v146 = vunpack.c.l.b16 %v66
    %v147 = vunpack.c.l.b16 %v67
    %v148 = vunpack.c.h.b16 %v67
    %v149 = vunpack.c.l.b16 %v68
    %v150 = vunpack.c.l.b16 %v69
    %v151 = vunpack.c.h.b16 %v69
    %v152 = vunpack.c.l.b16 %v70
    %v153 = vunpack.c.l.b16 %v71
    %v154 = vunpack.c.h.b16 %v71
    %v155 = vunpack.c.l.b16 %v72
    %v156 = vunpack.c.l.b16 %v73
    %v157 = vunpack.c.h.b16 %v73
    %v158 = vunpack.c.l.b16 %v74
    %v159 = vunpack.c.l.b16 %v75
    %v160 = vunpack.c.h.b16 %v75
    %v161 = vunpack.c.l.b16 %v76
    %v162 = vunpack.c.l.b16 %v77
    %v163 = vunpack.c.h.b16 %v77
    %v164 = vunpack.c.l.b16 %v78
    %v165 = vpack.c.b16 %v120, %v117
    %v166 = vpack.c.b16 %v121, %v118
    %v167 = vpack.c.b16 %v122, %v119
    %v168 = vpack.c.b16 %v126, %v123
    %v169 = vpack.c.b16 %v127, %v124
    %v170 = vpack.c.b16 %v128, %v125
    %v171 = vpack.c.b16 %v132, %v129
    %v172 = vpack.c.b16 %v133, %v130
    %v173 = vpack.c.b16 %v134, %v131
    %v174 = vpack.c.b16 %v138, %v135
    %v175 = vpack.c.b16 %v139, %v136
    %v176 = vpack.c.b16 %v140, %v137
    %v177 = vpack.c.b16 %v144, %v141
    %v178 = vpack.c.b16 %v145, %v142
    %v179 = vpack.c.b16 %v146, %v143
    %v180 = vpack.c.b16 %v150, %v147
    %v181 = vpack.c.b16 %v151, %v148
    %v182 = vpack.c.b16 %v152, %v149
    %v183 = vpack.c.b16 %v156, %v153
    %v184 = vpack.c.b16 %v157, %v154
    %v185 = vpack.c.b16 %v158, %v155
    %v186 = vpack.c.b16 %v162, %v159
    %v187 = vpack.c.b16 %v163, %v160
    %v188 = vpack.c.b16 %v164, %v161
    %213 = vmatprep.subr.bf16.mxu0 %v166
    %214 = vmatpush1.bf16.msra.mxu0 %v165
    %215 = vmatprep.subr.bf16.mxu0 %v169
    %216 = vmatpush1.bf16.msra.mxu0 %v168
    %217 = vmatprep.subr.bf16.mxu0 %v172
    %218 = vmatpush1.bf16.msra.mxu0 %v171
    %219 = vmatprep.subr.bf16.mxu0 %v175
    %220 = vmatpush1.bf16.msra.mxu0 %v174
    %221 = vmatprep.subr.bf16.mxu0 %v178
    %222 = vmatpush1.bf16.msra.mxu0 %v177
    %223 = vmatprep.subr.bf16.mxu0 %v181
    %224 = vmatpush1.bf16.msra.mxu0 %v180
    %225 = vmatprep.subr.bf16.mxu0 %v184
    %226 = vmatpush1.bf16.msra.mxu0 %v183
    %227 = vmatprep.subr.bf16.mxu0 %v187
    %228 = vmatpush1.bf16.msra.mxu0 %v186
    %229 = vmatprep.subr.bf16.mxu0 0
    %230 = vmatpush1.bf16.msra.mxu0 0
    %231 = vmatprep.subr.bf16.mxu0 0
    %232 = vmatpush1.bf16.msra.mxu0 0
    %233 = vmatprep.subr.bf16.mxu0 0
    %234 = vmatpush1.bf16.msra.mxu0 0
    %235 = vmatprep.subr.bf16.mxu0 0
    %236 = vmatpush1.bf16.msra.mxu0 0
    %237 = vmatprep.subr.bf16.mxu0 0
    %238 = vmatpush1.bf16.msra.mxu0 0
    %239 = vmatprep.subr.bf16.mxu0 0
    %240 = vmatpush1.bf16.msra.mxu0 0
    %241 = vmatprep.subr.bf16.mxu0 0
    %242 = vmatpush1.bf16.msra.mxu0 0
    %243 = vmatprep.subr.bf16.mxu0 0
    %244 = vmatpush1.bf16.msra.mxu0 0
    %245 = vmatprep.mubr.bf16.mxu0 0
    %246 = vmatmul.mubr.bf16.gmra.mrb[0].mxu0 %v83
    %v247 = vpop.f32.mrb[0].mxu0
    %v248 = vadd.f32 0.0, %v247
    %v249 = vpop.f32.mrb[0].mxu0
    %v250 = vadd.f32 0.0, %v249
    %v251 = vpop.f32.mrb[0].mxu0
    %v252 = vadd.f32 0.0, %v251
    %v253 = vpop.f32.mrb[0].mxu0
    %v254 = vadd.f32 0.0, %v253
    %255 = vdwg.mxu0
    %256 = vmatprep.subr.bf16.mxu0 0
    %257 = vmatpush1.bf16.msra.mxu0 %v167
    %258 = vmatprep.subr.bf16.mxu0 0
    %259 = vmatpush1.bf16.msra.mxu0 %v170
    %260 = vmatprep.subr.bf16.mxu0 0
    %261 = vmatpush1.bf16.msra.mxu0 %v173
    %262 = vmatprep.subr.bf16.mxu0 0
    %263 = vmatpush1.bf16.msra.mxu0 %v176
    %264 = vmatprep.subr.bf16.mxu0 0
    %265 = vmatpush1.bf16.msra.mxu0 %v179
    %266 = vmatprep.subr.bf16.mxu0 0
    %267 = vmatpush1.bf16.msra.mxu0 %v182
    %268 = vmatprep.subr.bf16.mxu0 0
    %269 = vmatpush1.bf16.msra.mxu0 %v185
    %270 = vmatprep.subr.bf16.mxu0 0
    %271 = vmatpush1.bf16.msra.mxu0 %v188
    %272 = vmatprep.subr.bf16.mxu0 0
    %273 = vmatpush1.bf16.msra.mxu0 0
    %274 = vmatprep.subr.bf16.mxu0 0
    %275 = vmatpush1.bf16.msra.mxu0 0
    %276 = vmatprep.subr.bf16.mxu0 0
    %277 = vmatpush1.bf16.msra.mxu0 0
    %278 = vmatprep.subr.bf16.mxu0 0
    %279 = vmatpush1.bf16.msra.mxu0 0
    %280 = vmatprep.subr.bf16.mxu0 0
    %281 = vmatpush1.bf16.msra.mxu0 0
    %282 = vmatprep.subr.bf16.mxu0 0
    %283 = vmatpush1.bf16.msra.mxu0 0
    %284 = vmatprep.subr.bf16.mxu0 0
    %285 = vmatpush1.bf16.msra.mxu0 0
    %286 = vmatprep.subr.bf16.mxu0 0
    %287 = vmatpush1.bf16.msra.mxu0 0
    %288 = vmatprep.mubr.bf16.mxu0 0
    %289 = vmatmul.mubr.bf16.gmra.mrb[0].mxu0 %v83
    %v290 = vpop.f32.mrb[0].mxu0
    %v291 = vadd.f32 0.0, %v290
    %v292 = vpop.f32.mrb[0].mxu0
    %v293 = vpop.f32.mrb[0].mxu0
    %v294 = vadd.f32 0.0, %v293
    %v295 = vpop.f32.mrb[0].mxu0
    %296 = vdwg.mxu0
    %v297 = vadd.f32 %v39, %v248
    %v298 = vadd.f32 %v40, %v250
    %v299 = vadd.f32 %v41, %v291
    %v300 = vadd.f32 %v42, %v252
    %v301 = vadd.f32 %v43, %v254
    %v302 = vadd.f32 %v44, %v294
    %303 = vst [vmem:[#allocation2] sm:$0xff] %v297
    %304 = vst [vmem:[#allocation2 + $0x8] sm:$0xff] %v298
    %305 = vst [vmem:[#allocation2 + $0x10] sm:$0xff] %v299
    %306 = vst [vmem:[#allocation2 + $0x18] sm:$0xff] %v300
    %307 = vst [vmem:[#allocation2 + $0x20] sm:$0xff] %v301
    %308 = vst [vmem:[#allocation2 + $0x28] sm:$0xff] %v302
    // Predicated region
    $region22: #{bert_mlm_forward.12} parent=1 // pred_check
      %p309 = pneg %p29
    $region23: #{bert_mlm_forward.12} parent=1 // pred_check_branch
      %311 = sbr.rel (%p309) target = $region25
    $region24: #{bert_mlm_forward.12} parent=1 // pred_region
      %v312 = vld [vmem:[#allocation2] sm:$0xff]
      %v313 = vld [vmem:[#allocation2 + $0x8] sm:$0xff]
      %v314 = vld [vmem:[#allocation2 + $0x10] sm:$0xff]
      %v315 = vld [vmem:[#allocation2 + $0x18] sm:$0xff]
      %v316 = vld [vmem:[#allocation2 + $0x20] sm:$0xff]
      %v317 = vld [vmem:[#allocation2 + $0x28] sm:$0xff]
      %v318 = vld [vmem:[%s2] sm:$0x7]
      %v320 = vlaneseq
      %v321 = vshrl.u32 %v320, 7
      %v322 = vsub.s32 0, %v321
      %v323 = vrot.slane %v318, %v322
      %v324 = vlaneseq
      %v325 = vshrl.u32 %v324, 7
      %v326 = vsub.s32 1, %v325
      %v327 = vrot.slane %v318, %v326
      %v328 = vlaneseq
      %v329 = vshrl.u32 %v328, 7
      %v330 = vsub.s32 2, %v329
      %v331 = vrot.slane %v318, %v330
      %v335 = vadd.f32 %v312, %v323
      %v336 = vadd.f32 %v313, %v327
      %v337 = vadd.f32 %v314, %v331
      %v338 = vadd.f32 %v315, %v323
      %v339 = vadd.f32 %v316, %v327
      %v340 = vadd.f32 %v317, %v331
      %v341 = vpack.c.bf16 %v338, %v335
      %v342 = vpack.c.bf16 %v339, %v336
      %v343 = vpack.c.bf16 %v340, %v337
      %v347 = vunpack.c.l.b16 %v341
      %v348 = vunpack.c.l.b16 %v342
      %v349 = vunpack.c.l.b16 %v343
      %v350 = vunpack.c.h.b16 %v341
      %v351 = vunpack.c.h.b16 %v342
      %v352 = vunpack.c.h.b16 %v343
      %v353 = vpack.c.b16 %v348, %v347
      %v354 = vpack.c.b16 %v349, %v349
      %v355 = vpack.c.b16 %v351, %v350
      %v356 = vpack.c.b16 %v352, %v352
      %361 = vst [vmem:[%s3] sm:$0xff] %v353
      %362 = vst [vmem:[%s3 + $0x8] sm:$0xf] %v354
      %363 = vst [vmem:[%s3 + $0xc] sm:$0xff] %v355
      %364 = vst [vmem:[%s3 + $0x14] sm:$0xf] %v356
    $region25: #{bert_mlm_forward.12} parent=1 // pred_fallthru
      _
    // Predicated region
    $region26: #{bert_mlm_forward.12} parent=1 // pred_check
      _
    $region27: #{bert_mlm_forward.12} parent=1 // pred_check_branch
      %366 = sbr.rel (0) target = $region29
    $region28: #{bert_mlm_forward.12} parent=1 // pred_region
      _
    $region29: #{bert_mlm_forward.12} parent=1 // pred_fallthru
      _
    // Predicated region
    $region30: #{bert_mlm_forward.12} parent=1 // pred_check
      _
    $region31: #{bert_mlm_forward.12} parent=1 // pred_check_branch
      %368 = sbr.rel (0) target = $region33
    $region32: #{bert_mlm_forward.12} parent=1 // pred_region
      _
    $region33: #{bert_mlm_forward.12} parent=1 // pred_fallthru
      _
    %369 = vsyncpa [#allocation4], 1

// kernel: bert_mlm_forward.14
$region0: #{bert_mlm_forward.14}
  #allocation0 [shape = 'u32[]', space=smem, size = 0x4, offset = 0x4, fixed_abs, tag = 'smem constant byte address 0x4 - core index']
  #allocation1 [shape = 'u32[144,128]{1,0:T(1,128)}', space=vmem, size = 0x12000, scoped, tag = 'internal scratch']
  #allocation2 [shape = 'f32[16,128]{1,0:T(8,128)}', space=vmem, size = 0x2000, scoped, tag = 'scratch operand']
  %s0 = inlined_call_operand.vmem [shape: bf16[16,128], index: 0, kind: input, shape index: {}]
  %s1 = inlined_call_operand.vmem [shape: bf16[128,128], index: 1, kind: input, shape index: {}]
  %s2 = inlined_call_operand.vmem [shape: f32[1,128], index: 2, kind: input, shape index: {}]
  %s3 = inlined_call_operand.vmem [shape: bf16[16,128], index: 3, kind: input, shape index: {}]
  %s4 = inlined_call_operand.vmem [shape: f32[1,128], index: 4, kind: input, shape index: {}]
  %s5 = inlined_call_operand.vmem [shape: f32[1,128], index: 5, kind: input, shape index: {}]
  %s6 = inlined_call_operand.vmem [shape: bf16[16,128], index: 6, kind: output, shape index: {}]
  %s7 = sld [smem:[#allocation0]]
  $region42: #{bert_mlm_forward.14} parent=0
    _
  %s9 = ssub.s32 1, %s7
  %s10 = scalar_select 0, %s9, %s7
  // Predicated region
  $region2: #{bert_mlm_forward.14} parent=0 // pred_check
    _
  $region3: #{bert_mlm_forward.14} parent=0 // pred_check_branch
    %12 = sbr.rel (0) target = $region5
  $region4: #{bert_mlm_forward.14} parent=0 // pred_region
    _
  $region5: #{bert_mlm_forward.14} parent=0 // pred_fallthru
    _
  // Predicated region
  $region6: #{bert_mlm_forward.14} parent=0 // pred_check
    _
  $region7: #{bert_mlm_forward.14} parent=0 // pred_check_branch
    %14 = sbr.rel (0) target = $region9
  $region8: #{bert_mlm_forward.14} parent=0 // pred_region
    _
  $region9: #{bert_mlm_forward.14} parent=0 // pred_fallthru
    _
  // Predicated region
  $region10: #{bert_mlm_forward.14} parent=0 // pred_check
    _
  $region11: #{bert_mlm_forward.14} parent=0 // pred_check_branch
    %16 = sbr.rel (0) target = $region13
  $region12: #{bert_mlm_forward.14} parent=0 // pred_region
    _
  $region13: #{bert_mlm_forward.14} parent=0 // pred_fallthru
    _
  // Predicated region
  $region14: #{bert_mlm_forward.14} parent=0 // pred_check
    _
  $region15: #{bert_mlm_forward.14} parent=0 // pred_check_branch
    %18 = sbr.rel (0) target = $region17
  $region16: #{bert_mlm_forward.14} parent=0 // pred_region
    _
  $region17: #{bert_mlm_forward.14} parent=0 // pred_fallthru
    _
  // Predicated region
  $region18: #{bert_mlm_forward.14} parent=0 // pred_check
    _
  $region19: #{bert_mlm_forward.14} parent=0 // pred_check_branch
    %20 = sbr.rel (0) target = $region21
  $region20: #{bert_mlm_forward.14} parent=0 // pred_region
    _
  $region21: #{bert_mlm_forward.14} parent=0 // pred_fallthru
    _
  // Predicated region
  $region22: #{bert_mlm_forward.14} parent=0 // pred_check
    _
  $region23: #{bert_mlm_forward.14} parent=0 // pred_check_branch
    %22 = sbr.rel (0) target = $region25
  $region24: #{bert_mlm_forward.14} parent=0 // pred_region
    _
  $region25: #{bert_mlm_forward.14} parent=0 // pred_fallthru
    _
  %p24 = scmp.eq.s32.totalorder 0, 0
  // Predicated region
  $region26: #{bert_mlm_forward.14} parent=0 // pred_check
    %p25 = pneg %p24
  $region27: #{bert_mlm_forward.14} parent=0 // pred_check_branch
    %27 = sbr.rel (%p25) target = $region29
  $region28: #{bert_mlm_forward.14} parent=0 // pred_region
    %28 = vst [vmem:[#allocation2] sm:$0xff] 0.0
    %29 = vst [vmem:[#allocation2 + $0x8] sm:$0xff] 0.0
  $region29: #{bert_mlm_forward.14} parent=0 // pred_fallthru
    _
  %v30 = vld [vmem:[#allocation2] sm:$0xff]
  %v31 = vld [vmem:[#allocation2 + $0x8] sm:$0xff]
  %v32 = vld [vmem:[%s0] sm:$0xf]
  %v33 = vld [vmem:[%s0 + $0x4] sm:$0xf]
  %v34 = vld [vmem:[%s1] sm:$0xf]
  %v35 = vld [vmem:[%s1 + $0x4] sm:$0xf]
  %v36 = vld [vmem:[%s1 + $0x8] sm:$0xf]
  %v37 = vld [vmem:[%s1 + $0xc] sm:$0xf]
  %v38 = vld [vmem:[%s1 + $0x10] sm:$0xf]
  %v39 = vld [vmem:[%s1 + $0x14] sm:$0xf]
  %v40 = vld [vmem:[%s1 + $0x18] sm:$0xf]
  %v41 = vld [vmem:[%s1 + $0x1c] sm:$0xf]
  %v42 = vld [vmem:[%s1 + $0x20] sm:$0xf]
  %v43 = vld [vmem:[%s1 + $0x24] sm:$0xf]
  %v44 = vld [vmem:[%s1 + $0x28] sm:$0xf]
  %v45 = vld [vmem:[%s1 + $0x2c] sm:$0xf]
  %v46 = vld [vmem:[%s1 + $0x30] sm:$0xf]
  %v47 = vld [vmem:[%s1 + $0x34] sm:$0xf]
  %v48 = vld [vmem:[%s1 + $0x38] sm:$0xf]
  %v49 = vld [vmem:[%s1 + $0x3c] sm:$0xf]
  %v52 = vunpack.c.l.b16 %v32
  %v53 = vunpack.c.l.b16 %v33
  %v54 = vpack.c.b16 %v53, %v52
  %v72 = vunpack.c.l.b16 %v34
  %v73 = vunpack.c.l.b16 %v35
  %v74 = vunpack.c.l.b16 %v36
  %v75 = vunpack.c.l.b16 %v37
  %v76 = vunpack.c.l.b16 %v38
  %v77 = vunpack.c.l.b16 %v39
  %v78 = vunpack.c.l.b16 %v40
  %v79 = vunpack.c.l.b16 %v41
  %v80 = vunpack.c.l.b16 %v42
  %v81 = vunpack.c.l.b16 %v43
  %v82 = vunpack.c.l.b16 %v44
  %v83 = vunpack.c.l.b16 %v45
  %v84 = vunpack.c.l.b16 %v46
  %v85 = vunpack.c.l.b16 %v47
  %v86 = vunpack.c.l.b16 %v48
  %v87 = vunpack.c.l.b16 %v49
  %v88 = vpack.c.b16 %v73, %v72
  %v89 = vpack.c.b16 %v75, %v74
  %v90 = vpack.c.b16 %v77, %v76
  %v91 = vpack.c.b16 %v79, %v78
  %v92 = vpack.c.b16 %v81, %v80
  %v93 = vpack.c.b16 %v83, %v82
  %v94 = vpack.c.b16 %v85, %v84
  %v95 = vpack.c.b16 %v87, %v86
  %104 = vmatprep.subr.bf16.mxu0 0
  %105 = vmatpush1.bf16.msra.mxu0 %v88
  %106 = vmatprep.subr.bf16.mxu0 0
  %107 = vmatpush1.bf16.msra.mxu0 %v89
  %108 = vmatprep.subr.bf16.mxu0 0
  %109 = vmatpush1.bf16.msra.mxu0 %v90
  %110 = vmatprep.subr.bf16.mxu0 0
  %111 = vmatpush1.bf16.msra.mxu0 %v91
  %112 = vmatprep.subr.bf16.mxu0 0
  %113 = vmatpush1.bf16.msra.mxu0 %v92
  %114 = vmatprep.subr.bf16.mxu0 0
  %115 = vmatpush1.bf16.msra.mxu0 %v93
  %116 = vmatprep.subr.bf16.mxu0 0
  %117 = vmatpush1.bf16.msra.mxu0 %v94
  %118 = vmatprep.subr.bf16.mxu0 0
  %119 = vmatpush1.bf16.msra.mxu0 %v95
  %120 = vmatprep.subr.bf16.mxu0 0
  %121 = vmatpush1.bf16.msra.mxu0 0
  %122 = vmatprep.subr.bf16.mxu0 0
  %123 = vmatpush1.bf16.msra.mxu0 0
  %124 = vmatprep.subr.bf16.mxu0 0
  %125 = vmatpush1.bf16.msra.mxu0 0
  %126 = vmatprep.subr.bf16.mxu0 0
  %127 = vmatpush1.bf16.msra.mxu0 0
  %128 = vmatprep.subr.bf16.mxu0 0
  %129 = vmatpush1.bf16.msra.mxu0 0
  %130 = vmatprep.subr.bf16.mxu0 0
  %131 = vmatpush1.bf16.msra.mxu0 0
  %132 = vmatprep.subr.bf16.mxu0 0
  %133 = vmatpush1.bf16.msra.mxu0 0
  %134 = vmatprep.subr.bf16.mxu0 0
  %135 = vmatpush1.bf16.msra.mxu0 0
  %136 = vmatprep.mubr.bf16.mxu0 0
  %137 = vmatmul.mubr.bf16.gmra.mrb[0].mxu0 %v54
  %v138 = vpop.f32.mrb[0].mxu0
  %v139 = vadd.f32 0.0, %v138
  %v140 = vpop.f32.mrb[0].mxu0
  %v141 = vpop.f32.mrb[0].mxu0
  %v142 = vadd.f32 0.0, %v141
  %v143 = vpop.f32.mrb[0].mxu0
  %144 = vdwg.mxu0
  %v145 = vadd.f32 %v30, %v139
  %v146 = vadd.f32 %v31, %v142
  %147 = vst [vmem:[#allocation2] sm:$0xff] %v145
  %148 = vst [vmem:[#allocation2 + $0x8] sm:$0xff] %v146
  // Predicated region
  $region30: #{bert_mlm_forward.14} parent=0 // pred_check
    %p149 = pneg %p24
  $region31: #{bert_mlm_forward.14} parent=0 // pred_check_branch
    %151 = sbr.rel (%p149) target = $region33
  $region32: #{bert_mlm_forward.14} parent=0 // pred_region
    %v152 = vld [vmem:[#allocation2] sm:$0xff]
    %v153 = vld [vmem:[#allocation2 + $0x8] sm:$0xff]
    %v154 = vld [vmem:[%s2] sm:$0x1]
    %v156 = vlaneseq
    %v157 = vshrl.u32 %v156, 7
    %v158 = vsub.s32 0, %v157
    %v159 = vrot.slane %v154, %v158
    %v161 = vadd.f32 %v152, %v159
    %v162 = vadd.f32 %v153, %v159
    %v163 = vld [vmem:[%s3] sm:$0xf]
    %v164 = vld [vmem:[%s3 + $0x4] sm:$0xf]
    %v165 = vunpack.c.l.bf16 %v163
    %v166 = vunpack.c.l.bf16 %v164
    %v167 = vadd.f32 %v161, %v165
    %v168 = vadd.f32 %v162, %v166
    %169 = vadd.xlane.f32.xlu0 %v167
    %v170 = vpop.xlane.xlu0 %169
    %171 = vadd.xlane.f32.xlu0 %v168
    %v172 = vpop.xlane.xlu0 %171
    %v173 = vrcp.pop 128.0
    %v174 = vmul.f32 %v170, %v173
    %v175 = vmul.f32 %v172, %v173
    %v176 = vsub.f32 %v167, %v174
    %v177 = vsub.f32 %v168, %v175
    %v178 = vmul.f32 %v176, %v176
    %v179 = vmul.f32 %v177, %v177
    %180 = vadd.xlane.f32.xlu0 %v178
    %v181 = vpop.xlane.xlu0 %180
    %182 = vadd.xlane.f32.xlu0 %v179
    %v183 = vpop.xlane.xlu0 %182
    %v184 = vmul.f32 %v181, %v173
    %v185 = vmul.f32 %v183, %v173
    %v186 = vadd.f32 %v184, 1e-12
    %v187 = vadd.f32 %v185, 1e-12
    %v188 = vrsqrt.pop %v186
    %v189 = vrsqrt.pop %v187
    %v190 = vmul.f32 %v176, %v188
    %v191 = vmul.f32 %v177, %v189
    %v192 = vld [vmem:[%s4] sm:$0x1]
    %v194 = vlaneseq
    %v195 = vshrl.u32 %v194, 7
    %v196 = vsub.s32 0, %v195
    %v197 = vrot.slane %v192, %v196
    %v199 = vmul.f32 %v190, %v197
    %v200 = vmul.f32 %v191, %v197
    %v201 = vld [vmem:[%s5] sm:$0x1]
    %v203 = vlaneseq
    %v204 = vshrl.u32 %v203, 7
    %v205 = vsub.s32 0, %v204
    %v206 = vrot.slane %v201, %v205
    %v208 = vadd.f32 %v199, %v206
    %v209 = vadd.f32 %v200, %v206
    %v210 = vpack.c.bf16 %v209, %v208
    %v212 = vunpack.c.l.b16 %v210
    %v213 = vunpack.c.h.b16 %v210
    %v214 = vpack.c.b16 %v212, %v212
    %v215 = vpack.c.b16 %v213, %v213
    %218 = vst [vmem:[%s6] sm:$0xf] %v214
    %219 = vst [vmem:[%s6 + $0x4] sm:$0xf] %v215
  $region33: #{bert_mlm_forward.14} parent=0 // pred_fallthru
    _
  // Predicated region
  $region34: #{bert_mlm_forward.14} parent=0 // pred_check
    _
  $region35: #{bert_mlm_forward.14} parent=0 // pred_check_branch
    %221 = sbr.rel (0) target = $region37
  $region36: #{bert_mlm_forward.14} parent=0 // pred_region
    _
  $region37: #{bert_mlm_forward.14} parent=0 // pred_fallthru
    _
  // Predicated region
  $region38: #{bert_mlm_forward.14} parent=0 // pred_check
    _
  $region39: #{bert_mlm_forward.14} parent=0 // pred_check_branch
    %223 = sbr.rel (0) target = $region41
  $region40: #{bert_mlm_forward.14} parent=0 // pred_region
    _
  $region41: #{bert_mlm_forward.14} parent=0 // pred_fallthru
    _

// kernel: bert_mlm_forward.13
$region0: #{bert_mlm_forward.13}
  #allocation0 [shape = 'u32[]', space=smem, size = 0x4, offset = 0x4, fixed_abs, tag = 'smem constant byte address 0x4 - core index']
  #allocation1 [shape = 'u32[144,128]{1,0:T(1,128)}', space=vmem, size = 0x12000, scoped, tag = 'internal scratch']
  %s0 = inlined_call_operand.vmem [shape: bf16[16,384], index: 0, kind: input, shape index: {}, may-alias: {0,1,2}]
  %s1 = inlined_call_operand.vmem [shape: bf16[16,384], index: 1, kind: input, shape index: {}, may-alias: {0,1,2}]
  %s2 = inlined_call_operand.vmem [shape: bf16[16,384], index: 2, kind: input, shape index: {}, may-alias: {0,1,2}]
  %s3 = inlined_call_operand.vmem [shape: f32[2,1,8], index: 3, kind: input, shape index: {}]
  %s4 = inlined_call_operand.vmem [shape: bf16[16,128], index: 4, kind: output, shape index: {}]
  %s5 = sld [smem:[#allocation0]]
  $region49: #{bert_mlm_forward.13} parent=0
    _
  %s7 = ssub.s32 1, %s5
  %s8 = scalar_select 0, %s7, %s5
  loop: start=0, step=1, limit=4
  $region2: #{bert_mlm_forward.13} parent=0 // loop_pre_header
    _
  $region3: #{bert_mlm_forward.13} parent=0 // loop_header
    %s10 = sphi 0, %s14
    %p11 = scmp.ge.s32.totalorder %s10, 4
    %s17 = sphi 0, %s29
    %s18 = sphi 0, %s25
    %s19 = sphi 0, %s17
    %s20 = sphi 0, %s18
    %s21 = sphi 0, %s19
    %s22 = sphi 0, %s20
    %s34 = sphi 0, %s36
    %s37 = sphi 0, %s34
    %s38 = sphi 0, %s37
    %s54 = sphi 0, %s38
    %s64 = sphi 0, %s66
    %s67 = sphi 0, %s64
    %s68 = sphi 0, %s67
    %s84 = sphi 0, %s68
    %s94 = sphi 0, %s96
    %s97 = sphi 0, %s94
    %s98 = sphi 0, %s97
    %s114 = sphi 0, %s98
    %s120 = sphi 0, %s122
    %s123 = sphi 0, %s120
    %s124 = sphi 0, %s123
    %s140 = sphi 0, %s124
    %s148 = sphi 0, %s150
    %s151 = sphi 0, %s148
    %s152 = sphi 0, %s151
    %s168 = sphi 0, %s152
  $region4: #{bert_mlm_forward.13} parent=0 // loop_header_branch
    %13 = sbr.rel (%p11) target = $region8
  $region5: #{bert_mlm_forward.13} parent=0 // loop_body
    %s15 = ssub.s32 %s10, 1
    %s16 = ssub.s32 %s10, 2
    %s23 = sadd.s32 1, %s18
    %p24 = scmp.ge.s32.totalorder %s23, 1
    %s25 = scalar_select %p24, 0, %s23
    %s26 = sadd.s32 1, %s17
    %s27 = scalar_select %p24, %s26, %s17
    %p28 = scmp.ge.s32.totalorder %s27, 2
    %s29 = scalar_select %p28, 0, %s27
    %s30 = ssub.s32 %s17, %s29
    %s31 = ssub.s32 %s18, %s25
    %s32 = sor.u32 %s30, %s31
    %p33 = scmp.eq.s32.totalorder %s32, 0
    %s35 = sadd.s32 %s34, 1
    %s36 = scalar_select %p33, %s34, %s35
    %p39 = pneg %p33
    %p40 = scmp.eq.s32.totalorder %s10, 1
    %p41 = por %p39, %p40
    %p42 = scmp.ne.s32.totalorder %s34, %s37
    %p43 = scmp.eq.s32.totalorder %s10, 0
    %p44 = por %p42, %p43
    %p45 = scmp.ne.s32.totalorder %s34, %s37
    %p46 = scmp.eq.s32.totalorder %s15, 1
    %p47 = por %p45, %p46
    %p48 = scmp.ne.s32.totalorder %s37, %s38
    %p49 = scmp.eq.s32.totalorder %s15, 0
    %p50 = por %p48, %p49
    %p51 = scmp.ne.s32.totalorder %s37, %s38
    %p52 = scmp.eq.s32.totalorder %s16, 1
    %p53 = por %p51, %p52
    %p55 = scmp.ne.s32.totalorder %s38, %s54
    %p56 = scmp.eq.s32.totalorder %s16, 0
    %p57 = por %p55, %p56
    %s58 = sadd.s32 %s18, 1
    %s59 = sadd.s32 %s25, 1
    %s60 = ssub.s32 %s17, %s29
    %s61 = ssub.s32 %s58, %s59
    %s62 = sor.u32 %s60, %s61
    %p63 = scmp.eq.s32.totalorder %s62, 0
    %s65 = sadd.s32 %s64, 1
    %s66 = scalar_select %p63, %s64, %s65
    %p69 = pneg %p63
    %p70 = scmp.eq.s32.totalorder %s10, 1
    %p71 = por %p69, %p70
    %p72 = scmp.ne.s32.totalorder %s64, %s67
    %p73 = scmp.eq.s32.totalorder %s10, 0
    %p74 = por %p72, %p73
    %p75 = scmp.ne.s32.totalorder %s64, %s67
    %p76 = scmp.eq.s32.totalorder %s15, 1
    %p77 = por %p75, %p76
    %p78 = scmp.ne.s32.totalorder %s67, %s68
    %p79 = scmp.eq.s32.totalorder %s15, 0
    %p80 = por %p78, %p79
    %p81 = scmp.ne.s32.totalorder %s67, %s68
    %p82 = scmp.eq.s32.totalorder %s16, 1
    %p83 = por %p81, %p82
    %p85 = scmp.ne.s32.totalorder %s68, %s84
    %p86 = scmp.eq.s32.totalorder %s16, 0
    %p87 = por %p85, %p86
    %s88 = sadd.s32 %s18, 2
    %s89 = sadd.s32 %s25, 2
    %s90 = ssub.s32 %s17, %s29
    %s91 = ssub.s32 %s88, %s89
    %s92 = sor.u32 %s90, %s91
    %p93 = scmp.eq.s32.totalorder %s92, 0
    %s95 = sadd.s32 %s94, 1
    %s96 = scalar_select %p93, %s94, %s95
    %p99 = pneg %p93
    %p100 = scmp.eq.s32.totalorder %s10, 1
    %p101 = por %p99, %p100
    %p102 = scmp.ne.s32.totalorder %s94, %s97
    %p103 = scmp.eq.s32.totalorder %s10, 0
    %p104 = por %p102, %p103
    %p105 = scmp.ne.s32.totalorder %s94, %s97
    %p106 = scmp.eq.s32.totalorder %s15, 1
    %p107 = por %p105, %p106
    %p108 = scmp.ne.s32.totalorder %s97, %s98
    %p109 = scmp.eq.s32.totalorder %s15, 0
    %p110 = por %p108, %p109
    %p111 = scmp.ne.s32.totalorder %s97, %s98
    %p112 = scmp.eq.s32.totalorder %s16, 1
    %p113 = por %p111, %p112
    %p115 = scmp.ne.s32.totalorder %s98, %s114
    %p116 = scmp.eq.s32.totalorder %s16, 0
    %p117 = por %p115, %p116
    %s118 = ssub.s32 %s17, %s29
    %p119 = scmp.eq.s32.totalorder %s118, 0
    %s121 = sadd.s32 %s120, 1
    %s122 = scalar_select %p119, %s120, %s121
    %p125 = pneg %p119
    %p126 = scmp.eq.s32.totalorder %s10, 1
    %p127 = por %p125, %p126
    %p128 = scmp.ne.s32.totalorder %s120, %s123
    %p129 = scmp.eq.s32.totalorder %s10, 0
    %p130 = por %p128, %p129
    %p131 = scmp.ne.s32.totalorder %s120, %s123
    %p132 = scmp.eq.s32.totalorder %s15, 1
    %p133 = por %p131, %p132
    %p134 = scmp.ne.s32.totalorder %s123, %s124
    %p135 = scmp.eq.s32.totalorder %s15, 0
    %p136 = por %p134, %p135
    %p137 = scmp.ne.s32.totalorder %s123, %s124
    %p138 = scmp.eq.s32.totalorder %s16, 1
    %p139 = por %p137, %p138
    %p141 = scmp.ne.s32.totalorder %s124, %s140
    %p142 = scmp.eq.s32.totalorder %s16, 0
    %p143 = por %p141, %p142
    %s144 = ssub.s32 %s17, %s29
    %s145 = ssub.s32 %s18, %s25
    %s146 = sor.u32 %s144, %s145
    %p147 = scmp.eq.s32.totalorder %s146, 0
    %s149 = sadd.s32 %s148, 1
    %s150 = scalar_select %p147, %s148, %s149
    %p153 = pneg %p147
    %p154 = scmp.eq.s32.totalorder %s10, 1
    %p155 = por %p153, %p154
    %p156 = scmp.ne.s32.totalorder %s148, %s151
    %p157 = scmp.eq.s32.totalorder %s10, 0
    %p158 = por %p156, %p157
    %p159 = scmp.ne.s32.totalorder %s148, %s151
    %p160 = scmp.eq.s32.totalorder %s15, 1
    %p161 = por %p159, %p160
    %p162 = scmp.ne.s32.totalorder %s151, %s152
    %p163 = scmp.eq.s32.totalorder %s15, 0
    %p164 = por %p162, %p163
    %p165 = scmp.ne.s32.totalorder %s151, %s152
    %p166 = scmp.eq.s32.totalorder %s16, 1
    %p167 = por %p165, %p166
    %p169 = scmp.ne.s32.totalorder %s152, %s168
    %p170 = scmp.eq.s32.totalorder %s16, 0
    %p171 = por %p169, %p170
    %p172 = scmp.le.s32.totalorder 1, %s10
    %p173 = scmp.lt.s32.totalorder %s10, 3
    %p174 = pnand %p172, %p173
    %p175 = pneg %p174
    // Predicated region
    $region9: #{bert_mlm_forward.13} parent=5 // pred_check
      _
    $region10: #{bert_mlm_forward.13} parent=5 // pred_check_branch
      %177 = sbr.rel (%p174) target = $region12
    $region11: #{bert_mlm_forward.13} parent=5 // pred_region
      %s178 = ssub.s32 %s10, 1
    $region12: #{bert_mlm_forward.13} parent=5 // pred_fallthru
      _
    %p179 = scmp.lt.s32.totalorder %s10, 2
    // Predicated region
    $region13: #{bert_mlm_forward.13} parent=5 // pred_check
      %p180 = pneg %p179
    $region14: #{bert_mlm_forward.13} parent=5 // pred_check_branch
      %182 = sbr.rel (%p180) target = $region16
    $region15: #{bert_mlm_forward.13} parent=5 // pred_region
      // Predicated region
      $region17: #{bert_mlm_forward.13} parent=15 // pred_check
        %p183 = pneg %p44
      $region18: #{bert_mlm_forward.13} parent=15 // pred_check_branch
        %185 = sbr.rel (%p183) target = $region20
      $region19: #{bert_mlm_forward.13} parent=15 // pred_region
        %p186 = scmp.lt.s32.totalorder %s17, 1
        %s187 = scalar_select %p186, %s17, 1
        %p188 = scmp.lt.s32.totalorder %s18, 2
        %s189 = scalar_select %p188, %s18, 2
        %s190 = smul.addr %s187, 3
        %s191 = sadd.s32 %s189, %s190
        %s192 = smul.addr %s191, 4
        %s193 = scalar_lea.vmem %s0, %s192
      $region20: #{bert_mlm_forward.13} parent=15 // pred_fallthru
        _
      // Predicated region
      $region21: #{bert_mlm_forward.13} parent=15 // pred_check
        %p194 = pneg %p74
      $region22: #{bert_mlm_forward.13} parent=15 // pred_check_branch
        %196 = sbr.rel (%p194) target = $region24
      $region23: #{bert_mlm_forward.13} parent=15 // pred_region
        %s197 = sadd.s32 %s18, 1
        %p198 = scmp.lt.s32.totalorder %s17, 1
        %s199 = scalar_select %p198, %s17, 1
        %p200 = scmp.lt.s32.totalorder %s197, 2
        %s201 = scalar_select %p200, %s197, 2
        %s202 = smul.addr %s199, 3
        %s203 = sadd.s32 %s201, %s202
        %s204 = smul.addr %s203, 4
        %s205 = scalar_lea.vmem %s1, %s204
        %s206 = sadd.s32 %s18, 1
      $region24: #{bert_mlm_forward.13} parent=15 // pred_fallthru
        _
      // Predicated region
      $region25: #{bert_mlm_forward.13} parent=15 // pred_check
        %p207 = pneg %p104
      $region26: #{bert_mlm_forward.13} parent=15 // pred_check_branch
        %209 = sbr.rel (%p207) target = $region28
      $region27: #{bert_mlm_forward.13} parent=15 // pred_region
        %s210 = sadd.s32 %s18, 2
        %p211 = scmp.lt.s32.totalorder %s17, 1
        %s212 = scalar_select %p211, %s17, 1
        %p213 = scmp.lt.s32.totalorder %s210, 2
        %s214 = scalar_select %p213, %s210, 2
        %s215 = smul.addr %s212, 3
        %s216 = sadd.s32 %s214, %s215
        %s217 = smul.addr %s216, 4
        %s218 = scalar_lea.vmem %s2, %s217
        %s219 = sadd.s32 %s18, 2
      $region28: #{bert_mlm_forward.13} parent=15 // pred_fallthru
        _
      // Predicated region
      $region29: #{bert_mlm_forward.13} parent=15 // pred_check
        %p220 = pneg %p130
      $region30: #{bert_mlm_forward.13} parent=15 // pred_check_branch
        %222 = sbr.rel (%p220) target = $region32
      $region31: #{bert_mlm_forward.13} parent=15 // pred_region
        %p223 = scmp.lt.s32.totalorder %s17, 1
        %s224 = scalar_select %p223, %s17, 1
        %s225 = scalar_lea.vmem %s3, %s224
      $region32: #{bert_mlm_forward.13} parent=15 // pred_fallthru
        _
    $region16: #{bert_mlm_forward.13} parent=5 // pred_fallthru
      _
    %p226 = scmp.le.s32.totalorder 1, %s10
    %p227 = scmp.lt.s32.totalorder %s10, 3
    %p228 = pnand %p226, %p227
    %p229 = pneg %p228
    // Predicated region
    $region33: #{bert_mlm_forward.13} parent=5 // pred_check
      _
    $region34: #{bert_mlm_forward.13} parent=5 // pred_check_branch
      %231 = sbr.rel (%p228) target = $region36
    $region35: #{bert_mlm_forward.13} parent=5 // pred_region
      %s232 = ssub.s32 %s10, 1
      %p233 = scmp.lt.s32.totalorder %s19, 1
      %s234 = scalar_select %p233, %s19, 1
      %p235 = scmp.lt.s32.totalorder %s20, 2
      %s236 = scalar_select %p235, %s20, 2
      %s237 = smul.addr %s234, 3
      %s238 = sadd.s32 %s236, %s237
      %s239 = smul.addr %s238, 4
      %s240 = scalar_lea.vmem %s0, %s239
      %p241 = pneg %p50
      %p242 = pneg %p47
      %s243 = sadd.s32 %s20, 1
      %p244 = scmp.lt.s32.totalorder %s19, 1
      %s245 = scalar_select %p244, %s19, 1
      %p246 = scmp.lt.s32.totalorder %s243, 2
      %s247 = scalar_select %p246, %s243, 2
      %s248 = smul.addr %s245, 3
      %s249 = sadd.s32 %s247, %s248
      %s250 = smul.addr %s249, 4
      %s251 = scalar_lea.vmem %s1, %s250
      %p252 = pneg %p80
      %p253 = pneg %p77
      %s254 = sadd.s32 %s20, 2
      %p255 = scmp.lt.s32.totalorder %s19, 1
      %s256 = scalar_select %p255, %s19, 1
      %p257 = scmp.lt.s32.totalorder %s254, 2
      %s258 = scalar_select %p257, %s254, 2
      %s259 = smul.addr %s256, 3
      %s260 = sadd.s32 %s258, %s259
      %s261 = smul.addr %s260, 4
      %s262 = scalar_lea.vmem %s2, %s261
      %p263 = pneg %p110
      %p264 = pneg %p107
      %p265 = scmp.lt.s32.totalorder %s19, 1
      %s266 = scalar_select %p265, %s19, 1
      %s267 = scalar_lea.vmem %s3, %s266
      %p268 = pneg %p136
      %p269 = pneg %p133
      %p270 = pneg %p164
      %p271 = pneg %p161
      %p272 = scmp.lt.s32.totalorder %s19, 1
      %s273 = scalar_select %p272, %s19, 1
      %p274 = scmp.lt.s32.totalorder %s20, 0
      %s275 = scalar_select %p274, %s20, 0
      %s276 = sadd.s32 %s275, %s273
      %s277 = smul.addr %s276, 4
      %s278 = scalar_lea.vmem %s4, %s277
      %p279 = scmp.lt.s32.totalorder %s19, 1
      %s280 = scalar_select %p279, %s19, 1
      %p281 = scmp.lt.s32.totalorder %s20, 2
      %s282 = scalar_select %p281, %s20, 2
      %s283 = smul.addr %s280, 3
      %s284 = sadd.s32 %s282, %s283
      %s285 = smul.addr %s284, 4
      %s286 = scalar_lea.vmem %s0, %s285
      %s287 = sadd.s32 %s20, 1
      %p288 = scmp.lt.s32.totalorder %s19, 1
      %s289 = scalar_select %p288, %s19, 1
      %p290 = scmp.lt.s32.totalorder %s287, 2
      %s291 = scalar_select %p290, %s287, 2
      %s292 = smul.addr %s289, 3
      %s293 = sadd.s32 %s291, %s292
      %s294 = smul.addr %s293, 4
      %s295 = scalar_lea.vmem %s1, %s294
      %s296 = sadd.s32 %s20, 1
      %s297 = sadd.s32 %s20, 2
      %p298 = scmp.lt.s32.totalorder %s19, 1
      %s299 = scalar_select %p298, %s19, 1
      %p300 = scmp.lt.s32.totalorder %s297, 2
      %s301 = scalar_select %p300, %s297, 2
      %s302 = smul.addr %s299, 3
      %s303 = sadd.s32 %s301, %s302
      %s304 = smul.addr %s303, 4
      %s305 = scalar_lea.vmem %s2, %s304
      %s306 = sadd.s32 %s20, 2
      %p307 = scmp.lt.s32.totalorder %s19, 1
      %s308 = scalar_select %p307, %s19, 1
      %s309 = scalar_lea.vmem %s3, %s308
      %p310 = scmp.lt.s32.totalorder %s19, 1
      %s311 = scalar_select %p310, %s19, 1
      %p312 = scmp.lt.s32.totalorder %s20, 0
      %s313 = scalar_select %p312, %s20, 0
      %s314 = sadd.s32 %s313, %s311
      %s315 = smul.addr %s314, 4
      %s316 = scalar_lea.vmem %s4, %s315
      %v318 = vld [vmem:[%s309] sm:$0x1]
      %v319 = vsub.f32 %v318, 1.0
      %v320 = vmul.f32 %v319, 1e+09
      %v321 = vld [vmem:[%s286] sm:$0xf]
      %v322 = vld [vmem:[%s295] sm:$0xf]
      %v323 = vld [vmem:[%s305] sm:$0xf]
      %v325 = vlaneseq
      %v326 = vshrl.u32 %v325, 7
      %v327 = vsub.s32 0, %v326
      %v328 = vrot.slane %v320, %v327
      %vm330 = vcmask 261120
      %v332 = vsel %vm330, %v321, 0
      %v335 = vsel %vm330, %v322, 0
      %337 = vmatprep.subr.bf16.mxu0 0
      %338 = vmatpush1.bf16.xpose.msra.mxu0 %v335
      %339 = vmatprep.subr.bf16.mxu0 0
      %340 = vmatpush1.bf16.xpose.msra.mxu0 0
      %341 = vmatprep.subr.bf16.mxu0 0
      %342 = vmatpush1.bf16.xpose.msra.mxu0 0
      %343 = vmatprep.subr.bf16.mxu0 0
      %344 = vmatpush1.bf16.xpose.msra.mxu0 0
      %345 = vmatprep.subr.bf16.mxu0 0
      %346 = vmatpush1.bf16.xpose.msra.mxu0 0
      %347 = vmatprep.subr.bf16.mxu0 0
      %348 = vmatpush1.bf16.xpose.msra.mxu0 0
      %349 = vmatprep.subr.bf16.mxu0 0
      %350 = vmatpush1.bf16.xpose.msra.mxu0 0
      %351 = vmatprep.subr.bf16.mxu0 0
      %352 = vmatpush1.bf16.xpose.msra.mxu0 0
      %353 = vmatprep.subr.bf16.mxu0 0
      %354 = vmatpush1.bf16.xpose.msra.mxu0 0
      %355 = vmatprep.subr.bf16.mxu0 0
      %356 = vmatpush1.bf16.xpose.msra.mxu0 0
      %357 = vmatprep.subr.bf16.mxu0 0
      %358 = vmatpush1.bf16.xpose.msra.mxu0 0
      %359 = vmatprep.subr.bf16.mxu0 0
      %360 = vmatpush1.bf16.xpose.msra.mxu0 0
      %361 = vmatprep.subr.bf16.mxu0 0
      %362 = vmatpush1.bf16.xpose.msra.mxu0 0
      %363 = vmatprep.subr.bf16.mxu0 0
      %364 = vmatpush1.bf16.xpose.msra.mxu0 0
      %365 = vmatprep.subr.bf16.mxu0 0
      %366 = vmatpush1.bf16.xpose.msra.mxu0 0
      %367 = vmatprep.subr.bf16.mxu0 0
      %368 = vmatpush1.bf16.xpose.msra.mxu0 0
      %369 = vmatprep.mubr.bf16.mxu0 0
      %370 = vmatmul.mubr.bf16.gmra.mrb[0].mxu0 %v332
      %v371 = vpop.f32.mrb[0].mxu0
      %v372 = vadd.f32 %v328, %v371
      %v373 = vpop.f32.mrb[0].mxu0
      %v374 = vpop.f32.mrb[0].mxu0
      %v375 = vpop.f32.mrb[0].mxu0
      %376 = vdwg.mxu0
      %vm377 = vcmask 64512
      %v378 = vsel %vm377, %v372, -inf
      %379 = vmax.xlane.f32.xlu0 %v378
      %v380 = vpop.xlane.xlu0 %379
      %v381 = vsub.f32 %v372, %v380
      %v382 = vmul.f32 %v381, 1.442695
      %v383 = vpow.pop %v382
      %v384 = vsel %vm377, %v383, 0.0
      %385 = vadd.xlane.f32.xlu0 %v384
      %v386 = vpop.xlane.xlu0 %385
      %v387 = vrcp.pop %v386
      %v388 = vmul.f32 %v383, %v387
      %v389 = vpack.c.bf16 %v388, %v388
      %v391 = vsel %vm377, %v389, 0
      %vm393 = vcmask 1043456
      %v395 = vsel %vm393, %v323, 0
      %397 = vmatprep.subr.bf16.mxu0 0
      %398 = vmatpush1.bf16.msra.mxu0 %v395
      %399 = vmatprep.subr.bf16.mxu0 0
      %400 = vmatpush1.bf16.msra.mxu0 0
      %401 = vmatprep.subr.bf16.mxu0 0
      %402 = vmatpush1.bf16.msra.mxu0 0
      %403 = vmatprep.subr.bf16.mxu0 0
      %404 = vmatpush1.bf16.msra.mxu0 0
      %405 = vmatprep.subr.bf16.mxu0 0
      %406 = vmatpush1.bf16.msra.mxu0 0
      %407 = vmatprep.subr.bf16.mxu0 0
      %408 = vmatpush1.bf16.msra.mxu0 0
      %409 = vmatprep.subr.bf16.mxu0 0
      %410 = vmatpush1.bf16.msra.mxu0 0
      %411 = vmatprep.subr.bf16.mxu0 0
      %412 = vmatpush1.bf16.msra.mxu0 0
      %413 = vmatprep.subr.bf16.mxu0 0
      %414 = vmatpush1.bf16.msra.mxu0 0
      %415 = vmatprep.subr.bf16.mxu0 0
      %416 = vmatpush1.bf16.msra.mxu0 0
      %417 = vmatprep.subr.bf16.mxu0 0
      %418 = vmatpush1.bf16.msra.mxu0 0
      %419 = vmatprep.subr.bf16.mxu0 0
      %420 = vmatpush1.bf16.msra.mxu0 0
      %421 = vmatprep.subr.bf16.mxu0 0
      %422 = vmatpush1.bf16.msra.mxu0 0
      %423 = vmatprep.subr.bf16.mxu0 0
      %424 = vmatpush1.bf16.msra.mxu0 0
      %425 = vmatprep.subr.bf16.mxu0 0
      %426 = vmatpush1.bf16.msra.mxu0 0
      %427 = vmatprep.subr.bf16.mxu0 0
      %428 = vmatpush1.bf16.msra.mxu0 0
      %429 = vmatprep.mubr.bf16.mxu0 0
      %430 = vmatmul.mubr.bf16.gmra.mrb[0].mxu0 %v391
      %v431 = vpop.f32.mrb[0].mxu0
      %v432 = vadd.f32 0.0, %v431
      %v433 = vpop.f32.mrb[0].mxu0
      %v434 = vpop.f32.mrb[0].mxu0
      %v435 = vpop.f32.mrb[0].mxu0
      %436 = vdwg.mxu0
      %v438 = vunpack.c.l.b16 %v321
      %v439 = vpack.c.b16 %v438, %v438
      %440 = vrot.lane.b32.xlu0 %v439, 96
      %v441 = vpop.permute.xlu0 %440
      %v443 = vunpack.c.l.b16 %v322
      %v444 = vpack.c.b16 %v443, %v443
      %445 = vrot.lane.b32.xlu0 %v444, 96
      %v446 = vpop.permute.xlu0 %445
      %v448 = vsel %vm330, %v441, 0
      %v451 = vsel %vm330, %v446, 0
      %453 = vmatprep.subr.bf16.mxu0 0
      %454 = vmatpush1.bf16.xpose.msra.mxu0 %v451
      %455 = vmatprep.subr.bf16.mxu0 0
      %456 = vmatpush1.bf16.xpose.msra.mxu0 0
      %457 = vmatprep.subr.bf16.mxu0 0
      %458 = vmatpush1.bf16.xpose.msra.mxu0 0
      %459 = vmatprep.subr.bf16.mxu0 0
      %460 = vmatpush1.bf16.xpose.msra.mxu0 0
      %461 = vmatprep.subr.bf16.mxu0 0
      %462 = vmatpush1.bf16.xpose.msra.mxu0 0
      %463 = vmatprep.subr.bf16.mxu0 0
      %464 = vmatpush1.bf16.xpose.msra.mxu0 0
      %465 = vmatprep.subr.bf16.mxu0 0
      %466 = vmatpush1.bf16.xpose.msra.mxu0 0
      %467 = vmatprep.subr.bf16.mxu0 0
      %468 = vmatpush1.bf16.xpose.msra.mxu0 0
      %469 = vmatprep.subr.bf16.mxu0 0
      %470 = vmatpush1.bf16.xpose.msra.mxu0 0
      %471 = vmatprep.subr.bf16.mxu0 0
      %472 = vmatpush1.bf16.xpose.msra.mxu0 0
      %473 = vmatprep.subr.bf16.mxu0 0
      %474 = vmatpush1.bf16.xpose.msra.mxu0 0
      %475 = vmatprep.subr.bf16.mxu0 0
      %476 = vmatpush1.bf16.xpose.msra.mxu0 0
      %477 = vmatprep.subr.bf16.mxu0 0
      %478 = vmatpush1.bf16.xpose.msra.mxu0 0
      %479 = vmatprep.subr.bf16.mxu0 0
      %480 = vmatpush1.bf16.xpose.msra.mxu0 0
      %481 = vmatprep.subr.bf16.mxu0 0
      %482 = vmatpush1.bf16.xpose.msra.mxu0 0
      %483 = vmatprep.subr.bf16.mxu0 0
      %484 = vmatpush1.bf16.xpose.msra.mxu0 0
      %485 = vmatprep.mubr.bf16.mxu0 0
      %486 = vmatmul.mubr.bf16.gmra.mrb[0].mxu0 %v448
      %v487 = vpop.f32.mrb[0].mxu0
      %v488 = vadd.f32 %v328, %v487
      %v489 = vpop.f32.mrb[0].mxu0
      %v490 = vpop.f32.mrb[0].mxu0
      %v491 = vpop.f32.mrb[0].mxu0
      %492 = vdwg.mxu0
      %v493 = vsel %vm377, %v488, -inf
      %494 = vmax.xlane.f32.xlu0 %v493
      %v495 = vpop.xlane.xlu0 %494
      %v496 = vsub.f32 %v488, %v495
      %v497 = vmul.f32 %v496, 1.442695
      %v498 = vpow.pop %v497
      %v499 = vsel %vm377, %v498, 0.0
      %500 = vadd.xlane.f32.xlu0 %v499
      %v501 = vpop.xlane.xlu0 %500
      %v502 = vrcp.pop %v501
      %v503 = vmul.f32 %v498, %v502
      %v504 = vpack.c.bf16 %v503, %v503
      %v506 = vunpack.c.l.b16 %v323
      %v507 = vpack.c.b16 %v506, %v506
      %508 = vrot.lane.b32.xlu0 %v507, 96
      %v509 = vpop.permute.xlu0 %508
      %v511 = vsel %vm377, %v504, 0
      %v514 = vsel %vm393, %v509, 0
      %516 = vmatprep.subr.bf16.mxu0 0
      %517 = vmatpush1.bf16.msra.mxu0 %v514
      %518 = vmatprep.subr.bf16.mxu0 0
      %519 = vmatpush1.bf16.msra.mxu0 0
      %520 = vmatprep.subr.bf16.mxu0 0
      %521 = vmatpush1.bf16.msra.mxu0 0
      %522 = vmatprep.subr.bf16.mxu0 0
      %523 = vmatpush1.bf16.msra.mxu0 0
      %524 = vmatprep.subr.bf16.mxu0 0
      %525 = vmatpush1.bf16.msra.mxu0 0
      %526 = vmatprep.subr.bf16.mxu0 0
      %527 = vmatpush1.bf16.msra.mxu0 0
      %528 = vmatprep.subr.bf16.mxu0 0
      %529 = vmatpush1.bf16.msra.mxu0 0
      %530 = vmatprep.subr.bf16.mxu0 0
      %531 = vmatpush1.bf16.msra.mxu0 0
      %532 = vmatprep.subr.bf16.mxu0 0
      %533 = vmatpush1.bf16.msra.mxu0 0
      %534 = vmatprep.subr.bf16.mxu0 0
      %535 = vmatpush1.bf16.msra.mxu0 0
      %536 = vmatprep.subr.bf16.mxu0 0
      %537 = vmatpush1.bf16.msra.mxu0 0
      %538 = vmatprep.subr.bf16.mxu0 0
      %539 = vmatpush1.bf16.msra.mxu0 0
      %540 = vmatprep.subr.bf16.mxu0 0
      %541 = vmatpush1.bf16.msra.mxu0 0
      %542 = vmatprep.subr.bf16.mxu0 0
      %543 = vmatpush1.bf16.msra.mxu0 0
      %544 = vmatprep.subr.bf16.mxu0 0
      %545 = vmatpush1.bf16.msra.mxu0 0
      %546 = vmatprep.subr.bf16.mxu0 0
      %547 = vmatpush1.bf16.msra.mxu0 0
      %548 = vmatprep.mubr.bf16.mxu0 0
      %549 = vmatmul.mubr.bf16.gmra.mrb[0].mxu0 %v511
      %v550 = vpop.f32.mrb[0].mxu0
      %v551 = vadd.f32 0.0, %v550
      %v552 = vpop.f32.mrb[0].mxu0
      %v553 = vpop.f32.mrb[0].mxu0
      %v554 = vpop.f32.mrb[0].mxu0
      %555 = vdwg.mxu0
      %556 = vrot.lane.b32.xlu0 %v439, 64
      %v557 = vpop.permute.xlu0 %556
      %558 = vrot.lane.b32.xlu0 %v444, 64
      %v559 = vpop.permute.xlu0 %558
      %v561 = vsel %vm330, %v557, 0
      %v564 = vsel %vm330, %v559, 0
      %566 = vmatprep.subr.bf16.mxu0 0
      %567 = vmatpush1.bf16.xpose.msra.mxu0 %v564
      %568 = vmatprep.subr.bf16.mxu0 0
      %569 = vmatpush1.bf16.xpose.msra.mxu0 0
      %570 = vmatprep.subr.bf16.mxu0 0
      %571 = vmatpush1.bf16.xpose.msra.mxu0 0
      %572 = vmatprep.subr.bf16.mxu0 0
      %573 = vmatpush1.bf16.xpose.msra.mxu0 0
      %574 = vmatprep.subr.bf16.mxu0 0
      %575 = vmatpush1.bf16.xpose.msra.mxu0 0
      %576 = vmatprep.subr.bf16.mxu0 0
      %577 = vmatpush1.bf16.xpose.msra.mxu0 0
      %578 = vmatprep.subr.bf16.mxu0 0
      %579 = vmatpush1.bf16.xpose.msra.mxu0 0
      %580 = vmatprep.subr.bf16.mxu0 0
      %581 = vmatpush1.bf16.xpose.msra.mxu0 0
      %582 = vmatprep.subr.bf16.mxu0 0
      %583 = vmatpush1.bf16.xpose.msra.mxu0 0
      %584 = vmatprep.subr.bf16.mxu0 0
      %585 = vmatpush1.bf16.xpose.msra.mxu0 0
      %586 = vmatprep.subr.bf16.mxu0 0
      %587 = vmatpush1.bf16.xpose.msra.mxu0 0
      %588 = vmatprep.subr.bf16.mxu0 0
      %589 = vmatpush1.bf16.xpose.msra.mxu0 0
      %590 = vmatprep.subr.bf16.mxu0 0
      %591 = vmatpush1.bf16.xpose.msra.mxu0 0
      %592 = vmatprep.subr.bf16.mxu0 0
      %593 = vmatpush1.bf16.xpose.msra.mxu0 0
      %594 = vmatprep.subr.bf16.mxu0 0
      %595 = vmatpush1.bf16.xpose.msra.mxu0 0
      %596 = vmatprep.subr.bf16.mxu0 0
      %597 = vmatpush1.bf16.xpose.msra.mxu0 0
      %598 = vmatprep.mubr.bf16.mxu0 0
      %599 = vmatmul.mubr.bf16.gmra.mrb[0].mxu0 %v561
      %v600 = vpop.f32.mrb[0].mxu0
      %v601 = vadd.f32 %v328, %v600
      %v602 = vpop.f32.mrb[0].mxu0
      %v603 = vpop.f32.mrb[0].mxu0
      %v604 = vpop.f32.mrb[0].mxu0
      %605 = vdwg.mxu0
      %v606 = vsel %vm377, %v601, -inf
      %607 = vmax.xlane.f32.xlu0 %v606
      %v608 = vpop.xlane.xlu0 %607
      %v609 = vsub.f32 %v601, %v608
      %v610 = vmul.f32 %v609, 1.442695
      %v611 = vpow.pop %v610
      %v612 = vsel %vm377, %v611, 0.0
      %613 = vadd.xlane.f32.xlu0 %v612
      %v614 = vpop.xlane.xlu0 %613
      %v615 = vrcp.pop %v614
      %v616 = vmul.f32 %v611, %v615
      %v617 = vpack.c.bf16 %v616, %v616
      %618 = vrot.lane.b32.xlu0 %v507, 64
      %v619 = vpop.permute.xlu0 %618
      %v621 = vsel %vm377, %v617, 0
      %v624 = vsel %vm393, %v619, 0
      %626 = vmatprep.subr.bf16.mxu0 0
      %627 = vmatpush1.bf16.msra.mxu0 %v624
      %628 = vmatprep.subr.bf16.mxu0 0
      %629 = vmatpush1.bf16.msra.mxu0 0
      %630 = vmatprep.subr.bf16.mxu0 0
      %631 = vmatpush1.bf16.msra.mxu0 0
      %632 = vmatprep.subr.bf16.mxu0 0
      %633 = vmatpush1.bf16.msra.mxu0 0
      %634 = vmatprep.subr.bf16.mxu0 0
      %635 = vmatpush1.bf16.msra.mxu0 0
      %636 = vmatprep.subr.bf16.mxu0 0
      %637 = vmatpush1.bf16.msra.mxu0 0
      %638 = vmatprep.subr.bf16.mxu0 0
      %639 = vmatpush1.bf16.msra.mxu0 0
      %640 = vmatprep.subr.bf16.mxu0 0
      %641 = vmatpush1.bf16.msra.mxu0 0
      %642 = vmatprep.subr.bf16.mxu0 0
      %643 = vmatpush1.bf16.msra.mxu0 0
      %644 = vmatprep.subr.bf16.mxu0 0
      %645 = vmatpush1.bf16.msra.mxu0 0
      %646 = vmatprep.subr.bf16.mxu0 0
      %647 = vmatpush1.bf16.msra.mxu0 0
      %648 = vmatprep.subr.bf16.mxu0 0
      %649 = vmatpush1.bf16.msra.mxu0 0
      %650 = vmatprep.subr.bf16.mxu0 0
      %651 = vmatpush1.bf16.msra.mxu0 0
      %652 = vmatprep.subr.bf16.mxu0 0
      %653 = vmatpush1.bf16.msra.mxu0 0
      %654 = vmatprep.subr.bf16.mxu0 0
      %655 = vmatpush1.bf16.msra.mxu0 0
      %656 = vmatprep.subr.bf16.mxu0 0
      %657 = vmatpush1.bf16.msra.mxu0 0
      %658 = vmatprep.mubr.bf16.mxu0 0
      %659 = vmatmul.mubr.bf16.gmra.mrb[0].mxu0 %v621
      %v660 = vpop.f32.mrb[0].mxu0
      %v661 = vadd.f32 0.0, %v660
      %v662 = vpop.f32.mrb[0].mxu0
      %v663 = vpop.f32.mrb[0].mxu0
      %v664 = vpop.f32.mrb[0].mxu0
      %665 = vdwg.mxu0
      %666 = vrot.lane.b32.xlu0 %v439, 32
      %v667 = vpop.permute.xlu0 %666
      %668 = vrot.lane.b32.xlu0 %v444, 32
      %v669 = vpop.permute.xlu0 %668
      %v671 = vsel %vm330, %v667, 0
      %v674 = vsel %vm330, %v669, 0
      %676 = vmatprep.subr.bf16.mxu0 0
      %677 = vmatpush1.bf16.xpose.msra.mxu0 %v674
      %678 = vmatprep.subr.bf16.mxu0 0
      %679 = vmatpush1.bf16.xpose.msra.mxu0 0
      %680 = vmatprep.subr.bf16.mxu0 0
      %681 = vmatpush1.bf16.xpose.msra.mxu0 0
      %682 = vmatprep.subr.bf16.mxu0 0
      %683 = vmatpush1.bf16.xpose.msra.mxu0 0
      %684 = vmatprep.subr.bf16.mxu0 0
      %685 = vmatpush1.bf16.xpose.msra.mxu0 0
      %686 = vmatprep.subr.bf16.mxu0 0
      %687 = vmatpush1.bf16.xpose.msra.mxu0 0
      %688 = vmatprep.subr.bf16.mxu0 0
      %689 = vmatpush1.bf16.xpose.msra.mxu0 0
      %690 = vmatprep.subr.bf16.mxu0 0
      %691 = vmatpush1.bf16.xpose.msra.mxu0 0
      %692 = vmatprep.subr.bf16.mxu0 0
      %693 = vmatpush1.bf16.xpose.msra.mxu0 0
      %694 = vmatprep.subr.bf16.mxu0 0
      %695 = vmatpush1.bf16.xpose.msra.mxu0 0
      %696 = vmatprep.subr.bf16.mxu0 0
      %697 = vmatpush1.bf16.xpose.msra.mxu0 0
      %698 = vmatprep.subr.bf16.mxu0 0
      %699 = vmatpush1.bf16.xpose.msra.mxu0 0
      %700 = vmatprep.subr.bf16.mxu0 0
      %701 = vmatpush1.bf16.xpose.msra.mxu0 0
      %702 = vmatprep.subr.bf16.mxu0 0
      %703 = vmatpush1.bf16.xpose.msra.mxu0 0
      %704 = vmatprep.subr.bf16.mxu0 0
      %705 = vmatpush1.bf16.xpose.msra.mxu0 0
      %706 = vmatprep.subr.bf16.mxu0 0
      %707 = vmatpush1.bf16.xpose.msra.mxu0 0
      %708 = vmatprep.mubr.bf16.mxu0 0
      %709 = vmatmul.mubr.bf16.gmra.mrb[0].mxu0 %v671
      %v710 = vpop.f32.mrb[0].mxu0
      %v711 = vadd.f32 %v328, %v710
      %v712 = vpop.f32.mrb[0].mxu0
      %v713 = vpop.f32.mrb[0].mxu0
      %v714 = vpop.f32.mrb[0].mxu0
      %715 = vdwg.mxu0
      %v716 = vsel %vm377, %v711, -inf
      %717 = vmax.xlane.f32.xlu0 %v716
      %v718 = vpop.xlane.xlu0 %717
      %v719 = vsub.f32 %v711, %v718
      %v720 = vmul.f32 %v719, 1.442695
      %v721 = vpow.pop %v720
      %v722 = vsel %vm377, %v721, 0.0
      %723 = vadd.xlane.f32.xlu0 %v722
      %v724 = vpop.xlane.xlu0 %723
      %v725 = vrcp.pop %v724
      %v726 = vmul.f32 %v721, %v725
      %v727 = vpack.c.bf16 %v726, %v726
      %728 = vrot.lane.b32.xlu0 %v507, 32
      %v729 = vpop.permute.xlu0 %728
      %v731 = vsel %vm377, %v727, 0
      %v734 = vsel %vm393, %v729, 0
      %736 = vmatprep.subr.bf16.mxu0 0
      %737 = vmatpush1.bf16.msra.mxu0 %v734
      %738 = vmatprep.subr.bf16.mxu0 0
      %739 = vmatpush1.bf16.msra.mxu0 0
      %740 = vmatprep.subr.bf16.mxu0 0
      %741 = vmatpush1.bf16.msra.mxu0 0
      %742 = vmatprep.subr.bf16.mxu0 0
      %743 = vmatpush1.bf16.msra.mxu0 0
      %744 = vmatprep.subr.bf16.mxu0 0
      %745 = vmatpush1.bf16.msra.mxu0 0
      %746 = vmatprep.subr.bf16.mxu0 0
      %747 = vmatpush1.bf16.msra.mxu0 0
      %748 = vmatprep.subr.bf16.mxu0 0
      %749 = vmatpush1.bf16.msra.mxu0 0
      %750 = vmatprep.subr.bf16.mxu0 0
      %751 = vmatpush1.bf16.msra.mxu0 0
      %752 = vmatprep.subr.bf16.mxu0 0
      %753 = vmatpush1.bf16.msra.mxu0 0
      %754 = vmatprep.subr.bf16.mxu0 0
      %755 = vmatpush1.bf16.msra.mxu0 0
      %756 = vmatprep.subr.bf16.mxu0 0
      %757 = vmatpush1.bf16.msra.mxu0 0
      %758 = vmatprep.subr.bf16.mxu0 0
      %759 = vmatpush1.bf16.msra.mxu0 0
      %760 = vmatprep.subr.bf16.mxu0 0
      %761 = vmatpush1.bf16.msra.mxu0 0
      %762 = vmatprep.subr.bf16.mxu0 0
      %763 = vmatpush1.bf16.msra.mxu0 0
      %764 = vmatprep.subr.bf16.mxu0 0
      %765 = vmatpush1.bf16.msra.mxu0 0
      %766 = vmatprep.subr.bf16.mxu0 0
      %767 = vmatpush1.bf16.msra.mxu0 0
      %768 = vmatprep.mubr.bf16.mxu0 0
      %769 = vmatmul.mubr.bf16.gmra.mrb[0].mxu0 %v731
      %v770 = vpop.f32.mrb[0].mxu0
      %v771 = vadd.f32 0.0, %v770
      %v772 = vpop.f32.mrb[0].mxu0
      %v773 = vpop.f32.mrb[0].mxu0
      %v774 = vpop.f32.mrb[0].mxu0
      %775 = vdwg.mxu0
      %777 = vrot.lane.b32.xlu0 %v551, 32
      %v778 = vpop.permute.xlu0 %777
      %781 = vrot.lane.b32.xlu0 %v661, 64
      %v782 = vpop.permute.xlu0 %781
      %785 = vrot.lane.b32.xlu0 %v771, 96
      %v786 = vpop.permute.xlu0 %785
      %v788 = vsel %vm330, %v432, %v778
      %vm789 = vcmask 523264
      %v790 = vsel %vm789, %v788, %v782
      %vm791 = vcmask 785408
      %v792 = vsel %vm791, %v790, %v786
      %v793 = vpack.c.bf16 %v792, %v792
      %794 = vst [vmem:[%s316] sm:$0xf] %v793
      %p795 = scmp.lt.s32.totalorder %s19, 1
      %s796 = scalar_select %p795, %s19, 1
      %p797 = scmp.lt.s32.totalorder %s20, 0
      %s798 = scalar_select %p797, %s20, 0
      %s799 = sadd.s32 %s798, %s796
      %s800 = smul.addr %s799, 4
      %s801 = scalar_lea.vmem %s4, %s800
      // Predicated region
      $region37: #{bert_mlm_forward.13} parent=35 // pred_check
        %p802 = pneg %p161
      $region38: #{bert_mlm_forward.13} parent=35 // pred_check_branch
        %804 = sbr.rel (%p802) target = $region40
      $region39: #{bert_mlm_forward.13} parent=35 // pred_region
        _
      $region40: #{bert_mlm_forward.13} parent=35 // pred_fallthru
        _
    $region36: #{bert_mlm_forward.13} parent=5 // pred_fallthru
      _
    %p805 = scmp.le.s32.totalorder 2, %s10
    // Predicated region
    $region41: #{bert_mlm_forward.13} parent=5 // pred_check
      %p806 = pneg %p805
    $region42: #{bert_mlm_forward.13} parent=5 // pred_check_branch
      %808 = sbr.rel (%p806) target = $region44
    $region43: #{bert_mlm_forward.13} parent=5 // pred_region
      %s809 = ssub.s32 %s10, 2
      // Predicated region
      $region45: #{bert_mlm_forward.13} parent=43 // pred_check
        %p810 = pneg %p167
      $region46: #{bert_mlm_forward.13} parent=43 // pred_check_branch
        %812 = sbr.rel (%p810) target = $region48
      $region47: #{bert_mlm_forward.13} parent=43 // pred_region
        %p813 = scmp.lt.s32.totalorder %s21, 1
        %s814 = scalar_select %p813, %s21, 1
        %p815 = scmp.lt.s32.totalorder %s22, 0
        %s816 = scalar_select %p815, %s22, 0
        %s817 = sadd.s32 %s816, %s814
        %s818 = smul.addr %s817, 4
        %s819 = scalar_lea.vmem %s4, %s818
      $region48: #{bert_mlm_forward.13} parent=43 // pred_fallthru
        _
    $region44: #{bert_mlm_forward.13} parent=5 // pred_fallthru
      _
  $region6: #{bert_mlm_forward.13} parent=0 // loop_footer
    %s14 = sadd.s32 1, %s10
  $region7: #{bert_mlm_forward.13} parent=0 // loop_footer_branch
    %9 = sbr.rel target = $region3
  $region8: #{bert_mlm_forward.13} parent=0 // loop_exit
    _

// kernel: bert_mlm_forward.16
$region0: #{bert_mlm_forward.16}
  #allocation0 [shape = 'u32[]', space=smem, size = 0x4, offset = 0x4, fixed_abs, tag = 'smem constant byte address 0x4 - core index']
  #allocation1 [shape = 'u32[144,128]{1,0:T(1,128)}', space=vmem, size = 0x12000, scoped, tag = 'internal scratch']
  #allocation2 [shape = 'f32[16,384]{1,0:T(8,128)}', space=vmem, size = 0x6000, scoped, tag = 'scratch operand']
  %s0 = inlined_call_operand.vmem [shape: bf16[16,128], index: 0, kind: input, shape index: {}]
  %s1 = inlined_call_operand.vmem [shape: bf16[128,384], index: 1, kind: input, shape index: {}]
  %s2 = inlined_call_operand.vmem [shape: f32[1,384], index: 2, kind: input, shape index: {}]
  %s3 = inlined_call_operand.vmem [shape: bf16[16,384], index: 3, kind: output, shape index: {}]
  %s4 = sld [smem:[#allocation0]]
  $region30: #{bert_mlm_forward.16} parent=0
    _
  %s6 = ssub.s32 1, %s4
  %s7 = scalar_select 0, %s6, %s4
  // Predicated region
  $region2: #{bert_mlm_forward.16} parent=0 // pred_check
    _
  $region3: #{bert_mlm_forward.16} parent=0 // pred_check_branch
    %9 = sbr.rel (0) target = $region5
  $region4: #{bert_mlm_forward.16} parent=0 // pred_region
    _
  $region5: #{bert_mlm_forward.16} parent=0 // pred_fallthru
    _
  // Predicated region
  $region6: #{bert_mlm_forward.16} parent=0 // pred_check
    _
  $region7: #{bert_mlm_forward.16} parent=0 // pred_check_branch
    %11 = sbr.rel (0) target = $region9
  $region8: #{bert_mlm_forward.16} parent=0 // pred_region
    _
  $region9: #{bert_mlm_forward.16} parent=0 // pred_fallthru
    _
  // Predicated region
  $region10: #{bert_mlm_forward.16} parent=0 // pred_check
    _
  $region11: #{bert_mlm_forward.16} parent=0 // pred_check_branch
    %13 = sbr.rel (0) target = $region13
  $region12: #{bert_mlm_forward.16} parent=0 // pred_region
    _
  $region13: #{bert_mlm_forward.16} parent=0 // pred_fallthru
    _
  %p15 = scmp.eq.s32.totalorder 0, 0
  // Predicated region
  $region14: #{bert_mlm_forward.16} parent=0 // pred_check
    %p16 = pneg %p15
  $region15: #{bert_mlm_forward.16} parent=0 // pred_check_branch
    %18 = sbr.rel (%p16) target = $region17
  $region16: #{bert_mlm_forward.16} parent=0 // pred_region
    %19 = vst [vmem:[#allocation2] sm:$0xff] 0.0
    %20 = vst [vmem:[#allocation2 + $0x8] sm:$0xff] 0.0
    %21 = vst [vmem:[#allocation2 + $0x10] sm:$0xff] 0.0
    %22 = vst [vmem:[#allocation2 + $0x18] sm:$0xff] 0.0
    %23 = vst [vmem:[#allocation2 + $0x20] sm:$0xff] 0.0
    %24 = vst [vmem:[#allocation2 + $0x28] sm:$0xff] 0.0
  $region17: #{bert_mlm_forward.16} parent=0 // pred_fallthru
    _
  %v25 = vld [vmem:[#allocation2] sm:$0xff]
  %v26 = vld [vmem:[#allocation2 + $0x8] sm:$0xff]
  %v27 = vld [vmem:[#allocation2 + $0x10] sm:$0xff]
  %v28 = vld [vmem:[#allocation2 + $0x18] sm:$0xff]
  %v29 = vld [vmem:[#allocation2 + $0x20] sm:$0xff]
  %v30 = vld [vmem:[#allocation2 + $0x28] sm:$0xff]
  %v31 = vld [vmem:[%s0] sm:$0xf]
  %v32 = vld [vmem:[%s0 + $0x4] sm:$0xf]
  %v33 = vld [vmem:[%s1] sm:$0xff]
  %v34 = vld [vmem:[%s1 + $0x8] sm:$0xf]
  %v35 = vld [vmem:[%s1 + $0xc] sm:$0xff]
  %v36 = vld [vmem:[%s1 + $0x14] sm:$0xf]
  %v37 = vld [vmem:[%s1 + $0x18] sm:$0xff]
  %v38 = vld [vmem:[%s1 + $0x20] sm:$0xf]
  %v39 = vld [vmem:[%s1 + $0x24] sm:$0xff]
  %v40 = vld [vmem:[%s1 + $0x2c] sm:$0xf]
  %v41 = vld [vmem:[%s1 + $0x30] sm:$0xff]
  %v42 = vld [vmem:[%s1 + $0x38] sm:$0xf]
  %v43 = vld [vmem:[%s1 + $0x3c] sm:$0xff]
  %v44 = vld [vmem:[%s1 + $0x44] sm:$0xf]
  %v45 = vld [vmem:[%s1 + $0x48] sm:$0xff]
  %v46 = vld [vmem:[%s1 + $0x50] sm:$0xf]
  %v47 = vld [vmem:[%s1 + $0x54] sm:$0xff]
  %v48 = vld [vmem:[%s1 + $0x5c] sm:$0xf]
  %v49 = vld [vmem:[%s1 + $0x60] sm:$0xff]
  %v50 = vld [vmem:[%s1 + $0x68] sm:$0xf]
  %v51 = vld [vmem:[%s1 + $0x6c] sm:$0xff]
  %v52 = vld [vmem:[%s1 + $0x74] sm:$0xf]
  %v53 = vld [vmem:[%s1 + $0x78] sm:$0xff]
  %v54 = vld [vmem:[%s1 + $0x80] sm:$0xf]
  %v55 = vld [vmem:[%s1 + $0x84] sm:$0xff]
  %v56 = vld [vmem:[%s1 + $0x8c] sm:$0xf]
  %v57 = vld [vmem:[%s1 + $0x90] sm:$0xff]
  %v58 = vld [vmem:[%s1 + $0x98] sm:$0xf]
  %v59 = vld [vmem:[%s1 + $0x9c] sm:$0xff]
  %v60 = vld [vmem:[%s1 + $0xa4] sm:$0xf]
  %v61 = vld [vmem:[%s1 + $0xa8] sm:$0xff]
  %v62 = vld [vmem:[%s1 + $0xb0] sm:$0xf]
  %v63 = vld [vmem:[%s1 + $0xb4] sm:$0xff]
  %v64 = vld [vmem:[%s1 + $0xbc] sm:$0xf]
  %v67 = vunpack.c.l.b16 %v31
  %v68 = vunpack.c.l.b16 %v32
  %v69 = vpack.c.b16 %v68, %v67
  %v103 = vunpack.c.l.b16 %v33
  %v104 = vunpack.c.h.b16 %v33
  %v105 = vunpack.c.l.b16 %v34
  %v106 = vunpack.c.l.b16 %v35
  %v107 = vunpack.c.h.b16 %v35
  %v108 = vunpack.c.l.b16 %v36
  %v109 = vunpack.c.l.b16 %v37
  %v110 = vunpack.c.h.b16 %v37
  %v111 = vunpack.c.l.b16 %v38
  %v112 = vunpack.c.l.b16 %v39
  %v113 = vunpack.c.h.b16 %v39
  %v114 = vunpack.c.l.b16 %v40
  %v115 = vunpack.c.l.b16 %v41
  %v116 = vunpack.c.h.b16 %v41
  %v117 = vunpack.c.l.b16 %v42
  %v118 = vunpack.c.l.b16 %v43
  %v119 = vunpack.c.h.b16 %v43
  %v120 = vunpack.c.l.b16 %v44
  %v121 = vunpack.c.l.b16 %v45
  %v122 = vunpack.c.h.b16 %v45
  %v123 = vunpack.c.l.b16 %v46
  %v124 = vunpack.c.l.b16 %v47
  %v125 = vunpack.c.h.b16 %v47
  %v126 = vunpack.c.l.b16 %v48
  %v127 = vunpack.c.l.b16 %v49
  %v128 = vunpack.c.h.b16 %v49
  %v129 = vunpack.c.l.b16 %v50
  %v130 = vunpack.c.l.b16 %v51
  %v131 = vunpack.c.h.b16 %v51
  %v132 = vunpack.c.l.b16 %v52
  %v133 = vunpack.c.l.b16 %v53
  %v134 = vunpack.c.h.b16 %v53
  %v135 = vunpack.c.l.b16 %v54
  %v136 = vunpack.c.l.b16 %v55
  %v137 = vunpack.c.h.b16 %v55
  %v138 = vunpack.c.l.b16 %v56
  %v139 = vunpack.c.l.b16 %v57
  %v140 = vunpack.c.h.b16 %v57
  %v141 = vunpack.c.l.b16 %v58
  %v142 = vunpack.c.l.b16 %v59
  %v143 = vunpack.c.h.b16 %v59
  %v144 = vunpack.c.l.b16 %v60
  %v145 = vunpack.c.l.b16 %v61
  %v146 = vunpack.c.h.b16 %v61
  %v147 = vunpack.c.l.b16 %v62
  %v148 = vunpack.c.l.b16 %v63
  %v149 = vunpack.c.h.b16 %v63
  %v150 = vunpack.c.l.b16 %v64
  %v151 = vpack.c.b16 %v106, %v103
  %v152 = vpack.c.b16 %v107, %v104
  %v153 = vpack.c.b16 %v108, %v105
  %v154 = vpack.c.b16 %v112, %v109
  %v155 = vpack.c.b16 %v113, %v110
  %v156 = vpack.c.b16 %v114, %v111
  %v157 = vpack.c.b16 %v118, %v115
  %v158 = vpack.c.b16 %v119, %v116
  %v159 = vpack.c.b16 %v120, %v117
  %v160 = vpack.c.b16 %v124, %v121
  %v161 = vpack.c.b16 %v125, %v122
  %v162 = vpack.c.b16 %v126, %v123
  %v163 = vpack.c.b16 %v130, %v127
  %v164 = vpack.c.b16 %v131, %v128
  %v165 = vpack.c.b16 %v132, %v129
  %v166 = vpack.c.b16 %v136, %v133
  %v167 = vpack.c.b16 %v137, %v134
  %v168 = vpack.c.b16 %v138, %v135
  %v169 = vpack.c.b16 %v142, %v139
  %v170 = vpack.c.b16 %v143, %v140
  %v171 = vpack.c.b16 %v144, %v141
  %v172 = vpack.c.b16 %v148, %v145
  %v173 = vpack.c.b16 %v149, %v146
  %v174 = vpack.c.b16 %v150, %v147
  %199 = vmatprep.subr.bf16.mxu0 %v152
  %200 = vmatpush1.bf16.msra.mxu0 %v151
  %201 = vmatprep.subr.bf16.mxu0 %v155
  %202 = vmatpush1.bf16.msra.mxu0 %v154
  %203 = vmatprep.subr.bf16.mxu0 %v158
  %204 = vmatpush1.bf16.msra.mxu0 %v157
  %205 = vmatprep.subr.bf16.mxu0 %v161
  %206 = vmatpush1.bf16.msra.mxu0 %v160
  %207 = vmatprep.subr.bf16.mxu0 %v164
  %208 = vmatpush1.bf16.msra.mxu0 %v163
  %209 = vmatprep.subr.bf16.mxu0 %v167
  %210 = vmatpush1.bf16.msra.mxu0 %v166
  %211 = vmatprep.subr.bf16.mxu0 %v170
  %212 = vmatpush1.bf16.msra.mxu0 %v169
  %213 = vmatprep.subr.bf16.mxu0 %v173
  %214 = vmatpush1.bf16.msra.mxu0 %v172
  %215 = vmatprep.subr.bf16.mxu0 0
  %216 = vmatpush1.bf16.msra.mxu0 0
  %217 = vmatprep.subr.bf16.mxu0 0
  %218 = vmatpush1.bf16.msra.mxu0 0
  %219 = vmatprep.subr.bf16.mxu0 0
  %220 = vmatpush1.bf16.msra.mxu0 0
  %221 = vmatprep.subr.bf16.mxu0 0
  %222 = vmatpush1.bf16.msra.mxu0 0
  %223 = vmatprep.subr.bf16.mxu0 0
  %224 = vmatpush1.bf16.msra.mxu0 0
  %225 = vmatprep.subr.bf16.mxu0 0
  %226 = vmatpush1.bf16.msra.mxu0 0
  %227 = vmatprep.subr.bf16.mxu0 0
  %228 = vmatpush1.bf16.msra.mxu0 0
  %229 = vmatprep.subr.bf16.mxu0 0
  %230 = vmatpush1.bf16.msra.mxu0 0
  %231 = vmatprep.mubr.bf16.mxu0 0
  %232 = vmatmul.mubr.bf16.gmra.mrb[0].mxu0 %v69
  %v233 = vpop.f32.mrb[0].mxu0
  %v234 = vadd.f32 0.0, %v233
  %v235 = vpop.f32.mrb[0].mxu0
  %v236 = vadd.f32 0.0, %v235
  %v237 = vpop.f32.mrb[0].mxu0
  %v238 = vadd.f32 0.0, %v237
  %v239 = vpop.f32.mrb[0].mxu0
  %v240 = vadd.f32 0.0, %v239
  %241 = vdwg.mxu0
  %242 = vmatprep.subr.bf16.mxu0 0
  %243 = vmatpush1.bf16.msra.mxu0 %v153
  %244 = vmatprep.subr.bf16.mxu0 0
  %245 = vmatpush1.bf16.msra.mxu0 %v156
  %246 = vmatprep.subr.bf16.mxu0 0
  %247 = vmatpush1.bf16.msra.mxu0 %v159
  %248 = vmatprep.subr.bf16.mxu0 0
  %249 = vmatpush1.bf16.msra.mxu0 %v162
  %250 = vmatprep.subr.bf16.mxu0 0
  %251 = vmatpush1.bf16.msra.mxu0 %v165
  %252 = vmatprep.subr.bf16.mxu0 0
  %253 = vmatpush1.bf16.msra.mxu0 %v168
  %254 = vmatprep.subr.bf16.mxu0 0
  %255 = vmatpush1.bf16.msra.mxu0 %v171
  %256 = vmatprep.subr.bf16.mxu0 0
  %257 = vmatpush1.bf16.msra.mxu0 %v174
  %258 = vmatprep.subr.bf16.mxu0 0
  %259 = vmatpush1.bf16.msra.mxu0 0
  %260 = vmatprep.subr.bf16.mxu0 0
  %261 = vmatpush1.bf16.msra.mxu0 0
  %262 = vmatprep.subr.bf16.mxu0 0
  %263 = vmatpush1.bf16.msra.mxu0 0
  %264 = vmatprep.subr.bf16.mxu0 0
  %265 = vmatpush1.bf16.msra.mxu0 0
  %266 = vmatprep.subr.bf16.mxu0 0
  %267 = vmatpush1.bf16.msra.mxu0 0
  %268 = vmatprep.subr.bf16.mxu0 0
  %269 = vmatpush1.bf16.msra.mxu0 0
  %270 = vmatprep.subr.bf16.mxu0 0
  %271 = vmatpush1.bf16.msra.mxu0 0
  %272 = vmatprep.subr.bf16.mxu0 0
  %273 = vmatpush1.bf16.msra.mxu0 0
  %274 = vmatprep.mubr.bf16.mxu0 0
  %275 = vmatmul.mubr.bf16.gmra.mrb[0].mxu0 %v69
  %v276 = vpop.f32.mrb[0].mxu0
  %v277 = vadd.f32 0.0, %v276
  %v278 = vpop.f32.mrb[0].mxu0
  %v279 = vpop.f32.mrb[0].mxu0
  %v280 = vadd.f32 0.0, %v279
  %v281 = vpop.f32.mrb[0].mxu0
  %282 = vdwg.mxu0
  %v283 = vadd.f32 %v25, %v234
  %v284 = vadd.f32 %v26, %v236
  %v285 = vadd.f32 %v27, %v277
  %v286 = vadd.f32 %v28, %v238
  %v287 = vadd.f32 %v29, %v240
  %v288 = vadd.f32 %v30, %v280
  %289 = vst [vmem:[#allocation2] sm:$0xff] %v283
  %290 = vst [vmem:[#allocation2 + $0x8] sm:$0xff] %v284
  %291 = vst [vmem:[#allocation2 + $0x10] sm:$0xff] %v285
  %292 = vst [vmem:[#allocation2 + $0x18] sm:$0xff] %v286
  %293 = vst [vmem:[#allocation2 + $0x20] sm:$0xff] %v287
  %294 = vst [vmem:[#allocation2 + $0x28] sm:$0xff] %v288
  // Predicated region
  $region18: #{bert_mlm_forward.16} parent=0 // pred_check
    %p295 = pneg %p15
  $region19: #{bert_mlm_forward.16} parent=0 // pred_check_branch
    %297 = sbr.rel (%p295) target = $region21
  $region20: #{bert_mlm_forward.16} parent=0 // pred_region
    %v298 = vld [vmem:[#allocation2] sm:$0xff]
    %v299 = vld [vmem:[#allocation2 + $0x8] sm:$0xff]
    %v300 = vld [vmem:[#allocation2 + $0x10] sm:$0xff]
    %v301 = vld [vmem:[#allocation2 + $0x18] sm:$0xff]
    %v302 = vld [vmem:[#allocation2 + $0x20] sm:$0xff]
    %v303 = vld [vmem:[#allocation2 + $0x28] sm:$0xff]
    %v304 = vld [vmem:[%s2] sm:$0x7]
    %v306 = vlaneseq
    %v307 = vshrl.u32 %v306, 7
    %v308 = vsub.s32 0, %v307
    %v309 = vrot.slane %v304, %v308
    %v310 = vlaneseq
    %v311 = vshrl.u32 %v310, 7
    %v312 = vsub.s32 1, %v311
    %v313 = vrot.slane %v304, %v312
    %v314 = vlaneseq
    %v315 = vshrl.u32 %v314, 7
    %v316 = vsub.s32 2, %v315
    %v317 = vrot.slane %v304, %v316
    %v321 = vadd.f32 %v298, %v309
    %v322 = vadd.f32 %v299, %v313
    %v323 = vadd.f32 %v300, %v317
    %v324 = vadd.f32 %v301, %v309
    %v325 = vadd.f32 %v302, %v313
    %v326 = vadd.f32 %v303, %v317
    %v327 = vpack.c.bf16 %v324, %v321
    %v328 = vpack.c.bf16 %v325, %v322
    %v329 = vpack.c.bf16 %v326, %v323
    %v333 = vunpack.c.l.b16 %v327
    %v334 = vunpack.c.l.b16 %v328
    %v335 = vunpack.c.l.b16 %v329
    %v336 = vunpack.c.h.b16 %v327
    %v337 = vunpack.c.h.b16 %v328
    %v338 = vunpack.c.h.b16 %v329
    %v339 = vpack.c.b16 %v334, %v333
    %v340 = vpack.c.b16 %v335, %v335
    %v341 = vpack.c.b16 %v337, %v336
    %v342 = vpack.c.b16 %v338, %v338
    %347 = vst [vmem:[%s3] sm:$0xff] %v339
    %348 = vst [vmem:[%s3 + $0x8] sm:$0xf] %v340
    %349 = vst [vmem:[%s3 + $0xc] sm:$0xff] %v341
    %350 = vst [vmem:[%s3 + $0x14] sm:$0xf] %v342
  $region21: #{bert_mlm_forward.16} parent=0 // pred_fallthru
    _
  // Predicated region
  $region22: #{bert_mlm_forward.16} parent=0 // pred_check
    _
  $region23: #{bert_mlm_forward.16} parent=0 // pred_check_branch
    %352 = sbr.rel (0) target = $region25
  $region24: #{bert_mlm_forward.16} parent=0 // pred_region
    _
  $region25: #{bert_mlm_forward.16} parent=0 // pred_fallthru
    _
  // Predicated region
  $region26: #{bert_mlm_forward.16} parent=0 // pred_check
    _
  $region27: #{bert_mlm_forward.16} parent=0 // pred_check_branch
    %354 = sbr.rel (0) target = $region29
  $region28: #{bert_mlm_forward.16} parent=0 // pred_region
    _
  $region29: #{bert_mlm_forward.16} parent=0 // pred_fallthru
    _

// kernel: bert_mlm_forward.19
$region0: #{bert_mlm_forward.19}
  #allocation0 [shape = 'u32[]', space=smem, size = 0x4, offset = 0x4, fixed_abs, tag = 'smem constant byte address 0x4 - core index']
  #allocation1 [shape = 'u32[144,128]{1,0:T(1,128)}', space=vmem, size = 0x12000, scoped, tag = 'internal scratch']
  %s0 = inlined_call_operand.vmem [shape: bf16[16,128], index: 0, kind: input, shape index: {}]
  %s1 = inlined_call_operand.vmem [shape: bf16[128,512], index: 1, kind: input, shape index: {}]
  %s2 = inlined_call_operand.vmem [shape: f32[1,512], index: 2, kind: input, shape index: {}]
  %s3 = inlined_call_operand.vmem [shape: bf16[512,128], index: 3, kind: input, shape index: {}]
  %s4 = inlined_call_operand.vmem [shape: f32[1,128], index: 4, kind: input, shape index: {}]
  %s5 = inlined_call_operand.vmem [shape: f32[1,128], index: 5, kind: input, shape index: {}]
  %s6 = inlined_call_operand.vmem [shape: f32[1,128], index: 6, kind: input, shape index: {}]
  %s7 = inlined_call_operand.vmem [shape: bf16[16,128], index: 7, kind: output, shape index: {}]
  %s8 = sld [smem:[#allocation0]]
  $region38: #{bert_mlm_forward.19} parent=0
    _
  %s10 = ssub.s32 1, %s8
  %s11 = scalar_select 0, %s10, %s8
  // Predicated region
  $region2: #{bert_mlm_forward.19} parent=0 // pred_check
    _
  $region3: #{bert_mlm_forward.19} parent=0 // pred_check_branch
    %13 = sbr.rel (0) target = $region5
  $region4: #{bert_mlm_forward.19} parent=0 // pred_region
    _
  $region5: #{bert_mlm_forward.19} parent=0 // pred_fallthru
    _
  // Predicated region
  $region6: #{bert_mlm_forward.19} parent=0 // pred_check
    _
  $region7: #{bert_mlm_forward.19} parent=0 // pred_check_branch
    %15 = sbr.rel (0) target = $region9
  $region8: #{bert_mlm_forward.19} parent=0 // pred_region
    _
  $region9: #{bert_mlm_forward.19} parent=0 // pred_fallthru
    _
  // Predicated region
  $region10: #{bert_mlm_forward.19} parent=0 // pred_check
    _
  $region11: #{bert_mlm_forward.19} parent=0 // pred_check_branch
    %17 = sbr.rel (0) target = $region13
  $region12: #{bert_mlm_forward.19} parent=0 // pred_region
    _
  $region13: #{bert_mlm_forward.19} parent=0 // pred_fallthru
    _
  // Predicated region
  $region14: #{bert_mlm_forward.19} parent=0 // pred_check
    _
  $region15: #{bert_mlm_forward.19} parent=0 // pred_check_branch
    %19 = sbr.rel (0) target = $region17
  $region16: #{bert_mlm_forward.19} parent=0 // pred_region
    _
  $region17: #{bert_mlm_forward.19} parent=0 // pred_fallthru
    _
  // Predicated region
  $region18: #{bert_mlm_forward.19} parent=0 // pred_check
    _
  $region19: #{bert_mlm_forward.19} parent=0 // pred_check_branch
    %21 = sbr.rel (0) target = $region21
  $region20: #{bert_mlm_forward.19} parent=0 // pred_region
    _
  $region21: #{bert_mlm_forward.19} parent=0 // pred_fallthru
    _
  // Predicated region
  $region22: #{bert_mlm_forward.19} parent=0 // pred_check
    _
  $region23: #{bert_mlm_forward.19} parent=0 // pred_check_branch
    %23 = sbr.rel (0) target = $region25
  $region24: #{bert_mlm_forward.19} parent=0 // pred_region
    _
  $region25: #{bert_mlm_forward.19} parent=0 // pred_fallthru
    _
  // Predicated region
  $region26: #{bert_mlm_forward.19} parent=0 // pred_check
    _
  $region27: #{bert_mlm_forward.19} parent=0 // pred_check_branch
    %25 = sbr.rel (0) target = $region29
  $region28: #{bert_mlm_forward.19} parent=0 // pred_region
    _
  $region29: #{bert_mlm_forward.19} parent=0 // pred_fallthru
    _
  %v27 = vld [vmem:[%s0] sm:$0xf]
  %v28 = vld [vmem:[%s0 + $0x4] sm:$0xf]
  %v29 = vld [vmem:[%s1] sm:$0xff]
  %v30 = vld [vmem:[%s1 + $0x8] sm:$0xff]
  %v31 = vld [vmem:[%s1 + $0x10] sm:$0xff]
  %v32 = vld [vmem:[%s1 + $0x18] sm:$0xff]
  %v33 = vld [vmem:[%s1 + $0x20] sm:$0xff]
  %v34 = vld [vmem:[%s1 + $0x28] sm:$0xff]
  %v35 = vld [vmem:[%s1 + $0x30] sm:$0xff]
  %v36 = vld [vmem:[%s1 + $0x38] sm:$0xff]
  %v37 = vld [vmem:[%s1 + $0x40] sm:$0xff]
  %v38 = vld [vmem:[%s1 + $0x48] sm:$0xff]
  %v39 = vld [vmem:[%s1 + $0x50] sm:$0xff]
  %v40 = vld [vmem:[%s1 + $0x58] sm:$0xff]
  %v41 = vld [vmem:[%s1 + $0x60] sm:$0xff]
  %v42 = vld [vmem:[%s1 + $0x68] sm:$0xff]
  %v43 = vld [vmem:[%s1 + $0x70] sm:$0xff]
  %v44 = vld [vmem:[%s1 + $0x78] sm:$0xff]
  %v45 = vld [vmem:[%s1 + $0x80] sm:$0xff]
  %v46 = vld [vmem:[%s1 + $0x88] sm:$0xff]
  %v47 = vld [vmem:[%s1 + $0x90] sm:$0xff]
  %v48 = vld [vmem:[%s1 + $0x98] sm:$0xff]
  %v49 = vld [vmem:[%s1 + $0xa0] sm:$0xff]
  %v50 = vld [vmem:[%s1 + $0xa8] sm:$0xff]
  %v51 = vld [vmem:[%s1 + $0xb0] sm:$0xff]
  %v52 = vld [vmem:[%s1 + $0xb8] sm:$0xff]
  %v53 = vld [vmem:[%s1 + $0xc0] sm:$0xff]
  %v54 = vld [vmem:[%s1 + $0xc8] sm:$0xff]
  %v55 = vld [vmem:[%s1 + $0xd0] sm:$0xff]
  %v56 = vld [vmem:[%s1 + $0xd8] sm:$0xff]
  %v57 = vld [vmem:[%s1 + $0xe0] sm:$0xff]
  %v58 = vld [vmem:[%s1 + $0xe8] sm:$0xff]
  %v59 = vld [vmem:[%s1 + $0xf0] sm:$0xff]
  %v60 = vld [vmem:[%s1 + $0xf8] sm:$0xff]
  %v61 = vld [vmem:[%s2] sm:$0xf]
  %v63 = vlaneseq
  %v64 = vshrl.u32 %v63, 7
  %v65 = vsub.s32 0, %v64
  %v66 = vrot.slane %v61, %v65
  %v67 = vlaneseq
  %v68 = vshrl.u32 %v67, 7
  %v69 = vsub.s32 1, %v68
  %v70 = vrot.slane %v61, %v69
  %v71 = vlaneseq
  %v72 = vshrl.u32 %v71, 7
  %v73 = vsub.s32 2, %v72
  %v74 = vrot.slane %v61, %v73
  %v75 = vlaneseq
  %v76 = vshrl.u32 %v75, 7
  %v77 = vsub.s32 3, %v76
  %v78 = vrot.slane %v61, %v77
  %v85 = vunpack.c.l.b16 %v27
  %v86 = vunpack.c.l.b16 %v28
  %v87 = vpack.c.b16 %v86, %v85
  %v121 = vunpack.c.l.b16 %v29
  %v122 = vunpack.c.h.b16 %v29
  %v123 = vunpack.c.l.b16 %v30
  %v124 = vunpack.c.h.b16 %v30
  %v125 = vunpack.c.l.b16 %v31
  %v126 = vunpack.c.h.b16 %v31
  %v127 = vunpack.c.l.b16 %v32
  %v128 = vunpack.c.h.b16 %v32
  %v129 = vunpack.c.l.b16 %v33
  %v130 = vunpack.c.h.b16 %v33
  %v131 = vunpack.c.l.b16 %v34
  %v132 = vunpack.c.h.b16 %v34
  %v133 = vunpack.c.l.b16 %v35
  %v134 = vunpack.c.h.b16 %v35
  %v135 = vunpack.c.l.b16 %v36
  %v136 = vunpack.c.h.b16 %v36
  %v137 = vunpack.c.l.b16 %v37
  %v138 = vunpack.c.h.b16 %v37
  %v139 = vunpack.c.l.b16 %v38
  %v140 = vunpack.c.h.b16 %v38
  %v141 = vunpack.c.l.b16 %v39
  %v142 = vunpack.c.h.b16 %v39
  %v143 = vunpack.c.l.b16 %v40
  %v144 = vunpack.c.h.b16 %v40
  %v145 = vunpack.c.l.b16 %v41
  %v146 = vunpack.c.h.b16 %v41
  %v147 = vunpack.c.l.b16 %v42
  %v148 = vunpack.c.h.b16 %v42
  %v149 = vunpack.c.l.b16 %v43
  %v150 = vunpack.c.h.b16 %v43
  %v151 = vunpack.c.l.b16 %v44
  %v152 = vunpack.c.h.b16 %v44
  %v153 = vunpack.c.l.b16 %v45
  %v154 = vunpack.c.h.b16 %v45
  %v155 = vunpack.c.l.b16 %v46
  %v156 = vunpack.c.h.b16 %v46
  %v157 = vunpack.c.l.b16 %v47
  %v158 = vunpack.c.h.b16 %v47
  %v159 = vunpack.c.l.b16 %v48
  %v160 = vunpack.c.h.b16 %v48
  %v161 = vunpack.c.l.b16 %v49
  %v162 = vunpack.c.h.b16 %v49
  %v163 = vunpack.c.l.b16 %v50
  %v164 = vunpack.c.h.b16 %v50
  %v165 = vunpack.c.l.b16 %v51
  %v166 = vunpack.c.h.b16 %v51
  %v167 = vunpack.c.l.b16 %v52
  %v168 = vunpack.c.h.b16 %v52
  %v169 = vunpack.c.l.b16 %v53
  %v170 = vunpack.c.h.b16 %v53
  %v171 = vunpack.c.l.b16 %v54
  %v172 = vunpack.c.h.b16 %v54
  %v173 = vunpack.c.l.b16 %v55
  %v174 = vunpack.c.h.b16 %v55
  %v175 = vunpack.c.l.b16 %v56
  %v176 = vunpack.c.h.b16 %v56
  %v177 = vunpack.c.l.b16 %v57
  %v178 = vunpack.c.h.b16 %v57
  %v179 = vunpack.c.l.b16 %v58
  %v180 = vunpack.c.h.b16 %v58
  %v181 = vunpack.c.l.b16 %v59
  %v182 = vunpack.c.h.b16 %v59
  %v183 = vunpack.c.l.b16 %v60
  %v184 = vunpack.c.h.b16 %v60
  %v185 = vpack.c.b16 %v125, %v121
  %v186 = vpack.c.b16 %v126, %v122
  %v187 = vpack.c.b16 %v127, %v123
  %v188 = vpack.c.b16 %v128, %v124
  %v189 = vpack.c.b16 %v133, %v129
  %v190 = vpack.c.b16 %v134, %v130
  %v191 = vpack.c.b16 %v135, %v131
  %v192 = vpack.c.b16 %v136, %v132
  %v193 = vpack.c.b16 %v141, %v137
  %v194 = vpack.c.b16 %v142, %v138
  %v195 = vpack.c.b16 %v143, %v139
  %v196 = vpack.c.b16 %v144, %v140
  %v197 = vpack.c.b16 %v149, %v145
  %v198 = vpack.c.b16 %v150, %v146
  %v199 = vpack.c.b16 %v151, %v147
  %v200 = vpack.c.b16 %v152, %v148
  %v201 = vpack.c.b16 %v157, %v153
  %v202 = vpack.c.b16 %v158, %v154
  %v203 = vpack.c.b16 %v159, %v155
  %v204 = vpack.c.b16 %v160, %v156
  %v205 = vpack.c.b16 %v165, %v161
  %v206 = vpack.c.b16 %v166, %v162
  %v207 = vpack.c.b16 %v167, %v163
  %v208 = vpack.c.b16 %v168, %v164
  %v209 = vpack.c.b16 %v173, %v169
  %v210 = vpack.c.b16 %v174, %v170
  %v211 = vpack.c.b16 %v175, %v171
  %v212 = vpack.c.b16 %v176, %v172
  %v213 = vpack.c.b16 %v181, %v177
  %v214 = vpack.c.b16 %v182, %v178
  %v215 = vpack.c.b16 %v183, %v179
  %v216 = vpack.c.b16 %v184, %v180
  %249 = vmatprep.subr.bf16.mxu0 %v186
  %250 = vmatpush1.bf16.msra.mxu0 %v185
  %251 = vmatprep.subr.bf16.mxu0 %v190
  %252 = vmatpush1.bf16.msra.mxu0 %v189
  %253 = vmatprep.subr.bf16.mxu0 %v194
  %254 = vmatpush1.bf16.msra.mxu0 %v193
  %255 = vmatprep.subr.bf16.mxu0 %v198
  %256 = vmatpush1.bf16.msra.mxu0 %v197
  %257 = vmatprep.subr.bf16.mxu0 %v202
  %258 = vmatpush1.bf16.msra.mxu0 %v201
  %259 = vmatprep.subr.bf16.mxu0 %v206
  %260 = vmatpush1.bf16.msra.mxu0 %v205
  %261 = vmatprep.subr.bf16.mxu0 %v210
  %262 = vmatpush1.bf16.msra.mxu0 %v209
  %263 = vmatprep.subr.bf16.mxu0 %v214
  %264 = vmatpush1.bf16.msra.mxu0 %v213
  %265 = vmatprep.subr.bf16.mxu0 0
  %266 = vmatpush1.bf16.msra.mxu0 0
  %267 = vmatprep.subr.bf16.mxu0 0
  %268 = vmatpush1.bf16.msra.mxu0 0
  %269 = vmatprep.subr.bf16.mxu0 0
  %270 = vmatpush1.bf16.msra.mxu0 0
  %271 = vmatprep.subr.bf16.mxu0 0
  %272 = vmatpush1.bf16.msra.mxu0 0
  %273 = vmatprep.subr.bf16.mxu0 0
  %274 = vmatpush1.bf16.msra.mxu0 0
  %275 = vmatprep.subr.bf16.mxu0 0
  %276 = vmatpush1.bf16.msra.mxu0 0
  %277 = vmatprep.subr.bf16.mxu0 0
  %278 = vmatpush1.bf16.msra.mxu0 0
  %279 = vmatprep.subr.bf16.mxu0 0
  %280 = vmatpush1.bf16.msra.mxu0 0
  %281 = vmatprep.mubr.bf16.mxu0 0
  %282 = vmatmul.mubr.bf16.gmra.mrb[0].mxu0 %v87
  %v283 = vpop.f32.mrb[0].mxu0
  %v284 = vadd.f32 %v66, %v283
  %v285 = vpop.f32.mrb[0].mxu0
  %v286 = vadd.f32 %v70, %v285
  %v287 = vpop.f32.mrb[0].mxu0
  %v288 = vadd.f32 %v66, %v287
  %v289 = vpop.f32.mrb[0].mxu0
  %v290 = vadd.f32 %v70, %v289
  %291 = vdwg.mxu0
  %292 = vmatprep.subr.bf16.mxu0 %v188
  %293 = vmatpush1.bf16.msra.mxu0 %v187
  %294 = vmatprep.subr.bf16.mxu0 %v192
  %295 = vmatpush1.bf16.msra.mxu0 %v191
  %296 = vmatprep.subr.bf16.mxu0 %v196
  %297 = vmatpush1.bf16.msra.mxu0 %v195
  %298 = vmatprep.subr.bf16.mxu0 %v200
  %299 = vmatpush1.bf16.msra.mxu0 %v199
  %300 = vmatprep.subr.bf16.mxu0 %v204
  %301 = vmatpush1.bf16.msra.mxu0 %v203
  %302 = vmatprep.subr.bf16.mxu0 %v208
  %303 = vmatpush1.bf16.msra.mxu0 %v207
  %304 = vmatprep.subr.bf16.mxu0 %v212
  %305 = vmatpush1.bf16.msra.mxu0 %v211
  %306 = vmatprep.subr.bf16.mxu0 %v216
  %307 = vmatpush1.bf16.msra.mxu0 %v215
  %308 = vmatprep.subr.bf16.mxu0 0
  %309 = vmatpush1.bf16.msra.mxu0 0
  %310 = vmatprep.subr.bf16.mxu0 0
  %311 = vmatpush1.bf16.msra.mxu0 0
  %312 = vmatprep.subr.bf16.mxu0 0
  %313 = vmatpush1.bf16.msra.mxu0 0
  %314 = vmatprep.subr.bf16.mxu0 0
  %315 = vmatpush1.bf16.msra.mxu0 0
  %316 = vmatprep.subr.bf16.mxu0 0
  %317 = vmatpush1.bf16.msra.mxu0 0
  %318 = vmatprep.subr.bf16.mxu0 0
  %319 = vmatpush1.bf16.msra.mxu0 0
  %320 = vmatprep.subr.bf16.mxu0 0
  %321 = vmatpush1.bf16.msra.mxu0 0
  %322 = vmatprep.subr.bf16.mxu0 0
  %323 = vmatpush1.bf16.msra.mxu0 0
  %324 = vmatprep.mubr.bf16.mxu0 0
  %325 = vmatmul.mubr.bf16.gmra.mrb[0].mxu0 %v87
  %v326 = vpop.f32.mrb[0].mxu0
  %v327 = vadd.f32 %v74, %v326
  %v328 = vpop.f32.mrb[0].mxu0
  %v329 = vadd.f32 %v78, %v328
  %v330 = vpop.f32.mrb[0].mxu0
  %v331 = vadd.f32 %v74, %v330
  %v332 = vpop.f32.mrb[0].mxu0
  %v333 = vadd.f32 %v78, %v332
  %334 = vdwg.mxu0
  %v335 = vmul.f32 %v284, 0.5
  %v336 = vmul.f32 %v286, 0.5
  %v337 = vmul.f32 %v327, 0.5
  %v338 = vmul.f32 %v329, 0.5
  %v339 = vmul.f32 %v288, 0.5
  %v340 = vmul.f32 %v290, 0.5
  %v341 = vmul.f32 %v331, 0.5
  %v342 = vmul.f32 %v333, 0.5
  %v343 = vmul.f32 %v284, 0.70710677
  %v344 = vmul.f32 %v286, 0.70710677
  %v345 = vmul.f32 %v327, 0.70710677
  %v346 = vmul.f32 %v329, 0.70710677
  %v347 = vmul.f32 %v288, 0.70710677
  %v348 = vmul.f32 %v290, 0.70710677
  %v349 = vmul.f32 %v331, 0.70710677
  %v350 = vmul.f32 %v333, 0.70710677
  %v351 = verf.f32.pop %v343
  %v352 = verf.f32.pop %v344
  %v353 = verf.f32.pop %v345
  %v354 = verf.f32.pop %v346
  %v355 = verf.f32.pop %v347
  %v356 = verf.f32.pop %v348
  %v357 = verf.f32.pop %v349
  %v358 = verf.f32.pop %v350
  %v359 = vadd.f32 %v351, 1.0
  %v360 = vadd.f32 %v352, 1.0
  %v361 = vadd.f32 %v353, 1.0
  %v362 = vadd.f32 %v354, 1.0
  %v363 = vadd.f32 %v355, 1.0
  %v364 = vadd.f32 %v356, 1.0
  %v365 = vadd.f32 %v357, 1.0
  %v366 = vadd.f32 %v358, 1.0
  %v367 = vmul.f32 %v335, %v359
  %v368 = vmul.f32 %v336, %v360
  %v369 = vmul.f32 %v337, %v361
  %v370 = vmul.f32 %v338, %v362
  %v371 = vmul.f32 %v339, %v363
  %v372 = vmul.f32 %v340, %v364
  %v373 = vmul.f32 %v341, %v365
  %v374 = vmul.f32 %v342, %v366
  %v375 = vpack.c.bf16 %v371, %v367
  %v376 = vpack.c.bf16 %v372, %v368
  %v377 = vpack.c.bf16 %v373, %v369
  %v378 = vpack.c.bf16 %v374, %v370
  %v379 = vld [vmem:[%s3] sm:$0xf]
  %v380 = vld [vmem:[%s3 + $0x4] sm:$0xf]
  %v381 = vld [vmem:[%s3 + $0x8] sm:$0xf]
  %v382 = vld [vmem:[%s3 + $0xc] sm:$0xf]
  %v383 = vld [vmem:[%s3 + $0x10] sm:$0xf]
  %v384 = vld [vmem:[%s3 + $0x14] sm:$0xf]
  %v385 = vld [vmem:[%s3 + $0x18] sm:$0xf]
  %v386 = vld [vmem:[%s3 + $0x1c] sm:$0xf]
  %v387 = vld [vmem:[%s3 + $0x20] sm:$0xf]
  %v388 = vld [vmem:[%s3 + $0x24] sm:$0xf]
  %v389 = vld [vmem:[%s3 + $0x28] sm:$0xf]
  %v390 = vld [vmem:[%s3 + $0x2c] sm:$0xf]
  %v391 = vld [vmem:[%s3 + $0x30] sm:$0xf]
  %v392 = vld [vmem:[%s3 + $0x34] sm:$0xf]
  %v393 = vld [vmem:[%s3 + $0x38] sm:$0xf]
  %v394 = vld [vmem:[%s3 + $0x3c] sm:$0xf]
  %v395 = vld [vmem:[%s3 + $0x40] sm:$0xf]
  %v396 = vld [vmem:[%s3 + $0x44] sm:$0xf]
  %v397 = vld [vmem:[%s3 + $0x48] sm:$0xf]
  %v398 = vld [vmem:[%s3 + $0x4c] sm:$0xf]
  %v399 = vld [vmem:[%s3 + $0x50] sm:$0xf]
  %v400 = vld [vmem:[%s3 + $0x54] sm:$0xf]
  %v401 = vld [vmem:[%s3 + $0x58] sm:$0xf]
  %v402 = vld [vmem:[%s3 + $0x5c] sm:$0xf]
  %v403 = vld [vmem:[%s3 + $0x60] sm:$0xf]
  %v404 = vld [vmem:[%s3 + $0x64] sm:$0xf]
  %v405 = vld [vmem:[%s3 + $0x68] sm:$0xf]
  %v406 = vld [vmem:[%s3 + $0x6c] sm:$0xf]
  %v407 = vld [vmem:[%s3 + $0x70] sm:$0xf]
  %v408 = vld [vmem:[%s3 + $0x74] sm:$0xf]
  %v409 = vld [vmem:[%s3 + $0x78] sm:$0xf]
  %v410 = vld [vmem:[%s3 + $0x7c] sm:$0xf]
  %v411 = vld [vmem:[%s3 + $0x80] sm:$0xf]
  %v412 = vld [vmem:[%s3 + $0x84] sm:$0xf]
  %v413 = vld [vmem:[%s3 + $0x88] sm:$0xf]
  %v414 = vld [vmem:[%s3 + $0x8c] sm:$0xf]
  %v415 = vld [vmem:[%s3 + $0x90] sm:$0xf]
  %v416 = vld [vmem:[%s3 + $0x94] sm:$0xf]
  %v417 = vld [vmem:[%s3 + $0x98] sm:$0xf]
  %v418 = vld [vmem:[%s3 + $0x9c] sm:$0xf]
  %v419 = vld [vmem:[%s3 + $0xa0] sm:$0xf]
  %v420 = vld [vmem:[%s3 + $0xa4] sm:$0xf]
  %v421 = vld [vmem:[%s3 + $0xa8] sm:$0xf]
  %v422 = vld [vmem:[%s3 + $0xac] sm:$0xf]
  %v423 = vld [vmem:[%s3 + $0xb0] sm:$0xf]
  %v424 = vld [vmem:[%s3 + $0xb4] sm:$0xf]
  %v425 = vld [vmem:[%s3 + $0xb8] sm:$0xf]
  %v426 = vld [vmem:[%s3 + $0xbc] sm:$0xf]
  %v427 = vld [vmem:[%s3 + $0xc0] sm:$0xf]
  %v428 = vld [vmem:[%s3 + $0xc4] sm:$0xf]
  %v429 = vld [vmem:[%s3 + $0xc8] sm:$0xf]
  %v430 = vld [vmem:[%s3 + $0xcc] sm:$0xf]
  %v431 = vld [vmem:[%s3 + $0xd0] sm:$0xf]
  %v432 = vld [vmem:[%s3 + $0xd4] sm:$0xf]
  %v433 = vld [vmem:[%s3 + $0xd8] sm:$0xf]
  %v434 = vld [vmem:[%s3 + $0xdc] sm:$0xf]
  %v435 = vld [vmem:[%s3 + $0xe0] sm:$0xf]
  %v436 = vld [vmem:[%s3 + $0xe4] sm:$0xf]
  %v437 = vld [vmem:[%s3 + $0xe8] sm:$0xf]
  %v438 = vld [vmem:[%s3 + $0xec] sm:$0xf]
  %v439 = vld [vmem:[%s3 + $0xf0] sm:$0xf]
  %v440 = vld [vmem:[%s3 + $0xf4] sm:$0xf]
  %v441 = vld [vmem:[%s3 + $0xf8] sm:$0xf]
  %v442 = vld [vmem:[%s3 + $0xfc] sm:$0xf]
  %v443 = vld [vmem:[%s4] sm:$0x1]
  %v445 = vlaneseq
  %v446 = vshrl.u32 %v445, 7
  %v447 = vsub.s32 0, %v446
  %v448 = vrot.slane %v443, %v447
  %v514 = vunpack.c.l.b16 %v379
  %v515 = vunpack.c.l.b16 %v380
  %v516 = vunpack.c.l.b16 %v381
  %v517 = vunpack.c.l.b16 %v382
  %v518 = vunpack.c.l.b16 %v383
  %v519 = vunpack.c.l.b16 %v384
  %v520 = vunpack.c.l.b16 %v385
  %v521 = vunpack.c.l.b16 %v386
  %v522 = vunpack.c.l.b16 %v387
  %v523 = vunpack.c.l.b16 %v388
  %v524 = vunpack.c.l.b16 %v389
  %v525 = vunpack.c.l.b16 %v390
  %v526 = vunpack.c.l.b16 %v391
  %v527 = vunpack.c.l.b16 %v392
  %v528 = vunpack.c.l.b16 %v393
  %v529 = vunpack.c.l.b16 %v394
  %v530 = vunpack.c.l.b16 %v395
  %v531 = vunpack.c.l.b16 %v396
  %v532 = vunpack.c.l.b16 %v397
  %v533 = vunpack.c.l.b16 %v398
  %v534 = vunpack.c.l.b16 %v399
  %v535 = vunpack.c.l.b16 %v400
  %v536 = vunpack.c.l.b16 %v401
  %v537 = vunpack.c.l.b16 %v402
  %v538 = vunpack.c.l.b16 %v403
  %v539 = vunpack.c.l.b16 %v404
  %v540 = vunpack.c.l.b16 %v405
  %v541 = vunpack.c.l.b16 %v406
  %v542 = vunpack.c.l.b16 %v407
  %v543 = vunpack.c.l.b16 %v408
  %v544 = vunpack.c.l.b16 %v409
  %v545 = vunpack.c.l.b16 %v410
  %v546 = vunpack.c.l.b16 %v411
  %v547 = vunpack.c.l.b16 %v412
  %v548 = vunpack.c.l.b16 %v413
  %v549 = vunpack.c.l.b16 %v414
  %v550 = vunpack.c.l.b16 %v415
  %v551 = vunpack.c.l.b16 %v416
  %v552 = vunpack.c.l.b16 %v417
  %v553 = vunpack.c.l.b16 %v418
  %v554 = vunpack.c.l.b16 %v419
  %v555 = vunpack.c.l.b16 %v420
  %v556 = vunpack.c.l.b16 %v421
  %v557 = vunpack.c.l.b16 %v422
  %v558 = vunpack.c.l.b16 %v423
  %v559 = vunpack.c.l.b16 %v424
  %v560 = vunpack.c.l.b16 %v425
  %v561 = vunpack.c.l.b16 %v426
  %v562 = vunpack.c.l.b16 %v427
  %v563 = vunpack.c.l.b16 %v428
  %v564 = vunpack.c.l.b16 %v429
  %v565 = vunpack.c.l.b16 %v430
  %v566 = vunpack.c.l.b16 %v431
  %v567 = vunpack.c.l.b16 %v432
  %v568 = vunpack.c.l.b16 %v433
  %v569 = vunpack.c.l.b16 %v434
  %v570 = vunpack.c.l.b16 %v435
  %v571 = vunpack.c.l.b16 %v436
  %v572 = vunpack.c.l.b16 %v437
  %v573 = vunpack.c.l.b16 %v438
  %v574 = vunpack.c.l.b16 %v439
  %v575 = vunpack.c.l.b16 %v440
  %v576 = vunpack.c.l.b16 %v441
  %v577 = vunpack.c.l.b16 %v442
  %v578 = vpack.c.b16 %v515, %v514
  %v579 = vpack.c.b16 %v517, %v516
  %v580 = vpack.c.b16 %v519, %v518
  %v581 = vpack.c.b16 %v521, %v520
  %v582 = vpack.c.b16 %v523, %v522
  %v583 = vpack.c.b16 %v525, %v524
  %v584 = vpack.c.b16 %v527, %v526
  %v585 = vpack.c.b16 %v529, %v528
  %v586 = vpack.c.b16 %v531, %v530
  %v587 = vpack.c.b16 %v533, %v532
  %v588 = vpack.c.b16 %v535, %v534
  %v589 = vpack.c.b16 %v537, %v536
  %v590 = vpack.c.b16 %v539, %v538
  %v591 = vpack.c.b16 %v541, %v540
  %v592 = vpack.c.b16 %v543, %v542
  %v593 = vpack.c.b16 %v545, %v544
  %v594 = vpack.c.b16 %v547, %v546
  %v595 = vpack.c.b16 %v549, %v548
  %v596 = vpack.c.b16 %v551, %v550
  %v597 = vpack.c.b16 %v553, %v552
  %v598 = vpack.c.b16 %v555, %v554
  %v599 = vpack.c.b16 %v557, %v556
  %v600 = vpack.c.b16 %v559, %v558
  %v601 = vpack.c.b16 %v561, %v560
  %v602 = vpack.c.b16 %v563, %v562
  %v603 = vpack.c.b16 %v565, %v564
  %v604 = vpack.c.b16 %v567, %v566
  %v605 = vpack.c.b16 %v569, %v568
  %v606 = vpack.c.b16 %v571, %v570
  %v607 = vpack.c.b16 %v573, %v572
  %v608 = vpack.c.b16 %v575, %v574
  %v609 = vpack.c.b16 %v577, %v576
  %642 = vmatprep.subr.bf16.mxu0 0
  %643 = vmatpush1.bf16.msra.mxu0 %v578
  %644 = vmatprep.subr.bf16.mxu0 0
  %645 = vmatpush1.bf16.msra.mxu0 %v579
  %646 = vmatprep.subr.bf16.mxu0 0
  %647 = vmatpush1.bf16.msra.mxu0 %v580
  %648 = vmatprep.subr.bf16.mxu0 0
  %649 = vmatpush1.bf16.msra.mxu0 %v581
  %650 = vmatprep.subr.bf16.mxu0 0
  %651 = vmatpush1.bf16.msra.mxu0 %v582
  %652 = vmatprep.subr.bf16.mxu0 0
  %653 = vmatpush1.bf16.msra.mxu0 %v583
  %654 = vmatprep.subr.bf16.mxu0 0
  %655 = vmatpush1.bf16.msra.mxu0 %v584
  %656 = vmatprep.subr.bf16.mxu0 0
  %657 = vmatpush1.bf16.msra.mxu0 %v585
  %658 = vmatprep.subr.bf16.mxu0 0
  %659 = vmatpush1.bf16.msra.mxu0 %v586
  %660 = vmatprep.subr.bf16.mxu0 0
  %661 = vmatpush1.bf16.msra.mxu0 %v587
  %662 = vmatprep.subr.bf16.mxu0 0
  %663 = vmatpush1.bf16.msra.mxu0 %v588
  %664 = vmatprep.subr.bf16.mxu0 0
  %665 = vmatpush1.bf16.msra.mxu0 %v589
  %666 = vmatprep.subr.bf16.mxu0 0
  %667 = vmatpush1.bf16.msra.mxu0 %v590
  %668 = vmatprep.subr.bf16.mxu0 0
  %669 = vmatpush1.bf16.msra.mxu0 %v591
  %670 = vmatprep.subr.bf16.mxu0 0
  %671 = vmatpush1.bf16.msra.mxu0 %v592
  %672 = vmatprep.subr.bf16.mxu0 0
  %673 = vmatpush1.bf16.msra.mxu0 %v593
  %674 = vmatprep.mubr.bf16.mxu0 %v376
  %675 = vmatmul.mubr.bf16.gmra.mrb[0].mxu0 %v375
  %v676 = vpop.f32.mrb[0].mxu0
  %v677 = vadd.f32 %v448, %v676
  %v678 = vpop.f32.mrb[0].mxu0
  %v679 = vpop.f32.mrb[0].mxu0
  %v680 = vadd.f32 %v448, %v679
  %v681 = vpop.f32.mrb[0].mxu0
  %682 = vdwg.mxu0
  %683 = vmatprep.subr.bf16.mxu0 0
  %684 = vmatpush1.bf16.msra.mxu0 %v594
  %685 = vmatprep.subr.bf16.mxu0 0
  %686 = vmatpush1.bf16.msra.mxu0 %v595
  %687 = vmatprep.subr.bf16.mxu0 0
  %688 = vmatpush1.bf16.msra.mxu0 %v596
  %689 = vmatprep.subr.bf16.mxu0 0
  %690 = vmatpush1.bf16.msra.mxu0 %v597
  %691 = vmatprep.subr.bf16.mxu0 0
  %692 = vmatpush1.bf16.msra.mxu0 %v598
  %693 = vmatprep.subr.bf16.mxu0 0
  %694 = vmatpush1.bf16.msra.mxu0 %v599
  %695 = vmatprep.subr.bf16.mxu0 0
  %696 = vmatpush1.bf16.msra.mxu0 %v600
  %697 = vmatprep.subr.bf16.mxu0 0
  %698 = vmatpush1.bf16.msra.mxu0 %v601
  %699 = vmatprep.subr.bf16.mxu0 0
  %700 = vmatpush1.bf16.msra.mxu0 %v602
  %701 = vmatprep.subr.bf16.mxu0 0
  %702 = vmatpush1.bf16.msra.mxu0 %v603
  %703 = vmatprep.subr.bf16.mxu0 0
  %704 = vmatpush1.bf16.msra.mxu0 %v604
  %705 = vmatprep.subr.bf16.mxu0 0
  %706 = vmatpush1.bf16.msra.mxu0 %v605
  %707 = vmatprep.subr.bf16.mxu0 0
  %708 = vmatpush1.bf16.msra.mxu0 %v606
  %709 = vmatprep.subr.bf16.mxu0 0
  %710 = vmatpush1.bf16.msra.mxu0 %v607
  %711 = vmatprep.subr.bf16.mxu0 0
  %712 = vmatpush1.bf16.msra.mxu0 %v608
  %713 = vmatprep.subr.bf16.mxu0 0
  %714 = vmatpush1.bf16.msra.mxu0 %v609
  %715 = vmatprep.mubr.bf16.mxu0 %v378
  %716 = vmatmul.mubr.bf16.gmra.mrb[0].mxu0 %v377
  %v717 = vpop.f32.mrb[0].mxu0
  %v718 = vadd.f32 %v677, %v717
  %v719 = vpop.f32.mrb[0].mxu0
  %v720 = vpop.f32.mrb[0].mxu0
  %v721 = vadd.f32 %v680, %v720
  %v722 = vpop.f32.mrb[0].mxu0
  %723 = vdwg.mxu0
  %v724 = vunpack.c.l.bf16 %v27
  %v725 = vunpack.c.l.bf16 %v28
  %v726 = vadd.f32 %v718, %v724
  %v727 = vadd.f32 %v721, %v725
  %728 = vadd.xlane.f32.xlu0 %v726
  %v729 = vpop.xlane.xlu0 %728
  %730 = vadd.xlane.f32.xlu0 %v727
  %v731 = vpop.xlane.xlu0 %730
  %v732 = vrcp.pop 128.0
  %v733 = vmul.f32 %v729, %v732
  %v734 = vmul.f32 %v731, %v732
  %v735 = vsub.f32 %v726, %v733
  %v736 = vsub.f32 %v727, %v734
  %v737 = vmul.f32 %v735, %v735
  %v738 = vmul.f32 %v736, %v736
  %739 = vadd.xlane.f32.xlu0 %v737
  %v740 = vpop.xlane.xlu0 %739
  %741 = vadd.xlane.f32.xlu0 %v738
  %v742 = vpop.xlane.xlu0 %741
  %v743 = vmul.f32 %v740, %v732
  %v744 = vmul.f32 %v742, %v732
  %v745 = vadd.f32 %v743, 1e-12
  %v746 = vadd.f32 %v744, 1e-12
  %v747 = vrsqrt.pop %v745
  %v748 = vrsqrt.pop %v746
  %v749 = vmul.f32 %v735, %v747
  %v750 = vmul.f32 %v736, %v748
  %v751 = vld [vmem:[%s5] sm:$0x1]
  %v753 = vlaneseq
  %v754 = vshrl.u32 %v753, 7
  %v755 = vsub.s32 0, %v754
  %v756 = vrot.slane %v751, %v755
  %v758 = vmul.f32 %v749, %v756
  %v759 = vmul.f32 %v750, %v756
  %v760 = vld [vmem:[%s6] sm:$0x1]
  %v762 = vlaneseq
  %v763 = vshrl.u32 %v762, 7
  %v764 = vsub.s32 0, %v763
  %v765 = vrot.slane %v760, %v764
  %v767 = vadd.f32 %v758, %v765
  %v768 = vadd.f32 %v759, %v765
  %v769 = vpack.c.bf16 %v768, %v767
  %v771 = vunpack.c.l.b16 %v769
  %v772 = vunpack.c.h.b16 %v769
  %v773 = vpack.c.b16 %v771, %v771
  %v774 = vpack.c.b16 %v772, %v772
  %777 = vst [vmem:[%s7] sm:$0xf] %v773
  %778 = vst [vmem:[%s7 + $0x4] sm:$0xf] %v774
  // Predicated region
  $region30: #{bert_mlm_forward.19} parent=0 // pred_check
    _
  $region31: #{bert_mlm_forward.19} parent=0 // pred_check_branch
    %780 = sbr.rel (0) target = $region33
  $region32: #{bert_mlm_forward.19} parent=0 // pred_region
    _
  $region33: #{bert_mlm_forward.19} parent=0 // pred_fallthru
    _
  // Predicated region
  $region34: #{bert_mlm_forward.19} parent=0 // pred_check
    _
  $region35: #{bert_mlm_forward.19} parent=0 // pred_check_branch
    %782 = sbr.rel (0) target = $region37
  $region36: #{bert_mlm_forward.19} parent=0 // pred_region
    _
  $region37: #{bert_mlm_forward.19} parent=0 // pred_fallthru
    _

// kernel: bert_mlm_forward.20
$region0: #{bert_mlm_forward.20}
  #allocation0 [shape = 'u32[]', space=smem, size = 0x4, offset = 0x4, fixed_abs, tag = 'smem constant byte address 0x4 - core index']
  #allocation1 [shape = 'u32[144,128]{1,0:T(1,128)}', space=vmem, size = 0x12000, scoped, tag = 'internal scratch']
  #allocation2 [shape = 'f32[16,128]{1,0:T(8,128)}', space=vmem, size = 0x2000, scoped, tag = 'scratch operand']
  %s0 = inlined_call_operand.vmem [shape: bf16[16,128], index: 0, kind: input, shape index: {}]
  %s1 = inlined_call_operand.vmem [shape: bf16[128,128], index: 1, kind: input, shape index: {}]
  %s2 = inlined_call_operand.vmem [shape: f32[1,128], index: 2, kind: input, shape index: {}]
  %s3 = inlined_call_operand.vmem [shape: f32[1,128], index: 3, kind: input, shape index: {}]
  %s4 = inlined_call_operand.vmem [shape: f32[1,128], index: 4, kind: input, shape index: {}]
  %s5 = inlined_call_operand.vmem [shape: bf16[16,128], index: 5, kind: output, shape index: {}]
  %s6 = sld [smem:[#allocation0]]
  $region38: #{bert_mlm_forward.20} parent=0
    _
  %s8 = ssub.s32 1, %s6
  %s9 = scalar_select 0, %s8, %s6
  // Predicated region
  $region2: #{bert_mlm_forward.20} parent=0 // pred_check
    _
  $region3: #{bert_mlm_forward.20} parent=0 // pred_check_branch
    %11 = sbr.rel (0) target = $region5
  $region4: #{bert_mlm_forward.20} parent=0 // pred_region
    _
  $region5: #{bert_mlm_forward.20} parent=0 // pred_fallthru
    _
  // Predicated region
  $region6: #{bert_mlm_forward.20} parent=0 // pred_check
    _
  $region7: #{bert_mlm_forward.20} parent=0 // pred_check_branch
    %13 = sbr.rel (0) target = $region9
  $region8: #{bert_mlm_forward.20} parent=0 // pred_region
    _
  $region9: #{bert_mlm_forward.20} parent=0 // pred_fallthru
    _
  // Predicated region
  $region10: #{bert_mlm_forward.20} parent=0 // pred_check
    _
  $region11: #{bert_mlm_forward.20} parent=0 // pred_check_branch
    %15 = sbr.rel (0) target = $region13
  $region12: #{bert_mlm_forward.20} parent=0 // pred_region
    _
  $region13: #{bert_mlm_forward.20} parent=0 // pred_fallthru
    _
  // Predicated region
  $region14: #{bert_mlm_forward.20} parent=0 // pred_check
    _
  $region15: #{bert_mlm_forward.20} parent=0 // pred_check_branch
    %17 = sbr.rel (0) target = $region17
  $region16: #{bert_mlm_forward.20} parent=0 // pred_region
    _
  $region17: #{bert_mlm_forward.20} parent=0 // pred_fallthru
    _
  // Predicated region
  $region18: #{bert_mlm_forward.20} parent=0 // pred_check
    _
  $region19: #{bert_mlm_forward.20} parent=0 // pred_check_branch
    %19 = sbr.rel (0) target = $region21
  $region20: #{bert_mlm_forward.20} parent=0 // pred_region
    _
  $region21: #{bert_mlm_forward.20} parent=0 // pred_fallthru
    _
  %p21 = scmp.eq.s32.totalorder 0, 0
  // Predicated region
  $region22: #{bert_mlm_forward.20} parent=0 // pred_check
    %p22 = pneg %p21
  $region23: #{bert_mlm_forward.20} parent=0 // pred_check_branch
    %24 = sbr.rel (%p22) target = $region25
  $region24: #{bert_mlm_forward.20} parent=0 // pred_region
    %25 = vst [vmem:[#allocation2] sm:$0xff] 0.0
    %26 = vst [vmem:[#allocation2 + $0x8] sm:$0xff] 0.0
  $region25: #{bert_mlm_forward.20} parent=0 // pred_fallthru
    _
  %v27 = vld [vmem:[#allocation2] sm:$0xff]
  %v28 = vld [vmem:[#allocation2 + $0x8] sm:$0xff]
  %v29 = vld [vmem:[%s0] sm:$0xf]
  %v30 = vld [vmem:[%s0 + $0x4] sm:$0xf]
  %v31 = vld [vmem:[%s1] sm:$0xf]
  %v32 = vld [vmem:[%s1 + $0x4] sm:$0xf]
  %v33 = vld [vmem:[%s1 + $0x8] sm:$0xf]
  %v34 = vld [vmem:[%s1 + $0xc] sm:$0xf]
  %v35 = vld [vmem:[%s1 + $0x10] sm:$0xf]
  %v36 = vld [vmem:[%s1 + $0x14] sm:$0xf]
  %v37 = vld [vmem:[%s1 + $0x18] sm:$0xf]
  %v38 = vld [vmem:[%s1 + $0x1c] sm:$0xf]
  %v39 = vld [vmem:[%s1 + $0x20] sm:$0xf]
  %v40 = vld [vmem:[%s1 + $0x24] sm:$0xf]
  %v41 = vld [vmem:[%s1 + $0x28] sm:$0xf]
  %v42 = vld [vmem:[%s1 + $0x2c] sm:$0xf]
  %v43 = vld [vmem:[%s1 + $0x30] sm:$0xf]
  %v44 = vld [vmem:[%s1 + $0x34] sm:$0xf]
  %v45 = vld [vmem:[%s1 + $0x38] sm:$0xf]
  %v46 = vld [vmem:[%s1 + $0x3c] sm:$0xf]
  %v49 = vunpack.c.l.b16 %v29
  %v50 = vunpack.c.l.b16 %v30
  %v51 = vpack.c.b16 %v50, %v49
  %v69 = vunpack.c.l.b16 %v31
  %v70 = vunpack.c.l.b16 %v32
  %v71 = vunpack.c.l.b16 %v33
  %v72 = vunpack.c.l.b16 %v34
  %v73 = vunpack.c.l.b16 %v35
  %v74 = vunpack.c.l.b16 %v36
  %v75 = vunpack.c.l.b16 %v37
  %v76 = vunpack.c.l.b16 %v38
  %v77 = vunpack.c.l.b16 %v39
  %v78 = vunpack.c.l.b16 %v40
  %v79 = vunpack.c.l.b16 %v41
  %v80 = vunpack.c.l.b16 %v42
  %v81 = vunpack.c.l.b16 %v43
  %v82 = vunpack.c.l.b16 %v44
  %v83 = vunpack.c.l.b16 %v45
  %v84 = vunpack.c.l.b16 %v46
  %v85 = vpack.c.b16 %v70, %v69
  %v86 = vpack.c.b16 %v72, %v71
  %v87 = vpack.c.b16 %v74, %v73
  %v88 = vpack.c.b16 %v76, %v75
  %v89 = vpack.c.b16 %v78, %v77
  %v90 = vpack.c.b16 %v80, %v79
  %v91 = vpack.c.b16 %v82, %v81
  %v92 = vpack.c.b16 %v84, %v83
  %101 = vmatprep.subr.bf16.mxu0 0
  %102 = vmatpush1.bf16.msra.mxu0 %v85
  %103 = vmatprep.subr.bf16.mxu0 0
  %104 = vmatpush1.bf16.msra.mxu0 %v86
  %105 = vmatprep.subr.bf16.mxu0 0
  %106 = vmatpush1.bf16.msra.mxu0 %v87
  %107 = vmatprep.subr.bf16.mxu0 0
  %108 = vmatpush1.bf16.msra.mxu0 %v88
  %109 = vmatprep.subr.bf16.mxu0 0
  %110 = vmatpush1.bf16.msra.mxu0 %v89
  %111 = vmatprep.subr.bf16.mxu0 0
  %112 = vmatpush1.bf16.msra.mxu0 %v90
  %113 = vmatprep.subr.bf16.mxu0 0
  %114 = vmatpush1.bf16.msra.mxu0 %v91
  %115 = vmatprep.subr.bf16.mxu0 0
  %116 = vmatpush1.bf16.msra.mxu0 %v92
  %117 = vmatprep.subr.bf16.mxu0 0
  %118 = vmatpush1.bf16.msra.mxu0 0
  %119 = vmatprep.subr.bf16.mxu0 0
  %120 = vmatpush1.bf16.msra.mxu0 0
  %121 = vmatprep.subr.bf16.mxu0 0
  %122 = vmatpush1.bf16.msra.mxu0 0
  %123 = vmatprep.subr.bf16.mxu0 0
  %124 = vmatpush1.bf16.msra.mxu0 0
  %125 = vmatprep.subr.bf16.mxu0 0
  %126 = vmatpush1.bf16.msra.mxu0 0
  %127 = vmatprep.subr.bf16.mxu0 0
  %128 = vmatpush1.bf16.msra.mxu0 0
  %129 = vmatprep.subr.bf16.mxu0 0
  %130 = vmatpush1.bf16.msra.mxu0 0
  %131 = vmatprep.subr.bf16.mxu0 0
  %132 = vmatpush1.bf16.msra.mxu0 0
  %133 = vmatprep.mubr.bf16.mxu0 0
  %134 = vmatmul.mubr.bf16.gmra.mrb[0].mxu0 %v51
  %v135 = vpop.f32.mrb[0].mxu0
  %v136 = vadd.f32 0.0, %v135
  %v137 = vpop.f32.mrb[0].mxu0
  %v138 = vpop.f32.mrb[0].mxu0
  %v139 = vadd.f32 0.0, %v138
  %v140 = vpop.f32.mrb[0].mxu0
  %141 = vdwg.mxu0
  %v142 = vadd.f32 %v27, %v136
  %v143 = vadd.f32 %v28, %v139
  %144 = vst [vmem:[#allocation2] sm:$0xff] %v142
  %145 = vst [vmem:[#allocation2 + $0x8] sm:$0xff] %v143
  // Predicated region
  $region26: #{bert_mlm_forward.20} parent=0 // pred_check
    %p146 = pneg %p21
  $region27: #{bert_mlm_forward.20} parent=0 // pred_check_branch
    %148 = sbr.rel (%p146) target = $region29
  $region28: #{bert_mlm_forward.20} parent=0 // pred_region
    %v149 = vld [vmem:[#allocation2] sm:$0xff]
    %v150 = vld [vmem:[#allocation2 + $0x8] sm:$0xff]
    %v151 = vld [vmem:[%s2] sm:$0x1]
    %v153 = vlaneseq
    %v154 = vshrl.u32 %v153, 7
    %v155 = vsub.s32 0, %v154
    %v156 = vrot.slane %v151, %v155
    %v158 = vadd.f32 %v149, %v156
    %v159 = vadd.f32 %v150, %v156
    %v160 = vmul.f32 %v158, 0.5
    %v161 = vmul.f32 %v159, 0.5
    %v162 = vmul.f32 %v158, 0.70710677
    %v163 = vmul.f32 %v159, 0.70710677
    %v164 = verf.f32.pop %v162
    %v165 = verf.f32.pop %v163
    %v166 = vadd.f32 %v164, 1.0
    %v167 = vadd.f32 %v165, 1.0
    %v168 = vmul.f32 %v160, %v166
    %v169 = vmul.f32 %v161, %v167
    %170 = vadd.xlane.f32.xlu0 %v168
    %v171 = vpop.xlane.xlu0 %170
    %172 = vadd.xlane.f32.xlu0 %v169
    %v173 = vpop.xlane.xlu0 %172
    %v174 = vrcp.pop 128.0
    %v175 = vmul.f32 %v171, %v174
    %v176 = vmul.f32 %v173, %v174
    %v177 = vsub.f32 %v168, %v175
    %v178 = vsub.f32 %v169, %v176
    %v179 = vmul.f32 %v177, %v177
    %v180 = vmul.f32 %v178, %v178
    %181 = vadd.xlane.f32.xlu0 %v179
    %v182 = vpop.xlane.xlu0 %181
    %183 = vadd.xlane.f32.xlu0 %v180
    %v184 = vpop.xlane.xlu0 %183
    %v185 = vmul.f32 %v182, %v174
    %v186 = vmul.f32 %v184, %v174
    %v187 = vadd.f32 %v185, 1e-12
    %v188 = vadd.f32 %v186, 1e-12
    %v189 = vrsqrt.pop %v187
    %v190 = vrsqrt.pop %v188
    %v191 = vmul.f32 %v177, %v189
    %v192 = vmul.f32 %v178, %v190
    %v193 = vld [vmem:[%s3] sm:$0x1]
    %v195 = vlaneseq
    %v196 = vshrl.u32 %v195, 7
    %v197 = vsub.s32 0, %v196
    %v198 = vrot.slane %v193, %v197
    %v200 = vmul.f32 %v191, %v198
    %v201 = vmul.f32 %v192, %v198
    %v202 = vld [vmem:[%s4] sm:$0x1]
    %v204 = vlaneseq
    %v205 = vshrl.u32 %v204, 7
    %v206 = vsub.s32 0, %v205
    %v207 = vrot.slane %v202, %v206
    %v209 = vadd.f32 %v200, %v207
    %v210 = vadd.f32 %v201, %v207
    %v211 = vpack.c.bf16 %v210, %v209
    %v213 = vunpack.c.l.b16 %v211
    %v214 = vunpack.c.h.b16 %v211
    %v215 = vpack.c.b16 %v213, %v213
    %v216 = vpack.c.b16 %v214, %v214
    %219 = vst [vmem:[%s5] sm:$0xf] %v215
    %220 = vst [vmem:[%s5 + $0x4] sm:$0xf] %v216
  $region29: #{bert_mlm_forward.20} parent=0 // pred_fallthru
    _
  // Predicated region
  $region30: #{bert_mlm_forward.20} parent=0 // pred_check
    _
  $region31: #{bert_mlm_forward.20} parent=0 // pred_check_branch
    %222 = sbr.rel (0) target = $region33
  $region32: #{bert_mlm_forward.20} parent=0 // pred_region
    _
  $region33: #{bert_mlm_forward.20} parent=0 // pred_fallthru
    _
  // Predicated region
  $region34: #{bert_mlm_forward.20} parent=0 // pred_check
    _
  $region35: #{bert_mlm_forward.20} parent=0 // pred_check_branch
    %224 = sbr.rel (0) target = $region37
  $region36: #{bert_mlm_forward.20} parent=0 // pred_region
    _
  $region37: #{bert_mlm_forward.20} parent=0 // pred_fallthru
    _

// kernel: bert_mlm_forward.15
$region0: #{bert_mlm_forward.15}
  #allocation0 [shape = 'u32[]', space=smem, size = 0x4, offset = 0x4, fixed_abs, tag = 'smem constant byte address 0x4 - core index']
  #allocation1 [shape = 'u32[144,128]{1,0:T(1,128)}', space=vmem, size = 0x12000, scoped, tag = 'internal scratch']
  %s0 = inlined_call_operand.vmem [shape: bf16[16,128], index: 0, kind: input, shape index: {}]
  %s1 = inlined_call_operand.vmem [shape: bf16[128,512], index: 1, kind: input, shape index: {}]
  %s2 = inlined_call_operand.vmem [shape: f32[1,512], index: 2, kind: input, shape index: {}]
  %s3 = inlined_call_operand.hbm [shape: bf16[512,128], index: 3, kind: input, shape index: {}]
  %s4 = inlined_call_operand.vmem [shape: f32[1,128], index: 4, kind: input, shape index: {}]
  %s5 = inlined_call_operand.vmem [shape: f32[1,128], index: 5, kind: input, shape index: {}]
  %s6 = inlined_call_operand.vmem [shape: f32[1,128], index: 6, kind: input, shape index: {}]
  %s7 = inlined_call_operand.vmem [shape: bf16[16,128], index: 7, kind: output, shape index: {}]
  %s8 = sld [smem:[#allocation0]]
  $region42: #{bert_mlm_forward.15} parent=0
    _
  %s10 = ssub.s32 1, %s8
  %s11 = scalar_select 0, %s10, %s8
  $region1: #{bert_mlm_forward.15} parent=0
    #allocation2 [shape = 'u8[131072]{0}', space=vmem, size = 0x20000, scoped, tag = 'input window, operand 3, single buffered']
    #allocation3 [shape = 's32[1]{0}', space=sflag, size = 0x4, scoped, tag = 'scoped memory for bert_mlm_forward.15']
    %12 = vsyncpa [#allocation3], 0
    // Predicated region
    $region2: #{bert_mlm_forward.15} parent=1 // pred_check
      _
    $region3: #{bert_mlm_forward.15} parent=1 // pred_check_branch
      %14 = sbr.rel (0) target = $region5
    $region4: #{bert_mlm_forward.15} parent=1 // pred_region
      _
    $region5: #{bert_mlm_forward.15} parent=1 // pred_fallthru
      _
    // Predicated region
    $region6: #{bert_mlm_forward.15} parent=1 // pred_check
      _
    $region7: #{bert_mlm_forward.15} parent=1 // pred_check_branch
      %16 = sbr.rel (0) target = $region9
    $region8: #{bert_mlm_forward.15} parent=1 // pred_region
      _
    $region9: #{bert_mlm_forward.15} parent=1 // pred_fallthru
      _
    // Predicated region
    $region10: #{bert_mlm_forward.15} parent=1 // pred_check
      _
    $region11: #{bert_mlm_forward.15} parent=1 // pred_check_branch
      %18 = sbr.rel (0) target = $region13
    $region12: #{bert_mlm_forward.15} parent=1 // pred_region
      _
    $region13: #{bert_mlm_forward.15} parent=1 // pred_fallthru
      _
    // Predicated region
    $region14: #{bert_mlm_forward.15} parent=1 // pred_check
      _
    $region15: #{bert_mlm_forward.15} parent=1 // pred_check_branch
      %20 = sbr.rel (0) target = $region17
    $region16: #{bert_mlm_forward.15} parent=1 // pred_region
      %s22 = ssub.s32 4096, 4096
      %23 = vsyncadd [#allocation3], %s22
      %s24 = sshll.u32 [#allocation2], 4
      %s25 = int_to_ptr.vmem [resolvable:$true] %s24
      %30 = dma.hbm_to_vmem [thread:$0]  %s3, 4096, %s25, [#allocation3], 64, 64, 4
    $region17: #{bert_mlm_forward.15} parent=1 // pred_fallthru
      _
    // Predicated region
    $region18: #{bert_mlm_forward.15} parent=1 // pred_check
      _
    $region19: #{bert_mlm_forward.15} parent=1 // pred_check_branch
      %32 = sbr.rel (0) target = $region21
    $region20: #{bert_mlm_forward.15} parent=1 // pred_region
      _
    $region21: #{bert_mlm_forward.15} parent=1 // pred_fallthru
      _
    // Predicated region
    $region22: #{bert_mlm_forward.15} parent=1 // pred_check
      _
    $region23: #{bert_mlm_forward.15} parent=1 // pred_check_branch
      %34 = sbr.rel (0) target = $region25
    $region24: #{bert_mlm_forward.15} parent=1 // pred_region
      _
    $region25: #{bert_mlm_forward.15} parent=1 // pred_fallthru
      _
    // Predicated region
    $region26: #{bert_mlm_forward.15} parent=1 // pred_check
      _
    $region27: #{bert_mlm_forward.15} parent=1 // pred_check_branch
      %36 = sbr.rel (0) target = $region29
    $region28: #{bert_mlm_forward.15} parent=1 // pred_region
      _
    $region29: #{bert_mlm_forward.15} parent=1 // pred_fallthru
      _
    // Predicated region
    $region30: #{bert_mlm_forward.15} parent=1 // pred_check
      _
    $region31: #{bert_mlm_forward.15} parent=1 // pred_check_branch
      %38 = sbr.rel (0) target = $region33
    $region32: #{bert_mlm_forward.15} parent=1 // pred_region
      %39 = dma.done [#allocation3], 4096
    $region33: #{bert_mlm_forward.15} parent=1 // pred_fallthru
      _
    %v41 = vld [vmem:[%s0] sm:$0xf]
    %v42 = vld [vmem:[%s0 + $0x4] sm:$0xf]
    %v43 = vld [vmem:[%s1] sm:$0xff]
    %v44 = vld [vmem:[%s1 + $0x8] sm:$0xff]
    %v45 = vld [vmem:[%s1 + $0x10] sm:$0xff]
    %v46 = vld [vmem:[%s1 + $0x18] sm:$0xff]
    %v47 = vld [vmem:[%s1 + $0x20] sm:$0xff]
    %v48 = vld [vmem:[%s1 + $0x28] sm:$0xff]
    %v49 = vld [vmem:[%s1 + $0x30] sm:$0xff]
    %v50 = vld [vmem:[%s1 + $0x38] sm:$0xff]
    %v51 = vld [vmem:[%s1 + $0x40] sm:$0xff]
    %v52 = vld [vmem:[%s1 + $0x48] sm:$0xff]
    %v53 = vld [vmem:[%s1 + $0x50] sm:$0xff]
    %v54 = vld [vmem:[%s1 + $0x58] sm:$0xff]
    %v55 = vld [vmem:[%s1 + $0x60] sm:$0xff]
    %v56 = vld [vmem:[%s1 + $0x68] sm:$0xff]
    %v57 = vld [vmem:[%s1 + $0x70] sm:$0xff]
    %v58 = vld [vmem:[%s1 + $0x78] sm:$0xff]
    %v59 = vld [vmem:[%s1 + $0x80] sm:$0xff]
    %v60 = vld [vmem:[%s1 + $0x88] sm:$0xff]
    %v61 = vld [vmem:[%s1 + $0x90] sm:$0xff]
    %v62 = vld [vmem:[%s1 + $0x98] sm:$0xff]
    %v63 = vld [vmem:[%s1 + $0xa0] sm:$0xff]
    %v64 = vld [vmem:[%s1 + $0xa8] sm:$0xff]
    %v65 = vld [vmem:[%s1 + $0xb0] sm:$0xff]
    %v66 = vld [vmem:[%s1 + $0xb8] sm:$0xff]
    %v67 = vld [vmem:[%s1 + $0xc0] sm:$0xff]
    %v68 = vld [vmem:[%s1 + $0xc8] sm:$0xff]
    %v69 = vld [vmem:[%s1 + $0xd0] sm:$0xff]
    %v70 = vld [vmem:[%s1 + $0xd8] sm:$0xff]
    %v71 = vld [vmem:[%s1 + $0xe0] sm:$0xff]
    %v72 = vld [vmem:[%s1 + $0xe8] sm:$0xff]
    %v73 = vld [vmem:[%s1 + $0xf0] sm:$0xff]
    %v74 = vld [vmem:[%s1 + $0xf8] sm:$0xff]
    %v75 = vld [vmem:[%s2] sm:$0xf]
    %v77 = vlaneseq
    %v78 = vshrl.u32 %v77, 7
    %v79 = vsub.s32 0, %v78
    %v80 = vrot.slane %v75, %v79
    %v81 = vlaneseq
    %v82 = vshrl.u32 %v81, 7
    %v83 = vsub.s32 1, %v82
    %v84 = vrot.slane %v75, %v83
    %v85 = vlaneseq
    %v86 = vshrl.u32 %v85, 7
    %v87 = vsub.s32 2, %v86
    %v88 = vrot.slane %v75, %v87
    %v89 = vlaneseq
    %v90 = vshrl.u32 %v89, 7
    %v91 = vsub.s32 3, %v90
    %v92 = vrot.slane %v75, %v91
    %v99 = vunpack.c.l.b16 %v41
    %v100 = vunpack.c.l.b16 %v42
    %v101 = vpack.c.b16 %v100, %v99
    %v135 = vunpack.c.l.b16 %v43
    %v136 = vunpack.c.h.b16 %v43
    %v137 = vunpack.c.l.b16 %v44
    %v138 = vunpack.c.h.b16 %v44
    %v139 = vunpack.c.l.b16 %v45
    %v140 = vunpack.c.h.b16 %v45
    %v141 = vunpack.c.l.b16 %v46
    %v142 = vunpack.c.h.b16 %v46
    %v143 = vunpack.c.l.b16 %v47
    %v144 = vunpack.c.h.b16 %v47
    %v145 = vunpack.c.l.b16 %v48
    %v146 = vunpack.c.h.b16 %v48
    %v147 = vunpack.c.l.b16 %v49
    %v148 = vunpack.c.h.b16 %v49
    %v149 = vunpack.c.l.b16 %v50
    %v150 = vunpack.c.h.b16 %v50
    %v151 = vunpack.c.l.b16 %v51
    %v152 = vunpack.c.h.b16 %v51
    %v153 = vunpack.c.l.b16 %v52
    %v154 = vunpack.c.h.b16 %v52
    %v155 = vunpack.c.l.b16 %v53
    %v156 = vunpack.c.h.b16 %v53
    %v157 = vunpack.c.l.b16 %v54
    %v158 = vunpack.c.h.b16 %v54
    %v159 = vunpack.c.l.b16 %v55
    %v160 = vunpack.c.h.b16 %v55
    %v161 = vunpack.c.l.b16 %v56
    %v162 = vunpack.c.h.b16 %v56
    %v163 = vunpack.c.l.b16 %v57
    %v164 = vunpack.c.h.b16 %v57
    %v165 = vunpack.c.l.b16 %v58
    %v166 = vunpack.c.h.b16 %v58
    %v167 = vunpack.c.l.b16 %v59
    %v168 = vunpack.c.h.b16 %v59
    %v169 = vunpack.c.l.b16 %v60
    %v170 = vunpack.c.h.b16 %v60
    %v171 = vunpack.c.l.b16 %v61
    %v172 = vunpack.c.h.b16 %v61
    %v173 = vunpack.c.l.b16 %v62
    %v174 = vunpack.c.h.b16 %v62
    %v175 = vunpack.c.l.b16 %v63
    %v176 = vunpack.c.h.b16 %v63
    %v177 = vunpack.c.l.b16 %v64
    %v178 = vunpack.c.h.b16 %v64
    %v179 = vunpack.c.l.b16 %v65
    %v180 = vunpack.c.h.b16 %v65
    %v181 = vunpack.c.l.b16 %v66
    %v182 = vunpack.c.h.b16 %v66
    %v183 = vunpack.c.l.b16 %v67
    %v184 = vunpack.c.h.b16 %v67
    %v185 = vunpack.c.l.b16 %v68
    %v186 = vunpack.c.h.b16 %v68
    %v187 = vunpack.c.l.b16 %v69
    %v188 = vunpack.c.h.b16 %v69
    %v189 = vunpack.c.l.b16 %v70
    %v190 = vunpack.c.h.b16 %v70
    %v191 = vunpack.c.l.b16 %v71
    %v192 = vunpack.c.h.b16 %v71
    %v193 = vunpack.c.l.b16 %v72
    %v194 = vunpack.c.h.b16 %v72
    %v195 = vunpack.c.l.b16 %v73
    %v196 = vunpack.c.h.b16 %v73
    %v197 = vunpack.c.l.b16 %v74
    %v198 = vunpack.c.h.b16 %v74
    %v199 = vpack.c.b16 %v139, %v135
    %v200 = vpack.c.b16 %v140, %v136
    %v201 = vpack.c.b16 %v141, %v137
    %v202 = vpack.c.b16 %v142, %v138
    %v203 = vpack.c.b16 %v147, %v143
    %v204 = vpack.c.b16 %v148, %v144
    %v205 = vpack.c.b16 %v149, %v145
    %v206 = vpack.c.b16 %v150, %v146
    %v207 = vpack.c.b16 %v155, %v151
    %v208 = vpack.c.b16 %v156, %v152
    %v209 = vpack.c.b16 %v157, %v153
    %v210 = vpack.c.b16 %v158, %v154
    %v211 = vpack.c.b16 %v163, %v159
    %v212 = vpack.c.b16 %v164, %v160
    %v213 = vpack.c.b16 %v165, %v161
    %v214 = vpack.c.b16 %v166, %v162
    %v215 = vpack.c.b16 %v171, %v167
    %v216 = vpack.c.b16 %v172, %v168
    %v217 = vpack.c.b16 %v173, %v169
    %v218 = vpack.c.b16 %v174, %v170
    %v219 = vpack.c.b16 %v179, %v175
    %v220 = vpack.c.b16 %v180, %v176
    %v221 = vpack.c.b16 %v181, %v177
    %v222 = vpack.c.b16 %v182, %v178
    %v223 = vpack.c.b16 %v187, %v183
    %v224 = vpack.c.b16 %v188, %v184
    %v225 = vpack.c.b16 %v189, %v185
    %v226 = vpack.c.b16 %v190, %v186
    %v227 = vpack.c.b16 %v195, %v191
    %v228 = vpack.c.b16 %v196, %v192
    %v229 = vpack.c.b16 %v197, %v193
    %v230 = vpack.c.b16 %v198, %v194
    %263 = vmatprep.subr.bf16.mxu0 %v200
    %264 = vmatpush1.bf16.msra.mxu0 %v199
    %265 = vmatprep.subr.bf16.mxu0 %v204
    %266 = vmatpush1.bf16.msra.mxu0 %v203
    %267 = vmatprep.subr.bf16.mxu0 %v208
    %268 = vmatpush1.bf16.msra.mxu0 %v207
    %269 = vmatprep.subr.bf16.mxu0 %v212
    %270 = vmatpush1.bf16.msra.mxu0 %v211
    %271 = vmatprep.subr.bf16.mxu0 %v216
    %272 = vmatpush1.bf16.msra.mxu0 %v215
    %273 = vmatprep.subr.bf16.mxu0 %v220
    %274 = vmatpush1.bf16.msra.mxu0 %v219
    %275 = vmatprep.subr.bf16.mxu0 %v224
    %276 = vmatpush1.bf16.msra.mxu0 %v223
    %277 = vmatprep.subr.bf16.mxu0 %v228
    %278 = vmatpush1.bf16.msra.mxu0 %v227
    %279 = vmatprep.subr.bf16.mxu0 0
    %280 = vmatpush1.bf16.msra.mxu0 0
    %281 = vmatprep.subr.bf16.mxu0 0
    %282 = vmatpush1.bf16.msra.mxu0 0
    %283 = vmatprep.subr.bf16.mxu0 0
    %284 = vmatpush1.bf16.msra.mxu0 0
    %285 = vmatprep.subr.bf16.mxu0 0
    %286 = vmatpush1.bf16.msra.mxu0 0
    %287 = vmatprep.subr.bf16.mxu0 0
    %288 = vmatpush1.bf16.msra.mxu0 0
    %289 = vmatprep.subr.bf16.mxu0 0
    %290 = vmatpush1.bf16.msra.mxu0 0
    %291 = vmatprep.subr.bf16.mxu0 0
    %292 = vmatpush1.bf16.msra.mxu0 0
    %293 = vmatprep.subr.bf16.mxu0 0
    %294 = vmatpush1.bf16.msra.mxu0 0
    %295 = vmatprep.mubr.bf16.mxu0 0
    %296 = vmatmul.mubr.bf16.gmra.mrb[0].mxu0 %v101
    %v297 = vpop.f32.mrb[0].mxu0
    %v298 = vadd.f32 %v80, %v297
    %v299 = vpop.f32.mrb[0].mxu0
    %v300 = vadd.f32 %v84, %v299
    %v301 = vpop.f32.mrb[0].mxu0
    %v302 = vadd.f32 %v80, %v301
    %v303 = vpop.f32.mrb[0].mxu0
    %v304 = vadd.f32 %v84, %v303
    %305 = vdwg.mxu0
    %306 = vmatprep.subr.bf16.mxu0 %v202
    %307 = vmatpush1.bf16.msra.mxu0 %v201
    %308 = vmatprep.subr.bf16.mxu0 %v206
    %309 = vmatpush1.bf16.msra.mxu0 %v205
    %310 = vmatprep.subr.bf16.mxu0 %v210
    %311 = vmatpush1.bf16.msra.mxu0 %v209
    %312 = vmatprep.subr.bf16.mxu0 %v214
    %313 = vmatpush1.bf16.msra.mxu0 %v213
    %314 = vmatprep.subr.bf16.mxu0 %v218
    %315 = vmatpush1.bf16.msra.mxu0 %v217
    %316 = vmatprep.subr.bf16.mxu0 %v222
    %317 = vmatpush1.bf16.msra.mxu0 %v221
    %318 = vmatprep.subr.bf16.mxu0 %v226
    %319 = vmatpush1.bf16.msra.mxu0 %v225
    %320 = vmatprep.subr.bf16.mxu0 %v230
    %321 = vmatpush1.bf16.msra.mxu0 %v229
    %322 = vmatprep.subr.bf16.mxu0 0
    %323 = vmatpush1.bf16.msra.mxu0 0
    %324 = vmatprep.subr.bf16.mxu0 0
    %325 = vmatpush1.bf16.msra.mxu0 0
    %326 = vmatprep.subr.bf16.mxu0 0
    %327 = vmatpush1.bf16.msra.mxu0 0
    %328 = vmatprep.subr.bf16.mxu0 0
    %329 = vmatpush1.bf16.msra.mxu0 0
    %330 = vmatprep.subr.bf16.mxu0 0
    %331 = vmatpush1.bf16.msra.mxu0 0
    %332 = vmatprep.subr.bf16.mxu0 0
    %333 = vmatpush1.bf16.msra.mxu0 0
    %334 = vmatprep.subr.bf16.mxu0 0
    %335 = vmatpush1.bf16.msra.mxu0 0
    %336 = vmatprep.subr.bf16.mxu0 0
    %337 = vmatpush1.bf16.msra.mxu0 0
    %338 = vmatprep.mubr.bf16.mxu0 0
    %339 = vmatmul.mubr.bf16.gmra.mrb[0].mxu0 %v101
    %v340 = vpop.f32.mrb[0].mxu0
    %v341 = vadd.f32 %v88, %v340
    %v342 = vpop.f32.mrb[0].mxu0
    %v343 = vadd.f32 %v92, %v342
    %v344 = vpop.f32.mrb[0].mxu0
    %v345 = vadd.f32 %v88, %v344
    %v346 = vpop.f32.mrb[0].mxu0
    %v347 = vadd.f32 %v92, %v346
    %348 = vdwg.mxu0
    %v349 = vmul.f32 %v298, 0.5
    %v350 = vmul.f32 %v300, 0.5
    %v351 = vmul.f32 %v341, 0.5
    %v352 = vmul.f32 %v343, 0.5
    %v353 = vmul.f32 %v302, 0.5
    %v354 = vmul.f32 %v304, 0.5
    %v355 = vmul.f32 %v345, 0.5
    %v356 = vmul.f32 %v347, 0.5
    %v357 = vmul.f32 %v298, 0.70710677
    %v358 = vmul.f32 %v300, 0.70710677
    %v359 = vmul.f32 %v341, 0.70710677
    %v360 = vmul.f32 %v343, 0.70710677
    %v361 = vmul.f32 %v302, 0.70710677
    %v362 = vmul.f32 %v304, 0.70710677
    %v363 = vmul.f32 %v345, 0.70710677
    %v364 = vmul.f32 %v347, 0.70710677
    %v365 = verf.f32.pop %v357
    %v366 = verf.f32.pop %v358
    %v367 = verf.f32.pop %v359
    %v368 = verf.f32.pop %v360
    %v369 = verf.f32.pop %v361
    %v370 = verf.f32.pop %v362
    %v371 = verf.f32.pop %v363
    %v372 = verf.f32.pop %v364
    %v373 = vadd.f32 %v365, 1.0
    %v374 = vadd.f32 %v366, 1.0
    %v375 = vadd.f32 %v367, 1.0
    %v376 = vadd.f32 %v368, 1.0
    %v377 = vadd.f32 %v369, 1.0
    %v378 = vadd.f32 %v370, 1.0
    %v379 = vadd.f32 %v371, 1.0
    %v380 = vadd.f32 %v372, 1.0
    %v381 = vmul.f32 %v349, %v373
    %v382 = vmul.f32 %v350, %v374
    %v383 = vmul.f32 %v351, %v375
    %v384 = vmul.f32 %v352, %v376
    %v385 = vmul.f32 %v353, %v377
    %v386 = vmul.f32 %v354, %v378
    %v387 = vmul.f32 %v355, %v379
    %v388 = vmul.f32 %v356, %v380
    %v389 = vpack.c.bf16 %v385, %v381
    %v390 = vpack.c.bf16 %v386, %v382
    %v391 = vpack.c.bf16 %v387, %v383
    %v392 = vpack.c.bf16 %v388, %v384
    %v393 = vld [vmem:[#allocation2] sm:$0xf]
    %v394 = vld [vmem:[#allocation2 + $0x4] sm:$0xf]
    %v395 = vld [vmem:[#allocation2 + $0x8] sm:$0xf]
    %v396 = vld [vmem:[#allocation2 + $0xc] sm:$0xf]
    %v397 = vld [vmem:[#allocation2 + $0x10] sm:$0xf]
    %v398 = vld [vmem:[#allocation2 + $0x14] sm:$0xf]
    %v399 = vld [vmem:[#allocation2 + $0x18] sm:$0xf]
    %v400 = vld [vmem:[#allocation2 + $0x1c] sm:$0xf]
    %v401 = vld [vmem:[#allocation2 + $0x20] sm:$0xf]
    %v402 = vld [vmem:[#allocation2 + $0x24] sm:$0xf]
    %v403 = vld [vmem:[#allocation2 + $0x28] sm:$0xf]
    %v404 = vld [vmem:[#allocation2 + $0x2c] sm:$0xf]
    %v405 = vld [vmem:[#allocation2 + $0x30] sm:$0xf]
    %v406 = vld [vmem:[#allocation2 + $0x34] sm:$0xf]
    %v407 = vld [vmem:[#allocation2 + $0x38] sm:$0xf]
    %v408 = vld [vmem:[#allocation2 + $0x3c] sm:$0xf]
    %v409 = vld [vmem:[#allocation2 + $0x40] sm:$0xf]
    %v410 = vld [vmem:[#allocation2 + $0x44] sm:$0xf]
    %v411 = vld [vmem:[#allocation2 + $0x48] sm:$0xf]
    %v412 = vld [vmem:[#allocation2 + $0x4c] sm:$0xf]
    %v413 = vld [vmem:[#allocation2 + $0x50] sm:$0xf]
    %v414 = vld [vmem:[#allocation2 + $0x54] sm:$0xf]
    %v415 = vld [vmem:[#allocation2 + $0x58] sm:$0xf]
    %v416 = vld [vmem:[#allocation2 + $0x5c] sm:$0xf]
    %v417 = vld [vmem:[#allocation2 + $0x60] sm:$0xf]
    %v418 = vld [vmem:[#allocation2 + $0x64] sm:$0xf]
    %v419 = vld [vmem:[#allocation2 + $0x68] sm:$0xf]
    %v420 = vld [vmem:[#allocation2 + $0x6c] sm:$0xf]
    %v421 = vld [vmem:[#allocation2 + $0x70] sm:$0xf]
    %v422 = vld [vmem:[#allocation2 + $0x74] sm:$0xf]
    %v423 = vld [vmem:[#allocation2 + $0x78] sm:$0xf]
    %v424 = vld [vmem:[#allocation2 + $0x7c] sm:$0xf]
    %v425 = vld [vmem:[#allocation2 + $0x80] sm:$0xf]
    %v426 = vld [vmem:[#allocation2 + $0x84] sm:$0xf]
    %v427 = vld [vmem:[#allocation2 + $0x88] sm:$0xf]
    %v428 = vld [vmem:[#allocation2 + $0x8c] sm:$0xf]
    %v429 = vld [vmem:[#allocation2 + $0x90] sm:$0xf]
    %v430 = vld [vmem:[#allocation2 + $0x94] sm:$0xf]
    %v431 = vld [vmem:[#allocation2 + $0x98] sm:$0xf]
    %v432 = vld [vmem:[#allocation2 + $0x9c] sm:$0xf]
    %v433 = vld [vmem:[#allocation2 + $0xa0] sm:$0xf]
    %v434 = vld [vmem:[#allocation2 + $0xa4] sm:$0xf]
    %v435 = vld [vmem:[#allocation2 + $0xa8] sm:$0xf]
    %v436 = vld [vmem:[#allocation2 + $0xac] sm:$0xf]
    %v437 = vld [vmem:[#allocation2 + $0xb0] sm:$0xf]
    %v438 = vld [vmem:[#allocation2 + $0xb4] sm:$0xf]
    %v439 = vld [vmem:[#allocation2 + $0xb8] sm:$0xf]
    %v440 = vld [vmem:[#allocation2 + $0xbc] sm:$0xf]
    %v441 = vld [vmem:[#allocation2 + $0xc0] sm:$0xf]
    %v442 = vld [vmem:[#allocation2 + $0xc4] sm:$0xf]
    %v443 = vld [vmem:[#allocation2 + $0xc8] sm:$0xf]
    %v444 = vld [vmem:[#allocation2 + $0xcc] sm:$0xf]
    %v445 = vld [vmem:[#allocation2 + $0xd0] sm:$0xf]
    %v446 = vld [vmem:[#allocation2 + $0xd4] sm:$0xf]
    %v447 = vld [vmem:[#allocation2 + $0xd8] sm:$0xf]
    %v448 = vld [vmem:[#allocation2 + $0xdc] sm:$0xf]
    %v449 = vld [vmem:[#allocation2 + $0xe0] sm:$0xf]
    %v450 = vld [vmem:[#allocation2 + $0xe4] sm:$0xf]
    %v451 = vld [vmem:[#allocation2 + $0xe8] sm:$0xf]
    %v452 = vld [vmem:[#allocation2 + $0xec] sm:$0xf]
    %v453 = vld [vmem:[#allocation2 + $0xf0] sm:$0xf]
    %v454 = vld [vmem:[#allocation2 + $0xf4] sm:$0xf]
    %v455 = vld [vmem:[#allocation2 + $0xf8] sm:$0xf]
    %v456 = vld [vmem:[#allocation2 + $0xfc] sm:$0xf]
    %v457 = vld [vmem:[%s4] sm:$0x1]
    %v459 = vlaneseq
    %v460 = vshrl.u32 %v459, 7
    %v461 = vsub.s32 0, %v460
    %v462 = vrot.slane %v457, %v461
    %v528 = vunpack.c.l.b16 %v393
    %v529 = vunpack.c.l.b16 %v394
    %v530 = vunpack.c.l.b16 %v395
    %v531 = vunpack.c.l.b16 %v396
    %v532 = vunpack.c.l.b16 %v397
    %v533 = vunpack.c.l.b16 %v398
    %v534 = vunpack.c.l.b16 %v399
    %v535 = vunpack.c.l.b16 %v400
    %v536 = vunpack.c.l.b16 %v401
    %v537 = vunpack.c.l.b16 %v402
    %v538 = vunpack.c.l.b16 %v403
    %v539 = vunpack.c.l.b16 %v404
    %v540 = vunpack.c.l.b16 %v405
    %v541 = vunpack.c.l.b16 %v406
    %v542 = vunpack.c.l.b16 %v407
    %v543 = vunpack.c.l.b16 %v408
    %v544 = vunpack.c.l.b16 %v409
    %v545 = vunpack.c.l.b16 %v410
    %v546 = vunpack.c.l.b16 %v411
    %v547 = vunpack.c.l.b16 %v412
    %v548 = vunpack.c.l.b16 %v413
    %v549 = vunpack.c.l.b16 %v414
    %v550 = vunpack.c.l.b16 %v415
    %v551 = vunpack.c.l.b16 %v416
    %v552 = vunpack.c.l.b16 %v417
    %v553 = vunpack.c.l.b16 %v418
    %v554 = vunpack.c.l.b16 %v419
    %v555 = vunpack.c.l.b16 %v420
    %v556 = vunpack.c.l.b16 %v421
    %v557 = vunpack.c.l.b16 %v422
    %v558 = vunpack.c.l.b16 %v423
    %v559 = vunpack.c.l.b16 %v424
    %v560 = vunpack.c.l.b16 %v425
    %v561 = vunpack.c.l.b16 %v426
    %v562 = vunpack.c.l.b16 %v427
    %v563 = vunpack.c.l.b16 %v428
    %v564 = vunpack.c.l.b16 %v429
    %v565 = vunpack.c.l.b16 %v430
    %v566 = vunpack.c.l.b16 %v431
    %v567 = vunpack.c.l.b16 %v432
    %v568 = vunpack.c.l.b16 %v433
    %v569 = vunpack.c.l.b16 %v434
    %v570 = vunpack.c.l.b16 %v435
    %v571 = vunpack.c.l.b16 %v436
    %v572 = vunpack.c.l.b16 %v437
    %v573 = vunpack.c.l.b16 %v438
    %v574 = vunpack.c.l.b16 %v439
    %v575 = vunpack.c.l.b16 %v440
    %v576 = vunpack.c.l.b16 %v441
    %v577 = vunpack.c.l.b16 %v442
    %v578 = vunpack.c.l.b16 %v443
    %v579 = vunpack.c.l.b16 %v444
    %v580 = vunpack.c.l.b16 %v445
    %v581 = vunpack.c.l.b16 %v446
    %v582 = vunpack.c.l.b16 %v447
    %v583 = vunpack.c.l.b16 %v448
    %v584 = vunpack.c.l.b16 %v449
    %v585 = vunpack.c.l.b16 %v450
    %v586 = vunpack.c.l.b16 %v451
    %v587 = vunpack.c.l.b16 %v452
    %v588 = vunpack.c.l.b16 %v453
    %v589 = vunpack.c.l.b16 %v454
    %v590 = vunpack.c.l.b16 %v455
    %v591 = vunpack.c.l.b16 %v456
    %v592 = vpack.c.b16 %v529, %v528
    %v593 = vpack.c.b16 %v531, %v530
    %v594 = vpack.c.b16 %v533, %v532
    %v595 = vpack.c.b16 %v535, %v534
    %v596 = vpack.c.b16 %v537, %v536
    %v597 = vpack.c.b16 %v539, %v538
    %v598 = vpack.c.b16 %v541, %v540
    %v599 = vpack.c.b16 %v543, %v542
    %v600 = vpack.c.b16 %v545, %v544
    %v601 = vpack.c.b16 %v547, %v546
    %v602 = vpack.c.b16 %v549, %v548
    %v603 = vpack.c.b16 %v551, %v550
    %v604 = vpack.c.b16 %v553, %v552
    %v605 = vpack.c.b16 %v555, %v554
    %v606 = vpack.c.b16 %v557, %v556
    %v607 = vpack.c.b16 %v559, %v558
    %v608 = vpack.c.b16 %v561, %v560
    %v609 = vpack.c.b16 %v563, %v562
    %v610 = vpack.c.b16 %v565, %v564
    %v611 = vpack.c.b16 %v567, %v566
    %v612 = vpack.c.b16 %v569, %v568
    %v613 = vpack.c.b16 %v571, %v570
    %v614 = vpack.c.b16 %v573, %v572
    %v615 = vpack.c.b16 %v575, %v574
    %v616 = vpack.c.b16 %v577, %v576
    %v617 = vpack.c.b16 %v579, %v578
    %v618 = vpack.c.b16 %v581, %v580
    %v619 = vpack.c.b16 %v583, %v582
    %v620 = vpack.c.b16 %v585, %v584
    %v621 = vpack.c.b16 %v587, %v586
    %v622 = vpack.c.b16 %v589, %v588
    %v623 = vpack.c.b16 %v591, %v590
    %656 = vmatprep.subr.bf16.mxu0 0
    %657 = vmatpush1.bf16.msra.mxu0 %v592
    %658 = vmatprep.subr.bf16.mxu0 0
    %659 = vmatpush1.bf16.msra.mxu0 %v593
    %660 = vmatprep.subr.bf16.mxu0 0
    %661 = vmatpush1.bf16.msra.mxu0 %v594
    %662 = vmatprep.subr.bf16.mxu0 0
    %663 = vmatpush1.bf16.msra.mxu0 %v595
    %664 = vmatprep.subr.bf16.mxu0 0
    %665 = vmatpush1.bf16.msra.mxu0 %v596
    %666 = vmatprep.subr.bf16.mxu0 0
    %667 = vmatpush1.bf16.msra.mxu0 %v597
    %668 = vmatprep.subr.bf16.mxu0 0
    %669 = vmatpush1.bf16.msra.mxu0 %v598
    %670 = vmatprep.subr.bf16.mxu0 0
    %671 = vmatpush1.bf16.msra.mxu0 %v599
    %672 = vmatprep.subr.bf16.mxu0 0
    %673 = vmatpush1.bf16.msra.mxu0 %v600
    %674 = vmatprep.subr.bf16.mxu0 0
    %675 = vmatpush1.bf16.msra.mxu0 %v601
    %676 = vmatprep.subr.bf16.mxu0 0
    %677 = vmatpush1.bf16.msra.mxu0 %v602
    %678 = vmatprep.subr.bf16.mxu0 0
    %679 = vmatpush1.bf16.msra.mxu0 %v603
    %680 = vmatprep.subr.bf16.mxu0 0
    %681 = vmatpush1.bf16.msra.mxu0 %v604
    %682 = vmatprep.subr.bf16.mxu0 0
    %683 = vmatpush1.bf16.msra.mxu0 %v605
    %684 = vmatprep.subr.bf16.mxu0 0
    %685 = vmatpush1.bf16.msra.mxu0 %v606
    %686 = vmatprep.subr.bf16.mxu0 0
    %687 = vmatpush1.bf16.msra.mxu0 %v607
    %688 = vmatprep.mubr.bf16.mxu0 %v390
    %689 = vmatmul.mubr.bf16.gmra.mrb[0].mxu0 %v389
    %v690 = vpop.f32.mrb[0].mxu0
    %v691 = vadd.f32 %v462, %v690
    %v692 = vpop.f32.mrb[0].mxu0
    %v693 = vpop.f32.mrb[0].mxu0
    %v694 = vadd.f32 %v462, %v693
    %v695 = vpop.f32.mrb[0].mxu0
    %696 = vdwg.mxu0
    %697 = vmatprep.subr.bf16.mxu0 0
    %698 = vmatpush1.bf16.msra.mxu0 %v608
    %699 = vmatprep.subr.bf16.mxu0 0
    %700 = vmatpush1.bf16.msra.mxu0 %v609
    %701 = vmatprep.subr.bf16.mxu0 0
    %702 = vmatpush1.bf16.msra.mxu0 %v610
    %703 = vmatprep.subr.bf16.mxu0 0
    %704 = vmatpush1.bf16.msra.mxu0 %v611
    %705 = vmatprep.subr.bf16.mxu0 0
    %706 = vmatpush1.bf16.msra.mxu0 %v612
    %707 = vmatprep.subr.bf16.mxu0 0
    %708 = vmatpush1.bf16.msra.mxu0 %v613
    %709 = vmatprep.subr.bf16.mxu0 0
    %710 = vmatpush1.bf16.msra.mxu0 %v614
    %711 = vmatprep.subr.bf16.mxu0 0
    %712 = vmatpush1.bf16.msra.mxu0 %v615
    %713 = vmatprep.subr.bf16.mxu0 0
    %714 = vmatpush1.bf16.msra.mxu0 %v616
    %715 = vmatprep.subr.bf16.mxu0 0
    %716 = vmatpush1.bf16.msra.mxu0 %v617
    %717 = vmatprep.subr.bf16.mxu0 0
    %718 = vmatpush1.bf16.msra.mxu0 %v618
    %719 = vmatprep.subr.bf16.mxu0 0
    %720 = vmatpush1.bf16.msra.mxu0 %v619
    %721 = vmatprep.subr.bf16.mxu0 0
    %722 = vmatpush1.bf16.msra.mxu0 %v620
    %723 = vmatprep.subr.bf16.mxu0 0
    %724 = vmatpush1.bf16.msra.mxu0 %v621
    %725 = vmatprep.subr.bf16.mxu0 0
    %726 = vmatpush1.bf16.msra.mxu0 %v622
    %727 = vmatprep.subr.bf16.mxu0 0
    %728 = vmatpush1.bf16.msra.mxu0 %v623
    %729 = vmatprep.mubr.bf16.mxu0 %v392
    %730 = vmatmul.mubr.bf16.gmra.mrb[0].mxu0 %v391
    %v731 = vpop.f32.mrb[0].mxu0
    %v732 = vadd.f32 %v691, %v731
    %v733 = vpop.f32.mrb[0].mxu0
    %v734 = vpop.f32.mrb[0].mxu0
    %v735 = vadd.f32 %v694, %v734
    %v736 = vpop.f32.mrb[0].mxu0
    %737 = vdwg.mxu0
    %v738 = vunpack.c.l.bf16 %v41
    %v739 = vunpack.c.l.bf16 %v42
    %v740 = vadd.f32 %v732, %v738
    %v741 = vadd.f32 %v735, %v739
    %742 = vadd.xlane.f32.xlu0 %v740
    %v743 = vpop.xlane.xlu0 %742
    %744 = vadd.xlane.f32.xlu0 %v741
    %v745 = vpop.xlane.xlu0 %744
    %v746 = vrcp.pop 128.0
    %v747 = vmul.f32 %v743, %v746
    %v748 = vmul.f32 %v745, %v746
    %v749 = vsub.f32 %v740, %v747
    %v750 = vsub.f32 %v741, %v748
    %v751 = vmul.f32 %v749, %v749
    %v752 = vmul.f32 %v750, %v750
    %753 = vadd.xlane.f32.xlu0 %v751
    %v754 = vpop.xlane.xlu0 %753
    %755 = vadd.xlane.f32.xlu0 %v752
    %v756 = vpop.xlane.xlu0 %755
    %v757 = vmul.f32 %v754, %v746
    %v758 = vmul.f32 %v756, %v746
    %v759 = vadd.f32 %v757, 1e-12
    %v760 = vadd.f32 %v758, 1e-12
    %v761 = vrsqrt.pop %v759
    %v762 = vrsqrt.pop %v760
    %v763 = vmul.f32 %v749, %v761
    %v764 = vmul.f32 %v750, %v762
    %v765 = vld [vmem:[%s5] sm:$0x1]
    %v767 = vlaneseq
    %v768 = vshrl.u32 %v767, 7
    %v769 = vsub.s32 0, %v768
    %v770 = vrot.slane %v765, %v769
    %v772 = vmul.f32 %v763, %v770
    %v773 = vmul.f32 %v764, %v770
    %v774 = vld [vmem:[%s6] sm:$0x1]
    %v776 = vlaneseq
    %v777 = vshrl.u32 %v776, 7
    %v778 = vsub.s32 0, %v777
    %v779 = vrot.slane %v774, %v778
    %v781 = vadd.f32 %v772, %v779
    %v782 = vadd.f32 %v773, %v779
    %v783 = vpack.c.bf16 %v782, %v781
    %v785 = vunpack.c.l.b16 %v783
    %v786 = vunpack.c.h.b16 %v783
    %v787 = vpack.c.b16 %v785, %v785
    %v788 = vpack.c.b16 %v786, %v786
    %791 = vst [vmem:[%s7] sm:$0xf] %v787
    %792 = vst [vmem:[%s7 + $0x4] sm:$0xf] %v788
    // Predicated region
    $region34: #{bert_mlm_forward.15} parent=1 // pred_check
      _
    $region35: #{bert_mlm_forward.15} parent=1 // pred_check_branch
      %794 = sbr.rel (0) target = $region37
    $region36: #{bert_mlm_forward.15} parent=1 // pred_region
      _
    $region37: #{bert_mlm_forward.15} parent=1 // pred_fallthru
      _
    // Predicated region
    $region38: #{bert_mlm_forward.15} parent=1 // pred_check
      _
    $region39: #{bert_mlm_forward.15} parent=1 // pred_check_branch
      %796 = sbr.rel (0) target = $region41
    $region40: #{bert_mlm_forward.15} parent=1 // pred_region
      _
    $region41: #{bert_mlm_forward.15} parent=1 // pred_fallthru
      _
    %797 = vsyncpa [#allocation3], 1

// kernel: bert_mlm_forward.21
$region0: #{bert_mlm_forward.21}
  #allocation0 [shape = 'u32[]', space=smem, size = 0x4, offset = 0x4, fixed_abs, tag = 'smem constant byte address 0x4 - core index']
  #allocation1 [shape = 'u32[144,128]{1,0:T(1,128)}', space=vmem, size = 0x12000, scoped, tag = 'internal scratch']
  #allocation2 [shape = 'f32[16,512]{1,0:T(8,128)}', space=vmem, size = 0x8000, scoped, tag = 'scratch operand']
  %s0 = inlined_call_operand.vmem [shape: bf16[16,128], index: 0, kind: input, shape index: {}]
  %s1 = inlined_call_operand.vmem [shape: bf16[128,512], index: 1, kind: input, shape index: {}]
  %s2 = inlined_call_operand.vmem [shape: f32[1,512], index: 2, kind: input, shape index: {}]
  %s3 = inlined_call_operand.hbm [shape: f32[16,512], index: 3, kind: output, shape index: {}]
  %s4 = sld [smem:[#allocation0]]
  $region30: #{bert_mlm_forward.21} parent=0
    _
  %s6 = ssub.s32 1, %s4
  %s7 = scalar_select 0, %s6, %s4
  $region1: #{bert_mlm_forward.21} parent=0
    #allocation3 [shape = 'u8[32768]{0}', space=vmem, size = 0x8000, scoped, tag = 'output window, operand 0, single buffered']
    #allocation4 [shape = 's32[1]{0}', space=sflag, size = 0x4, scoped, tag = 'scoped memory for bert_mlm_forward.21']
    %8 = vsyncpa [#allocation4], 0
    // Predicated region
    $region2: #{bert_mlm_forward.21} parent=1 // pred_check
      _
    $region3: #{bert_mlm_forward.21} parent=1 // pred_check_branch
      %10 = sbr.rel (0) target = $region5
    $region4: #{bert_mlm_forward.21} parent=1 // pred_region
      _
    $region5: #{bert_mlm_forward.21} parent=1 // pred_fallthru
      _
    // Predicated region
    $region6: #{bert_mlm_forward.21} parent=1 // pred_check
      _
    $region7: #{bert_mlm_forward.21} parent=1 // pred_check_branch
      %12 = sbr.rel (0) target = $region9
    $region8: #{bert_mlm_forward.21} parent=1 // pred_region
      _
    $region9: #{bert_mlm_forward.21} parent=1 // pred_fallthru
      _
    // Predicated region
    $region10: #{bert_mlm_forward.21} parent=1 // pred_check
      _
    $region11: #{bert_mlm_forward.21} parent=1 // pred_check_branch
      %14 = sbr.rel (0) target = $region13
    $region12: #{bert_mlm_forward.21} parent=1 // pred_region
      _
    $region13: #{bert_mlm_forward.21} parent=1 // pred_fallthru
      _
    %p16 = scmp.eq.s32.totalorder 0, 0
    // Predicated region
    $region14: #{bert_mlm_forward.21} parent=1 // pred_check
      %p17 = pneg %p16
    $region15: #{bert_mlm_forward.21} parent=1 // pred_check_branch
      %19 = sbr.rel (%p17) target = $region17
    $region16: #{bert_mlm_forward.21} parent=1 // pred_region
      %20 = vst [vmem:[#allocation2] sm:$0xff] 0.0
      %21 = vst [vmem:[#allocation2 + $0x8] sm:$0xff] 0.0
      %22 = vst [vmem:[#allocation2 + $0x10] sm:$0xff] 0.0
      %23 = vst [vmem:[#allocation2 + $0x18] sm:$0xff] 0.0
      %24 = vst [vmem:[#allocation2 + $0x20] sm:$0xff] 0.0
      %25 = vst [vmem:[#allocation2 + $0x28] sm:$0xff] 0.0
      %26 = vst [vmem:[#allocation2 + $0x30] sm:$0xff] 0.0
      %27 = vst [vmem:[#allocation2 + $0x38] sm:$0xff] 0.0
    $region17: #{bert_mlm_forward.21} parent=1 // pred_fallthru
      _
    %v28 = vld [vmem:[#allocation2] sm:$0xff]
    %v29 = vld [vmem:[#allocation2 + $0x8] sm:$0xff]
    %v30 = vld [vmem:[#allocation2 + $0x10] sm:$0xff]
    %v31 = vld [vmem:[#allocation2 + $0x18] sm:$0xff]
    %v32 = vld [vmem:[#allocation2 + $0x20] sm:$0xff]
    %v33 = vld [vmem:[#allocation2 + $0x28] sm:$0xff]
    %v34 = vld [vmem:[#allocation2 + $0x30] sm:$0xff]
    %v35 = vld [vmem:[#allocation2 + $0x38] sm:$0xff]
    %v36 = vld [vmem:[%s0] sm:$0xf]
    %v37 = vld [vmem:[%s0 + $0x4] sm:$0xf]
    %v38 = vld [vmem:[%s1] sm:$0xff]
    %v39 = vld [vmem:[%s1 + $0x8] sm:$0xff]
    %v40 = vld [vmem:[%s1 + $0x10] sm:$0xff]
    %v41 = vld [vmem:[%s1 + $0x18] sm:$0xff]
    %v42 = vld [vmem:[%s1 + $0x20] sm:$0xff]
    %v43 = vld [vmem:[%s1 + $0x28] sm:$0xff]
    %v44 = vld [vmem:[%s1 + $0x30] sm:$0xff]
    %v45 = vld [vmem:[%s1 + $0x38] sm:$0xff]
    %v46 = vld [vmem:[%s1 + $0x40] sm:$0xff]
    %v47 = vld [vmem:[%s1 + $0x48] sm:$0xff]
    %v48 = vld [vmem:[%s1 + $0x50] sm:$0xff]
    %v49 = vld [vmem:[%s1 + $0x58] sm:$0xff]
    %v50 = vld [vmem:[%s1 + $0x60] sm:$0xff]
    %v51 = vld [vmem:[%s1 + $0x68] sm:$0xff]
    %v52 = vld [vmem:[%s1 + $0x70] sm:$0xff]
    %v53 = vld [vmem:[%s1 + $0x78] sm:$0xff]
    %v54 = vld [vmem:[%s1 + $0x80] sm:$0xff]
    %v55 = vld [vmem:[%s1 + $0x88] sm:$0xff]
    %v56 = vld [vmem:[%s1 + $0x90] sm:$0xff]
    %v57 = vld [vmem:[%s1 + $0x98] sm:$0xff]
    %v58 = vld [vmem:[%s1 + $0xa0] sm:$0xff]
    %v59 = vld [vmem:[%s1 + $0xa8] sm:$0xff]
    %v60 = vld [vmem:[%s1 + $0xb0] sm:$0xff]
    %v61 = vld [vmem:[%s1 + $0xb8] sm:$0xff]
    %v62 = vld [vmem:[%s1 + $0xc0] sm:$0xff]
    %v63 = vld [vmem:[%s1 + $0xc8] sm:$0xff]
    %v64 = vld [vmem:[%s1 + $0xd0] sm:$0xff]
    %v65 = vld [vmem:[%s1 + $0xd8] sm:$0xff]
    %v66 = vld [vmem:[%s1 + $0xe0] sm:$0xff]
    %v67 = vld [vmem:[%s1 + $0xe8] sm:$0xff]
    %v68 = vld [vmem:[%s1 + $0xf0] sm:$0xff]
    %v69 = vld [vmem:[%s1 + $0xf8] sm:$0xff]
    %v72 = vunpack.c.l.b16 %v36
    %v73 = vunpack.c.l.b16 %v37
    %v74 = vpack.c.b16 %v73, %v72
    %v108 = vunpack.c.l.b16 %v38
    %v109 = vunpack.c.h.b16 %v38
    %v110 = vunpack.c.l.b16 %v39
    %v111 = vunpack.c.h.b16 %v39
    %v112 = vunpack.c.l.b16 %v40
    %v113 = vunpack.c.h.b16 %v40
    %v114 = vunpack.c.l.b16 %v41
    %v115 = vunpack.c.h.b16 %v41
    %v116 = vunpack.c.l.b16 %v42
    %v117 = vunpack.c.h.b16 %v42
    %v118 = vunpack.c.l.b16 %v43
    %v119 = vunpack.c.h.b16 %v43
    %v120 = vunpack.c.l.b16 %v44
    %v121 = vunpack.c.h.b16 %v44
    %v122 = vunpack.c.l.b16 %v45
    %v123 = vunpack.c.h.b16 %v45
    %v124 = vunpack.c.l.b16 %v46
    %v125 = vunpack.c.h.b16 %v46
    %v126 = vunpack.c.l.b16 %v47
    %v127 = vunpack.c.h.b16 %v47
    %v128 = vunpack.c.l.b16 %v48
    %v129 = vunpack.c.h.b16 %v48
    %v130 = vunpack.c.l.b16 %v49
    %v131 = vunpack.c.h.b16 %v49
    %v132 = vunpack.c.l.b16 %v50
    %v133 = vunpack.c.h.b16 %v50
    %v134 = vunpack.c.l.b16 %v51
    %v135 = vunpack.c.h.b16 %v51
    %v136 = vunpack.c.l.b16 %v52
    %v137 = vunpack.c.h.b16 %v52
    %v138 = vunpack.c.l.b16 %v53
    %v139 = vunpack.c.h.b16 %v53
    %v140 = vunpack.c.l.b16 %v54
    %v141 = vunpack.c.h.b16 %v54
    %v142 = vunpack.c.l.b16 %v55
    %v143 = vunpack.c.h.b16 %v55
    %v144 = vunpack.c.l.b16 %v56
    %v145 = vunpack.c.h.b16 %v56
    %v146 = vunpack.c.l.b16 %v57
    %v147 = vunpack.c.h.b16 %v57
    %v148 = vunpack.c.l.b16 %v58
    %v149 = vunpack.c.h.b16 %v58
    %v150 = vunpack.c.l.b16 %v59
    %v151 = vunpack.c.h.b16 %v59
    %v152 = vunpack.c.l.b16 %v60
    %v153 = vunpack.c.h.b16 %v60
    %v154 = vunpack.c.l.b16 %v61
    %v155 = vunpack.c.h.b16 %v61
    %v156 = vunpack.c.l.b16 %v62
    %v157 = vunpack.c.h.b16 %v62
    %v158 = vunpack.c.l.b16 %v63
    %v159 = vunpack.c.h.b16 %v63
    %v160 = vunpack.c.l.b16 %v64
    %v161 = vunpack.c.h.b16 %v64
    %v162 = vunpack.c.l.b16 %v65
    %v163 = vunpack.c.h.b16 %v65
    %v164 = vunpack.c.l.b16 %v66
    %v165 = vunpack.c.h.b16 %v66
    %v166 = vunpack.c.l.b16 %v67
    %v167 = vunpack.c.h.b16 %v67
    %v168 = vunpack.c.l.b16 %v68
    %v169 = vunpack.c.h.b16 %v68
    %v170 = vunpack.c.l.b16 %v69
    %v171 = vunpack.c.h.b16 %v69
    %v172 = vpack.c.b16 %v112, %v108
    %v173 = vpack.c.b16 %v113, %v109
    %v174 = vpack.c.b16 %v114, %v110
    %v175 = vpack.c.b16 %v115, %v111
    %v176 = vpack.c.b16 %v120, %v116
    %v177 = vpack.c.b16 %v121, %v117
    %v178 = vpack.c.b16 %v122, %v118
    %v179 = vpack.c.b16 %v123, %v119
    %v180 = vpack.c.b16 %v128, %v124
    %v181 = vpack.c.b16 %v129, %v125
    %v182 = vpack.c.b16 %v130, %v126
    %v183 = vpack.c.b16 %v131, %v127
    %v184 = vpack.c.b16 %v136, %v132
    %v185 = vpack.c.b16 %v137, %v133
    %v186 = vpack.c.b16 %v138, %v134
    %v187 = vpack.c.b16 %v139, %v135
    %v188 = vpack.c.b16 %v144, %v140
    %v189 = vpack.c.b16 %v145, %v141
    %v190 = vpack.c.b16 %v146, %v142
    %v191 = vpack.c.b16 %v147, %v143
    %v192 = vpack.c.b16 %v152, %v148
    %v193 = vpack.c.b16 %v153, %v149
    %v194 = vpack.c.b16 %v154, %v150
    %v195 = vpack.c.b16 %v155, %v151
    %v196 = vpack.c.b16 %v160, %v156
    %v197 = vpack.c.b16 %v161, %v157
    %v198 = vpack.c.b16 %v162, %v158
    %v199 = vpack.c.b16 %v163, %v159
    %v200 = vpack.c.b16 %v168, %v164
    %v201 = vpack.c.b16 %v169, %v165
    %v202 = vpack.c.b16 %v170, %v166
    %v203 = vpack.c.b16 %v171, %v167
    %236 = vmatprep.subr.bf16.mxu0 %v173
    %237 = vmatpush1.bf16.msra.mxu0 %v172
    %238 = vmatprep.subr.bf16.mxu0 %v177
    %239 = vmatpush1.bf16.msra.mxu0 %v176
    %240 = vmatprep.subr.bf16.mxu0 %v181
    %241 = vmatpush1.bf16.msra.mxu0 %v180
    %242 = vmatprep.subr.bf16.mxu0 %v185
    %243 = vmatpush1.bf16.msra.mxu0 %v184
    %244 = vmatprep.subr.bf16.mxu0 %v189
    %245 = vmatpush1.bf16.msra.mxu0 %v188
    %246 = vmatprep.subr.bf16.mxu0 %v193
    %247 = vmatpush1.bf16.msra.mxu0 %v192
    %248 = vmatprep.subr.bf16.mxu0 %v197
    %249 = vmatpush1.bf16.msra.mxu0 %v196
    %250 = vmatprep.subr.bf16.mxu0 %v201
    %251 = vmatpush1.bf16.msra.mxu0 %v200
    %252 = vmatprep.subr.bf16.mxu0 0
    %253 = vmatpush1.bf16.msra.mxu0 0
    %254 = vmatprep.subr.bf16.mxu0 0
    %255 = vmatpush1.bf16.msra.mxu0 0
    %256 = vmatprep.subr.bf16.mxu0 0
    %257 = vmatpush1.bf16.msra.mxu0 0
    %258 = vmatprep.subr.bf16.mxu0 0
    %259 = vmatpush1.bf16.msra.mxu0 0
    %260 = vmatprep.subr.bf16.mxu0 0
    %261 = vmatpush1.bf16.msra.mxu0 0
    %262 = vmatprep.subr.bf16.mxu0 0
    %263 = vmatpush1.bf16.msra.mxu0 0
    %264 = vmatprep.subr.bf16.mxu0 0
    %265 = vmatpush1.bf16.msra.mxu0 0
    %266 = vmatprep.subr.bf16.mxu0 0
    %267 = vmatpush1.bf16.msra.mxu0 0
    %268 = vmatprep.mubr.bf16.mxu0 0
    %269 = vmatmul.mubr.bf16.gmra.mrb[0].mxu0 %v74
    %v270 = vpop.f32.mrb[0].mxu0
    %v271 = vadd.f32 0.0, %v270
    %v272 = vpop.f32.mrb[0].mxu0
    %v273 = vadd.f32 0.0, %v272
    %v274 = vpop.f32.mrb[0].mxu0
    %v275 = vadd.f32 0.0, %v274
    %v276 = vpop.f32.mrb[0].mxu0
    %v277 = vadd.f32 0.0, %v276
    %278 = vdwg.mxu0
    %279 = vmatprep.subr.bf16.mxu0 %v175
    %280 = vmatpush1.bf16.msra.mxu0 %v174
    %281 = vmatprep.subr.bf16.mxu0 %v179
    %282 = vmatpush1.bf16.msra.mxu0 %v178
    %283 = vmatprep.subr.bf16.mxu0 %v183
    %284 = vmatpush1.bf16.msra.mxu0 %v182
    %285 = vmatprep.subr.bf16.mxu0 %v187
    %286 = vmatpush1.bf16.msra.mxu0 %v186
    %287 = vmatprep.subr.bf16.mxu0 %v191
    %288 = vmatpush1.bf16.msra.mxu0 %v190
    %289 = vmatprep.subr.bf16.mxu0 %v195
    %290 = vmatpush1.bf16.msra.mxu0 %v194
    %291 = vmatprep.subr.bf16.mxu0 %v199
    %292 = vmatpush1.bf16.msra.mxu0 %v198
    %293 = vmatprep.subr.bf16.mxu0 %v203
    %294 = vmatpush1.bf16.msra.mxu0 %v202
    %295 = vmatprep.subr.bf16.mxu0 0
    %296 = vmatpush1.bf16.msra.mxu0 0
    %297 = vmatprep.subr.bf16.mxu0 0
    %298 = vmatpush1.bf16.msra.mxu0 0
    %299 = vmatprep.subr.bf16.mxu0 0
    %300 = vmatpush1.bf16.msra.mxu0 0
    %301 = vmatprep.subr.bf16.mxu0 0
    %302 = vmatpush1.bf16.msra.mxu0 0
    %303 = vmatprep.subr.bf16.mxu0 0
    %304 = vmatpush1.bf16.msra.mxu0 0
    %305 = vmatprep.subr.bf16.mxu0 0
    %306 = vmatpush1.bf16.msra.mxu0 0
    %307 = vmatprep.subr.bf16.mxu0 0
    %308 = vmatpush1.bf16.msra.mxu0 0
    %309 = vmatprep.subr.bf16.mxu0 0
    %310 = vmatpush1.bf16.msra.mxu0 0
    %311 = vmatprep.mubr.bf16.mxu0 0
    %312 = vmatmul.mubr.bf16.gmra.mrb[0].mxu0 %v74
    %v313 = vpop.f32.mrb[0].mxu0
    %v314 = vadd.f32 0.0, %v313
    %v315 = vpop.f32.mrb[0].mxu0
    %v316 = vadd.f32 0.0, %v315
    %v317 = vpop.f32.mrb[0].mxu0
    %v318 = vadd.f32 0.0, %v317
    %v319 = vpop.f32.mrb[0].mxu0
    %v320 = vadd.f32 0.0, %v319
    %321 = vdwg.mxu0
    %v322 = vadd.f32 %v28, %v271
    %v323 = vadd.f32 %v29, %v273
    %v324 = vadd.f32 %v30, %v314
    %v325 = vadd.f32 %v31, %v316
    %v326 = vadd.f32 %v32, %v275
    %v327 = vadd.f32 %v33, %v277
    %v328 = vadd.f32 %v34, %v318
    %v329 = vadd.f32 %v35, %v320
    %330 = vst [vmem:[#allocation2] sm:$0xff] %v322
    %331 = vst [vmem:[#allocation2 + $0x8] sm:$0xff] %v323
    %332 = vst [vmem:[#allocation2 + $0x10] sm:$0xff] %v324
    %333 = vst [vmem:[#allocation2 + $0x18] sm:$0xff] %v325
    %334 = vst [vmem:[#allocation2 + $0x20] sm:$0xff] %v326
    %335 = vst [vmem:[#allocation2 + $0x28] sm:$0xff] %v327
    %336 = vst [vmem:[#allocation2 + $0x30] sm:$0xff] %v328
    %337 = vst [vmem:[#allocation2 + $0x38] sm:$0xff] %v329
    // Predicated region
    $region18: #{bert_mlm_forward.21} parent=1 // pred_check
      %p338 = pneg %p16
    $region19: #{bert_mlm_forward.21} parent=1 // pred_check_branch
      %340 = sbr.rel (%p338) target = $region21
    $region20: #{bert_mlm_forward.21} parent=1 // pred_region
      %v341 = vld [vmem:[#allocation2] sm:$0xff]
      %v342 = vld [vmem:[#allocation2 + $0x8] sm:$0xff]
      %v343 = vld [vmem:[#allocation2 + $0x10] sm:$0xff]
      %v344 = vld [vmem:[#allocation2 + $0x18] sm:$0xff]
      %v345 = vld [vmem:[#allocation2 + $0x20] sm:$0xff]
      %v346 = vld [vmem:[#allocation2 + $0x28] sm:$0xff]
      %v347 = vld [vmem:[#allocation2 + $0x30] sm:$0xff]
      %v348 = vld [vmem:[#allocation2 + $0x38] sm:$0xff]
      %v349 = vld [vmem:[%s2] sm:$0xf]
      %v351 = vlaneseq
      %v352 = vshrl.u32 %v351, 7
      %v353 = vsub.s32 0, %v352
      %v354 = vrot.slane %v349, %v353
      %v355 = vlaneseq
      %v356 = vshrl.u32 %v355, 7
      %v357 = vsub.s32 1, %v356
      %v358 = vrot.slane %v349, %v357
      %v359 = vlaneseq
      %v360 = vshrl.u32 %v359, 7
      %v361 = vsub.s32 2, %v360
      %v362 = vrot.slane %v349, %v361
      %v363 = vlaneseq
      %v364 = vshrl.u32 %v363, 7
      %v365 = vsub.s32 3, %v364
      %v366 = vrot.slane %v349, %v365
      %v371 = vadd.f32 %v341, %v354
      %v372 = vadd.f32 %v342, %v358
      %v373 = vadd.f32 %v343, %v362
      %v374 = vadd.f32 %v344, %v366
      %v375 = vadd.f32 %v345, %v354
      %v376 = vadd.f32 %v346, %v358
      %v377 = vadd.f32 %v347, %v362
      %v378 = vadd.f32 %v348, %v366
      %379 = vst [vmem:[#allocation3] sm:$0xff] %v371
      %380 = vst [vmem:[#allocation3 + $0x8] sm:$0xff] %v372
      %381 = vst [vmem:[#allocation3 + $0x10] sm:$0xff] %v373
      %382 = vst [vmem:[#allocation3 + $0x18] sm:$0xff] %v374
      %383 = vst [vmem:[#allocation3 + $0x20] sm:$0xff] %v375
      %384 = vst [vmem:[#allocation3 + $0x28] sm:$0xff] %v376
      %385 = vst [vmem:[#allocation3 + $0x30] sm:$0xff] %v377
      %386 = vst [vmem:[#allocation3 + $0x38] sm:$0xff] %v378
    $region21: #{bert_mlm_forward.21} parent=1 // pred_fallthru
      _
    // Predicated region
    $region22: #{bert_mlm_forward.21} parent=1 // pred_check
      _
    $region23: #{bert_mlm_forward.21} parent=1 // pred_check_branch
      %388 = sbr.rel (0) target = $region25
    $region24: #{bert_mlm_forward.21} parent=1 // pred_region
      %s390 = ssub.s32 1024, 1024
      %391 = vsyncadd [#allocation4], %s390
      %s392 = sshll.u32 [#allocation3], 4
      %s393 = int_to_ptr.vmem [resolvable:$true] %s392
      %398 = dma.vmem_to_hbm [thread:$0]  %s393, 1024, %s3, [#allocation4], 512, 512, 32
    $region25: #{bert_mlm_forward.21} parent=1 // pred_fallthru
      _
    // Predicated region
    $region26: #{bert_mlm_forward.21} parent=1 // pred_check
      _
    $region27: #{bert_mlm_forward.21} parent=1 // pred_check_branch
      %400 = sbr.rel (0) target = $region29
    $region28: #{bert_mlm_forward.21} parent=1 // pred_region
      %401 = dma.done [#allocation4], 1024
    $region29: #{bert_mlm_forward.21} parent=1 // pred_fallthru
      _
    %402 = vsyncpa [#allocation4], 1

</llo_original>
